<compile_context>
chip_gen: v7x
topology: tpu7x:2x2x1
jax: 0.10.0
libtpu: 0.0.40
codegen_flags: <defaults>
</compile_context>

<pallas_src>
import functools
import math

import numpy as np
import jax
import jax.numpy as jnp
from jax.experimental import pallas as pl
from jax.experimental.pallas import tpu as pltpu


_NEG_BIG = float(np.finfo(np.float32).min)


# ----------------------------------------------------------------------------
# Static helpers (pure Python / numpy — they only produce static indices and
# small constant matrices that parameterize the kernels).
# ----------------------------------------------------------------------------
def _adaptive_bins(in_size: int, out_size: int):
    """PyTorch AdaptiveMaxPool2d / AdaptiveAvgPool2d bin boundaries."""
    bins = []
    for i in range(out_size):
        start = (i * in_size) // out_size                       # floor(i*in/out)
        end = ((i + 1) * in_size + out_size - 1) // out_size    # ceil((i+1)*in/out)
        bins.append((start, end))
    return tuple(bins)


def _interp_matrix(out_size: int, in_size: int) -> np.ndarray:
    """1-D bilinear resize weights, align_corners=False (current PyTorch default
    for F.upsample / F.interpolate, mode='bilinear')."""
    # TODO(synk): legacy PyTorch (<0.4) F.upsample behaved like align_corners=True;
    # flip here if matching an old checkpoint is required.
    a = np.zeros((out_size, in_size), dtype=np.float32)
    scale = in_size / out_size
    for o in range(out_size):
        src = (o + 0.5) * scale - 0.5
        src = max(src, 0.0)
        i0 = min(int(math.floor(src)), in_size - 1)
        i1 = min(i0 + 1, in_size - 1)
        l1 = src - i0
        a[o, i0] += 1.0 - l1
        a[o, i1] += l1
    return a


# ----------------------------------------------------------------------------
# Kernel 1: fused adaptive pooling (all branches) + folded-BN 1x1 conv + ReLU
#           + W-direction half of the bilinear upsample.
#
# Grid: (batch, row_tiles); row_tiles is a reduction ("arbitrary") axis.
#   x_ref      : (1, TH, W, C)        current input row tile (input dtype)
#   hp_ref     : (TH, sum(settings))  pooling h-bin masks (max) / weights (avg)
#   aw_ref     : (W, sum(settings))   bilinear W-direction weights
#   w_ref      : (C, K*Cout)          1x1 conv weights with BN folded in (f32)
#   b_ref      : (1, K*Cout)          folded bias (f32)
#   q_ref      : (1, sum(settings), W, Cout)  per-branch pooled->conv->ReLU rows,
#                                     already W-upsampled (written at last tile)
#   acc_refs[k]: VMEM (s_k*s_k, C) f32 accumulator, row index = h_bin*s + w_bin
# ----------------------------------------------------------------------------
def _pool_conv_kernel(x_ref, hp_ref, aw_ref, w_ref, b_ref, q_ref, *acc_refs,
                      settings, wbins_per, pooling_type, c_out):
    r = pl.program_id(1)
    last = pl.num_programs(1) - 1
    is_max = pooling_type == "max"

    @pl.when(r == 0)
    def _init():
        for acc in acc_refs:
            if is_max:
                acc[...] = jnp.full(acc.shape, _NEG_BIG, jnp.float32)
            else:
                acc[...] = jnp.zeros(acc.shape, jnp.float32)

    xt = x_ref[0]                     # (TH, W, C), stays in the input dtype
    hp = hp_ref[...]                  # (TH, S_total) f32
    off = 0
    for k, s in enumerate(settings):
        # --- W-direction reduction: one (TH, C) partial per w-bin (reused by
        #     every h-bin of this branch) -------------------------------------
        wparts = []
        for (x0, x1) in wbins_per[k]:
            region = xt[:, x0:x1, :]                         # (TH, dx, C)
            if is_max:
                wparts.append(jnp.max(region, axis=1).astype(jnp.float32))
            else:
                wparts.append(jnp.sum(region.astype(jnp.float32), axis=1)
                              * (1.0 / (x1 - x0)))
        # --- H-direction masked/weighted reduction of this row tile ----------
        pieces = []
        for i in range(s):
            m = hp[:, off + i:off + i + 1]                   # (TH, 1)
            for j in range(s):
                if is_max:
                    pieces.append(jnp.max(jnp.where(m > 0.0, wparts[j], _NEG_BIG),
                                          axis=0, keepdims=True))   # (1, C)
                else:
                    pieces.append(jnp.sum(m * wparts[j], axis=0, keepdims=True))
        contrib = jnp.concatenate(pieces, axis=0)            # (s*s, C)
        if is_max:
            acc_refs[k][...] = jnp.maximum(acc_refs[k][...], contrib)
        else:
            acc_refs[k][...] = acc_refs[k][...] + contrib
        off += s

    # --- finalize on the last row tile: conv (BN folded) + ReLU + W-upsample --
    @pl.when(r == last)
    def _finalize():
        wf = w_ref[...]               # (C, K*Cout) f32
        bf = b_ref[...]               # (1, K*Cout) f32
        awm = aw_ref[...]             # (W, S_total) f32
        off2 = 0
        for k, s in enumerate(settings):
            wk = wf[:, k * c_out:(k + 1) * c_out]            # (C, Cout)
            bk = bf[:, k * c_out:(k + 1) * c_out]            # (1, Cout)
            awk = awm[:, off2:off2 + s]                      # (W, s)
            for i in range(s):
                pi = acc_refs[k][i * s:(i + 1) * s, :]       # (s, C), pooled row i
                yi = jnp.dot(pi, wk, preferred_element_type=jnp.float32) + bk
                yi = jnp.maximum(yi, 0.0)                    # (s, Cout)
                # separable bilinear (W direction) as a VPU broadcast blend
                qi = awk[:, 0:1] * yi[0:1, :]                # (W, Cout)
                for j in range(1, s):
                    qi = qi + awk[:, j:j + 1] * yi[j:j + 1, :]
                q_ref[0, off2 + i] = qi.astype(q_ref.dtype)
            off2 += s


# ----------------------------------------------------------------------------
# Kernel 2: H-direction bilinear blend + channel concat (identity + branches),
#           written as one lane-dense NHWC output tile.
# Grid: (batch, row_tiles), both "parallel".
# ----------------------------------------------------------------------------
def _upsample_concat_kernel(x_ref, q_ref, ah_ref, o_ref, *, settings, c_in, c_out):
    xt = x_ref[0]                                            # (TH, W, C)
    o_ref[0, :, :, 0:c_in] = xt.astype(o_ref.dtype)          # identity branch

    ah = ah_ref[...]                                         # (TH, S_total) f32
    th = xt.shape[0]
    wdt = xt.shape[1]
    ones_c = jnp.ones((1, c_out), jnp.float32)               # hoisted broadcast helper

    coff = c_in
    soff = 0
    for s in settings:
        out_k = jnp.zeros((th, wdt, c_out), jnp.float32)
        for i in range(s):
            qi = q_ref[0, soff + i].astype(jnp.float32)          # (W, Cout)
            wgt = ah[:, soff + i:soff + i + 1] * ones_c          # (TH, Cout)
            out_k = out_k + wgt[:, None, :] * qi[None, :, :]     # (TH, W, Cout)
        o_ref[0, :, :, coff:coff + c_out] = out_k.astype(o_ref.dtype)
        soff += s
        coff += c_out


# ----------------------------------------------------------------------------
# Host-side wrappers
# ----------------------------------------------------------------------------
def _pick_tile_rows(h, row_bytes, vmem_budget=16 * 1024 * 1024):
    """Largest divisor of h that is a multiple of 8 (or h itself) whose
    double-buffered row-tile footprint stays under a conservative VMEM budget
    (keeps us inside the 32 MiB scoped default, safe for v7x's 64 MiB VMEM)."""
    max_rows = max(1, vmem_budget // (2 * max(row_bytes, 1)))
    legal = [d for d in range(1, h + 1) if h % d == 0 and (d % 8 == 0 or d == h)]
    fitting = [d for d in legal if d <= max_rows]
    return max(fitting) if fitting else min(legal)


def center_block_m2_forward_nhwc(x_nhwc, params, *, settings=(1, 2, 3, 6),
                                 pooling_type="max", eps=1e-5, tile_rows=None):
    """Fused PSP center block. NHWC in / NHWC out (preferred, transpose-free path)."""
    assert pooling_type in ("max", "avg"), pooling_type
    n, h, w, c = x_nhwc.shape
    c_out = params[0]["w"].shape[1]
    k_branches = len(settings)
    c_tot = c + k_branches * c_out
    s_total = int(sum(settings))

    # ---- fold conv bias + eval-mode BatchNorm into one (C, K*Cout) weight ----
    w_cols, b_cols = [], []
    for p in params:
        scale = p["gamma"] / jnp.sqrt(p["var"] + eps)            # (1, Cout)
        w_cols.append(p["w"].astype(jnp.float32) * scale)
        b_cols.append((p["b"] - p["mean"]) * scale + p["beta"])
    w_all = jnp.concatenate(w_cols, axis=1).astype(jnp.float32)  # (C, K*Cout)
    b_all = jnp.concatenate(b_cols, axis=1).astype(jnp.float32)  # (1, K*Cout)

    # ---- static 1-D pooling masks / bilinear weights --------------------------
    hpool_np = np.zeros((h, s_total), np.float32)
    aw_np = np.zeros((w, s_total), np.float32)
    ah_np = np.zeros((h, s_total), np.float32)
    wbins_per = []
    off = 0
    for s in settings:
        hb = _adaptive_bins(h, s)
        wbins_per.append(_adaptive_bins(w, s))
        for i, (y0, y1) in enumerate(hb):
            hpool_np[y0:y1, off + i] = 1.0 if pooling_type == "max" else 1.0 / (y1 - y0)
        aw_np[:, off:off + s] = _interp_matrix(w, s)
        ah_np[:, off:off + s] = _interp_matrix(h, s)
        off += s
    hpool = jnp.asarray(hpool_np)
    aw = jnp.asarray(aw_np)
    ah = jnp.asarray(ah_np)

    # ---- row tiling ------------------------------------------------------------
    itemsize = jnp.dtype(x_nhwc.dtype).itemsize
    row_bytes = w * (c + c_tot) * itemsize
    th = tile_rows if tile_rows is not None else _pick_tile_rows(h, row_bytes)
    assert h % th == 0 and (th % 8 == 0 or th == h), (h, th)
    n_row_tiles = h // th

    # ---- kernel 1: pooling + folded conv/BN + ReLU + W-upsample (all branches) -
    kern1 = functools.partial(
        _pool_conv_kernel, settings=tuple(settings),
        wbins_per=tuple(wbins_per), pooling_type=pooling_type, c_out=c_out)
    q_all = pl.pallas_call(
        kern1,
        out_shape=jax.ShapeDtypeStruct((n, s_total, w, c_out), jnp.float32),
        grid_spec=pltpu.PrefetchScalarGridSpec(
            num_scalar_prefetch=0,
            grid=(n, n_row_tiles),
            in_specs=[
                pl.BlockSpec((1, th, w, c), lambda nn, rr: (nn, rr, 0, 0)),
                pl.BlockSpec((th, s_total), lambda nn, rr: (rr, 0)),
                pl.BlockSpec((w, s_total), lambda nn, rr: (0, 0)),
                pl.BlockSpec((c, k_branches * c_out), lambda nn, rr: (0, 0)),
                pl.BlockSpec((1, k_branches * c_out), lambda nn, rr: (0, 0)),
            ],
            out_specs=pl.BlockSpec((1, s_total, w, c_out),
                                   lambda nn, rr: (nn, 0, 0, 0)),
            scratch_shapes=[pltpu.VMEM((s * s, c), jnp.float32) for s in settings],
        ),
        compiler_params=pltpu.CompilerParams(
            dimension_semantics=("parallel", "arbitrary")),
    )(x_nhwc, hpool, aw, w_all, b_all)

    # ---- kernel 2: H-upsample + lane-dense channel concat ----------------------
    kern2 = functools.partial(
        _upsample_concat_kernel, settings=tuple(settings), c_in=c, c_out=c_out)
    out_nhwc = pl.pallas_call(
        kern2,
        out_shape=jax.ShapeDtypeStruct((n, h, w, c_tot), x_nhwc.dtype),
        grid_spec=pltpu.PrefetchScalarGridSpec(
            num_scalar_prefetch=0,
            grid=(n, n_row_tiles),
            in_specs=[
                pl.BlockSpec((1, th, w, c), lambda nn, rr: (nn, rr, 0, 0)),
                pl.BlockSpec((1, s_total, w, c_out), lambda nn, rr: (nn, 0, 0, 0)),
                pl.BlockSpec((th, s_total), lambda nn, rr: (rr, 0)),
            ],
            out_specs=pl.BlockSpec((1, th, w, c_tot), lambda nn, rr: (nn, rr, 0, 0)),
        ),
        compiler_params=pltpu.CompilerParams(
            dimension_semantics=("parallel", "parallel")),
    )(x_nhwc, q_all, ah)
    return out_nhwc


def center_block_m2_forward(x_nchw, params, *, settings=(1, 2, 3, 6),
                            pooling_type="max", eps=1e-5, tile_rows=None):
    """PyTorch-layout wrapper (NCHW in / NCHW out).  Prefer the NHWC entry point
    end-to-end; the two transposes here are pure compatibility glue."""
    x_nhwc = jnp.transpose(x_nchw, (0, 2, 3, 1))
    out = center_block_m2_forward_nhwc(x_nhwc, params, settings=settings,
                                       pooling_type=pooling_type, eps=eps,
                                       tile_rows=tile_rows)
    return jnp.transpose(out, (0, 3, 1, 2))


# ----------------------------------------------------------------------------
# Pure-JAX reference (mirrors the PyTorch module, eval-mode BN) and params
# ----------------------------------------------------------------------------
def _reference_forward_nhwc(x, params, settings, pooling_type, eps):
    n, h, w, c = x.shape
    outs = [x]
    for s, p in zip(settings, params):
        hb, wb = _adaptive_bins(h, s), _adaptive_bins(w, s)
        rows = []
        for (y0, y1) in hb:
            cols = []
            for (x0, x1) in wb:
                reg = x[:, y0:y1, x0:x1, :].astype(jnp.float32)
                if pooling_type == "max":
                    cols.append(jnp.max(reg, axis=(1, 2)))
                else:
                    cols.append(jnp.mean(reg, axis=(1, 2)))
            rows.append(jnp.stack(cols, axis=1))              # (n, s, c)
        pooled = jnp.stack(rows, axis=1)                      # (n, s, s, c)
        y = jnp.einsum("nijc,cd->nijd", pooled, p["w"].astype(jnp.float32)) + p["b"][0]
        y = (y - p["mean"][0]) / jnp.sqrt(p["var"][0] + eps) * p["gamma"][0] + p["beta"][0]
        y = jnp.maximum(y, 0.0)
        ah = jnp.asarray(_interp_matrix(h, s))
        aw = jnp.asarray(_interp_matrix(w, s))
        up = jnp.einsum("hi,wj,nijd->nhwd", ah, aw, y)
        outs.append(up.astype(x.dtype))
    return jnp.concatenate(outs, axis=-1)


def init_params(key, in_channels, settings):
    """Deterministic synthetic parameters (shapes match the PyTorch module).
    PyTorch conv weight is (Cout, Cin, 1, 1); stored transposed as (Cin, Cout)."""
    out_channels = in_channels // len(settings)
    params = []
    for i, _ in enumerate(settings):
        k = jax.random.fold_in(key, i)
        kw, kb, kg, kbt, km, kv = jax.random.split(k, 6)
        params.append(dict(
            w=0.1 * jax.random.normal(kw, (in_channels, out_channels), jnp.float32),
            b=0.1 * jax.random.normal(kb, (1, out_channels), jnp.float32),
            gamma=1.0 + 0.1 * jax.random.normal(kg, (1, out_channels), jnp.float32),
            beta=0.1 * jax.random.normal(kbt, (1, out_channels), jnp.float32),
            mean=0.1 * jax.random.normal(km, (1, out_channels), jnp.float32),
            var=jax.random.uniform(kv, (1, out_channels), jnp.float32, 0.5, 1.5),
        ))
    return params


if __name__ == "__main__":
    key = jax.random.PRNGKey(0)
    kx, kp = jax.random.split(key)

    # Small shapes consistent with the module: in_channels divisible by 4 settings.
    N, C, H, W = 2, 8, 16, 16
    settings = (1, 2, 3, 6)

    x = jax.random.normal(kx, (N, C, H, W), jnp.float32)
    params = init_params(kp, C, settings)

    # tile_rows=8 -> 2 row tiles: exercises the cross-tile pooling accumulation.
    out = center_block_m2_forward(x, params, settings=settings,
                                  pooling_type="max", tile_rows=8)
    out = jax.block_until_ready(out)

    expected_channels = C + len(settings) * (C // len(settings))
    assert out.shape == (N, expected_channels, H, W), out.shape
    assert bool(jnp.all(jnp.isfinite(out)))

    # Numerics vs a pure-JAX reference of the PyTorch module (eval-mode BN).
    x_nhwc = jnp.transpose(x, (0, 2, 3, 1))
    ref = jnp.transpose(
        _reference_forward_nhwc(x_nhwc, params, settings, "max", 1e-5), (0, 3, 1, 2))
    assert jnp.allclose(out, ref, atol=1e-4, rtol=1e-4), \
        float(jnp.max(jnp.abs(out - ref)))

    # Also exercise the avg-pooling variant once.
    out_avg = jax.block_until_ready(
        center_block_m2_forward(x, params, settings=settings,
                                pooling_type="avg", tile_rows=8))
    ref_avg = jnp.transpose(
        _reference_forward_nhwc(x_nhwc, params, settings, "avg", 1e-5), (0, 3, 1, 2))
    assert jnp.allclose(out_avg, ref_avg, atol=1e-4, rtol=1e-4), \
        float(jnp.max(jnp.abs(out_avg - ref_avg)))

    print("KERNEL_OK")
</pallas_src>

<mosaic_0001>
module attributes {stable_mosaic.version = 11 : i64} {
  func.func @_pool_conv_kernel(%arg0: i32, %arg1: i32, %arg2: memref<1x8x16x8xf32, #tpu.memory_space<vmem>>, %arg3: memref<8x12xf32, #tpu.memory_space<vmem>>, %arg4: memref<16x12xf32, #tpu.memory_space<vmem>>, %arg5: memref<8x8xf32, #tpu.memory_space<vmem>>, %arg6: memref<1x8xf32, #tpu.memory_space<vmem>>, %arg7: memref<1x12x16x2xf32, #tpu.memory_space<vmem>>, %arg8: memref<1x8xf32, #tpu.memory_space<vmem>>, %arg9: memref<4x8xf32, #tpu.memory_space<vmem>>, %arg10: memref<9x8xf32, #tpu.memory_space<vmem>>, %arg11: memref<36x8xf32, #tpu.memory_space<vmem>>) attributes {dimension_semantics = [#tpu.dimension_semantics<parallel>, #tpu.dimension_semantics<arbitrary>], iteration_bounds = array<i64: 2, 2>, scalar_prefetch = 0 : i64, scratch_operands = 4 : i64, tpu.core_type = #tpu.core_type<tc>, window_params = [{transform_indices = @transform_0, window_bounds = array<i64: 1, 8, 16, 8>}, {transform_indices = @transform_1, window_bounds = array<i64: 8, 12>}, {pipeline_mode = #tpu.pipeline_mode<synchronous>, transform_indices = @transform_2, window_bounds = array<i64: 16, 12>}, {pipeline_mode = #tpu.pipeline_mode<synchronous>, transform_indices = @transform_3, window_bounds = array<i64: 8, 8>}, {pipeline_mode = #tpu.pipeline_mode<synchronous>, transform_indices = @transform_4, window_bounds = array<i64: 1, 8>}, {transform_indices = @transform_5, window_bounds = array<i64: 1, 12, 16, 2>}]} {
    %c0_i32 = arith.constant 0 : i32
    %0 = arith.cmpi eq, %arg1, %c0_i32 : i32
    %1 = arith.extui %0 : i1 to i32
    %c0_i32_0 = arith.constant 0 : i32
    %2 = arith.cmpi ne, %1, %c0_i32_0 : i32
    scf.if %2 {
      %cst_184 = arith.constant -3.40282347E+38 : f32
      %462 = vector.broadcast %cst_184 : f32 to vector<1x8xf32>
      %c0_185 = arith.constant 0 : index
      %c0_186 = arith.constant 0 : index
      %463 = vector.load %arg8[%c0_185, %c0_186] : memref<1x8xf32, #tpu.memory_space<vmem>>, vector<1x8xf32>
      tpu.vector_store %arg8[%c0_185, %c0_186], %462 {strides = array<i32>} : memref<1x8xf32, #tpu.memory_space<vmem>>, vector<1x8xf32>,
      %cst_187 = arith.constant -3.40282347E+38 : f32
      %464 = vector.broadcast %cst_187 : f32 to vector<4x8xf32>
      %c0_188 = arith.constant 0 : index
      %c0_189 = arith.constant 0 : index
      %465 = vector.load %arg9[%c0_188, %c0_189] : memref<4x8xf32, #tpu.memory_space<vmem>>, vector<4x8xf32>
      tpu.vector_store %arg9[%c0_188, %c0_189], %464 {strides = array<i32>} : memref<4x8xf32, #tpu.memory_space<vmem>>, vector<4x8xf32>,
      %cst_190 = arith.constant -3.40282347E+38 : f32
      %466 = vector.broadcast %cst_190 : f32 to vector<9x8xf32>
      %c0_191 = arith.constant 0 : index
      %c0_192 = arith.constant 0 : index
      %467 = vector.load %arg10[%c0_191, %c0_192] : memref<9x8xf32, #tpu.memory_space<vmem>>, vector<9x8xf32>
      tpu.vector_store %arg10[%c0_191, %c0_192], %466 {strides = array<i32>} : memref<9x8xf32, #tpu.memory_space<vmem>>, vector<9x8xf32>,
      %cst_193 = arith.constant -3.40282347E+38 : f32
      %468 = vector.broadcast %cst_193 : f32 to vector<36x8xf32>
      %c0_194 = arith.constant 0 : index
      %c0_195 = arith.constant 0 : index
      %469 = vector.load %arg11[%c0_194, %c0_195] : memref<36x8xf32, #tpu.memory_space<vmem>>, vector<36x8xf32>
      tpu.vector_store %arg11[%c0_194, %c0_195], %468 {strides = array<i32>} : memref<36x8xf32, #tpu.memory_space<vmem>>, vector<36x8xf32>,
    } else {
    }
    %c0 = arith.constant 0 : index
    %c0_1 = arith.constant 0 : index
    %c0_2 = arith.constant 0 : index
    %c0_3 = arith.constant 0 : index
    %3 = vector.load %arg2[%c0, %c0_1, %c0_2, %c0_3] : memref<1x8x16x8xf32, #tpu.memory_space<vmem>>, vector<1x8x16x8xf32>
    %4 = vector.shape_cast %3 : vector<1x8x16x8xf32> to vector<8x16x8xf32>
    %c0_4 = arith.constant 0 : index
    %c0_5 = arith.constant 0 : index
    %5 = vector.load %arg3[%c0_4, %c0_5] : memref<8x12xf32, #tpu.memory_space<vmem>>, vector<8x12xf32>
    %cst = arith.constant dense<0xFF800000> : vector<8x8xf32>
    %6 = vector.multi_reduction <maximumf>, %4, %cst [1] : vector<8x16x8xf32> to vector<8x8xf32>
    %7 = vector.extract_strided_slice %5 {offsets = [0, 0], sizes = [8, 1], strides = [1, 1]} : vector<8x12xf32> to vector<8x1xf32>
    %cst_6 = arith.constant 0.000000e+00 : f32
    %8 = vector.broadcast %cst_6 : f32 to vector<8x1xf32>
    %9 = arith.cmpf ogt, %7, %8 : vector<8x1xf32>
    %cst_7 = arith.constant -3.40282347E+38 : f32
    %10 = vector.shape_cast %9 : vector<8x1xi1> to vector<8x1xi1>
    %11 = vector.broadcast %10 : vector<8x1xi1> to vector<8x8xi1>
    %12 = vector.broadcast %cst_7 : f32 to vector<8x8xf32>
    %13 = arith.select %11, %6, %12 : vector<8x8xi1>, vector<8x8xf32>
    %cst_8 = arith.constant dense<0xFF800000> : vector<8xf32>
    %14 = vector.multi_reduction <maximumf>, %13, %cst_8 [0] : vector<8x8xf32> to vector<8xf32>
    %15 = vector.shape_cast %14 : vector<8xf32> to vector<1x8xf32>
    %c0_9 = arith.constant 0 : index
    %c0_10 = arith.constant 0 : index
    %16 = vector.load %arg8[%c0_9, %c0_10] : memref<1x8xf32, #tpu.memory_space<vmem>>, vector<1x8xf32>
    %17 = arith.maximumf %16, %15 : vector<1x8xf32>
    %c0_11 = arith.constant 0 : index
    %c0_12 = arith.constant 0 : index
    %18 = vector.load %arg8[%c0_11, %c0_12] : memref<1x8xf32, #tpu.memory_space<vmem>>, vector<1x8xf32>
    tpu.vector_store %arg8[%c0_11, %c0_12], %17 {strides = array<i32>} : memref<1x8xf32, #tpu.memory_space<vmem>>, vector<1x8xf32>,
    %19 = vector.extract_strided_slice %4 {offsets = [0, 0, 0], sizes = [8, 8, 8], strides = [1, 1, 1]} : vector<8x16x8xf32> to vector<8x8x8xf32>
    %cst_13 = arith.constant dense<0xFF800000> : vector<8x8xf32>
    %20 = vector.multi_reduction <maximumf>, %19, %cst_13 [1] : vector<8x8x8xf32> to vector<8x8xf32>
    %21 = vector.extract_strided_slice %4 {offsets = [0, 8, 0], sizes = [8, 8, 8], strides = [1, 1, 1]} : vector<8x16x8xf32> to vector<8x8x8xf32>
    %cst_14 = arith.constant dense<0xFF800000> : vector<8x8xf32>
    %22 = vector.multi_reduction <maximumf>, %21, %cst_14 [1] : vector<8x8x8xf32> to vector<8x8xf32>
    %23 = vector.extract_strided_slice %5 {offsets = [0, 1], sizes = [8, 1], strides = [1, 1]} : vector<8x12xf32> to vector<8x1xf32>
    %cst_15 = arith.constant 0.000000e+00 : f32
    %24 = vector.broadcast %cst_15 : f32 to vector<8x1xf32>
    %25 = arith.cmpf ogt, %23, %24 : vector<8x1xf32>
    %cst_16 = arith.constant -3.40282347E+38 : f32
    %26 = vector.shape_cast %25 : vector<8x1xi1> to vector<8x1xi1>
    %27 = vector.broadcast %26 : vector<8x1xi1> to vector<8x8xi1>
    %28 = vector.broadcast %cst_16 : f32 to vector<8x8xf32>
    %29 = arith.select %27, %20, %28 : vector<8x8xi1>, vector<8x8xf32>
    %cst_17 = arith.constant dense<0xFF800000> : vector<8xf32>
    %30 = vector.multi_reduction <maximumf>, %29, %cst_17 [0] : vector<8x8xf32> to vector<8xf32>
    %31 = vector.shape_cast %30 : vector<8xf32> to vector<1x8xf32>
    %cst_18 = arith.constant 0.000000e+00 : f32
    %32 = vector.broadcast %cst_18 : f32 to vector<8x1xf32>
    %33 = arith.cmpf ogt, %23, %32 : vector<8x1xf32>
    %cst_19 = arith.constant -3.40282347E+38 : f32
    %34 = vector.shape_cast %33 : vector<8x1xi1> to vector<8x1xi1>
    %35 = vector.broadcast %34 : vector<8x1xi1> to vector<8x8xi1>
    %36 = vector.broadcast %cst_19 : f32 to vector<8x8xf32>
    %37 = arith.select %35, %22, %36 : vector<8x8xi1>, vector<8x8xf32>
    %cst_20 = arith.constant dense<0xFF800000> : vector<8xf32>
    %38 = vector.multi_reduction <maximumf>, %37, %cst_20 [0] : vector<8x8xf32> to vector<8xf32>
    %39 = vector.shape_cast %38 : vector<8xf32> to vector<1x8xf32>
    %40 = vector.extract_strided_slice %5 {offsets = [0, 2], sizes = [8, 1], strides = [1, 1]} : vector<8x12xf32> to vector<8x1xf32>
    %cst_21 = arith.constant 0.000000e+00 : f32
    %41 = vector.broadcast %cst_21 : f32 to vector<8x1xf32>
    %42 = arith.cmpf ogt, %40, %41 : vector<8x1xf32>
    %cst_22 = arith.constant -3.40282347E+38 : f32
    %43 = vector.shape_cast %42 : vector<8x1xi1> to vector<8x1xi1>
    %44 = vector.broadcast %43 : vector<8x1xi1> to vector<8x8xi1>
    %45 = vector.broadcast %cst_22 : f32 to vector<8x8xf32>
    %46 = arith.select %44, %20, %45 : vector<8x8xi1>, vector<8x8xf32>
    %cst_23 = arith.constant dense<0xFF800000> : vector<8xf32>
    %47 = vector.multi_reduction <maximumf>, %46, %cst_23 [0] : vector<8x8xf32> to vector<8xf32>
    %48 = vector.shape_cast %47 : vector<8xf32> to vector<1x8xf32>
    %cst_24 = arith.constant 0.000000e+00 : f32
    %49 = vector.broadcast %cst_24 : f32 to vector<8x1xf32>
    %50 = arith.cmpf ogt, %40, %49 : vector<8x1xf32>
    %cst_25 = arith.constant -3.40282347E+38 : f32
    %51 = vector.shape_cast %50 : vector<8x1xi1> to vector<8x1xi1>
    %52 = vector.broadcast %51 : vector<8x1xi1> to vector<8x8xi1>
    %53 = vector.broadcast %cst_25 : f32 to vector<8x8xf32>
    %54 = arith.select %52, %22, %53 : vector<8x8xi1>, vector<8x8xf32>
    %cst_26 = arith.constant dense<0xFF800000> : vector<8xf32>
    %55 = vector.multi_reduction <maximumf>, %54, %cst_26 [0] : vector<8x8xf32> to vector<8xf32>
    %56 = vector.shape_cast %55 : vector<8xf32> to vector<1x8xf32>
    %57 = tpu.concatenate %31, %39, %48, %56 in 0 : vector<1x8xf32>, vector<1x8xf32>, vector<1x8xf32>, vector<1x8xf32> -> vector<4x8xf32>
    %c0_27 = arith.constant 0 : index
    %c0_28 = arith.constant 0 : index
    %58 = vector.load %arg9[%c0_27, %c0_28] : memref<4x8xf32, #tpu.memory_space<vmem>>, vector<4x8xf32>
    %59 = arith.maximumf %58, %57 : vector<4x8xf32>
    %c0_29 = arith.constant 0 : index
    %c0_30 = arith.constant 0 : index
    %60 = vector.load %arg9[%c0_29, %c0_30] : memref<4x8xf32, #tpu.memory_space<vmem>>, vector<4x8xf32>
    tpu.vector_store %arg9[%c0_29, %c0_30], %59 {strides = array<i32>} : memref<4x8xf32, #tpu.memory_space<vmem>>, vector<4x8xf32>,
    %61 = vector.extract_strided_slice %4 {offsets = [0, 0, 0], sizes = [8, 6, 8], strides = [1, 1, 1]} : vector<8x16x8xf32> to vector<8x6x8xf32>
    %cst_31 = arith.constant dense<0xFF800000> : vector<8x8xf32>
    %62 = vector.multi_reduction <maximumf>, %61, %cst_31 [1] : vector<8x6x8xf32> to vector<8x8xf32>
    %63 = vector.extract_strided_slice %4 {offsets = [0, 5, 0], sizes = [8, 6, 8], strides = [1, 1, 1]} : vector<8x16x8xf32> to vector<8x6x8xf32>
    %cst_32 = arith.constant dense<0xFF800000> : vector<8x8xf32>
    %64 = vector.multi_reduction <maximumf>, %63, %cst_32 [1] : vector<8x6x8xf32> to vector<8x8xf32>
    %65 = vector.extract_strided_slice %4 {offsets = [0, 10, 0], sizes = [8, 6, 8], strides = [1, 1, 1]} : vector<8x16x8xf32> to vector<8x6x8xf32>
    %cst_33 = arith.constant dense<0xFF800000> : vector<8x8xf32>
    %66 = vector.multi_reduction <maximumf>, %65, %cst_33 [1] : vector<8x6x8xf32> to vector<8x8xf32>
    %67 = vector.extract_strided_slice %5 {offsets = [0, 3], sizes = [8, 1], strides = [1, 1]} : vector<8x12xf32> to vector<8x1xf32>
    %cst_34 = arith.constant 0.000000e+00 : f32
    %68 = vector.broadcast %cst_34 : f32 to vector<8x1xf32>
    %69 = arith.cmpf ogt, %67, %68 : vector<8x1xf32>
    %cst_35 = arith.constant -3.40282347E+38 : f32
    %70 = vector.shape_cast %69 : vector<8x1xi1> to vector<8x1xi1>
    %71 = vector.broadcast %70 : vector<8x1xi1> to vector<8x8xi1>
    %72 = vector.broadcast %cst_35 : f32 to vector<8x8xf32>
    %73 = arith.select %71, %62, %72 : vector<8x8xi1>, vector<8x8xf32>
    %cst_36 = arith.constant dense<0xFF800000> : vector<8xf32>
    %74 = vector.multi_reduction <maximumf>, %73, %cst_36 [0] : vector<8x8xf32> to vector<8xf32>
    %75 = vector.shape_cast %74 : vector<8xf32> to vector<1x8xf32>
    %cst_37 = arith.constant 0.000000e+00 : f32
    %76 = vector.broadcast %cst_37 : f32 to vector<8x1xf32>
    %77 = arith.cmpf ogt, %67, %76 : vector<8x1xf32>
    %cst_38 = arith.constant -3.40282347E+38 : f32
    %78 = vector.shape_cast %77 : vector<8x1xi1> to vector<8x1xi1>
    %79 = vector.broadcast %78 : vector<8x1xi1> to vector<8x8xi1>
    %80 = vector.broadcast %cst_38 : f32 to vector<8x8xf32>
    %81 = arith.select %79, %64, %80 : vector<8x8xi1>, vector<8x8xf32>
    %cst_39 = arith.constant dense<0xFF800000> : vector<8xf32>
    %82 = vector.multi_reduction <maximumf>, %81, %cst_39 [0] : vector<8x8xf32> to vector<8xf32>
    %83 = vector.shape_cast %82 : vector<8xf32> to vector<1x8xf32>
    %cst_40 = arith.constant 0.000000e+00 : f32
    %84 = vector.broadcast %cst_40 : f32 to vector<8x1xf32>
    %85 = arith.cmpf ogt, %67, %84 : vector<8x1xf32>
    %cst_41 = arith.constant -3.40282347E+38 : f32
    %86 = vector.shape_cast %85 : vector<8x1xi1> to vector<8x1xi1>
    %87 = vector.broadcast %86 : vector<8x1xi1> to vector<8x8xi1>
    %88 = vector.broadcast %cst_41 : f32 to vector<8x8xf32>
    %89 = arith.select %87, %66, %88 : vector<8x8xi1>, vector<8x8xf32>
    %cst_42 = arith.constant dense<0xFF800000> : vector<8xf32>
    %90 = vector.multi_reduction <maximumf>, %89, %cst_42 [0] : vector<8x8xf32> to vector<8xf32>
    %91 = vector.shape_cast %90 : vector<8xf32> to vector<1x8xf32>
    %92 = vector.extract_strided_slice %5 {offsets = [0, 4], sizes = [8, 1], strides = [1, 1]} : vector<8x12xf32> to vector<8x1xf32>
    %cst_43 = arith.constant 0.000000e+00 : f32
    %93 = vector.broadcast %cst_43 : f32 to vector<8x1xf32>
    %94 = arith.cmpf ogt, %92, %93 : vector<8x1xf32>
    %cst_44 = arith.constant -3.40282347E+38 : f32
    %95 = vector.shape_cast %94 : vector<8x1xi1> to vector<8x1xi1>
    %96 = vector.broadcast %95 : vector<8x1xi1> to vector<8x8xi1>
    %97 = vector.broadcast %cst_44 : f32 to vector<8x8xf32>
    %98 = arith.select %96, %62, %97 : vector<8x8xi1>, vector<8x8xf32>
    %cst_45 = arith.constant dense<0xFF800000> : vector<8xf32>
    %99 = vector.multi_reduction <maximumf>, %98, %cst_45 [0] : vector<8x8xf32> to vector<8xf32>
    %100 = vector.shape_cast %99 : vector<8xf32> to vector<1x8xf32>
    %cst_46 = arith.constant 0.000000e+00 : f32
    %101 = vector.broadcast %cst_46 : f32 to vector<8x1xf32>
    %102 = arith.cmpf ogt, %92, %101 : vector<8x1xf32>
    %cst_47 = arith.constant -3.40282347E+38 : f32
    %103 = vector.shape_cast %102 : vector<8x1xi1> to vector<8x1xi1>
    %104 = vector.broadcast %103 : vector<8x1xi1> to vector<8x8xi1>
    %105 = vector.broadcast %cst_47 : f32 to vector<8x8xf32>
    %106 = arith.select %104, %64, %105 : vector<8x8xi1>, vector<8x8xf32>
    %cst_48 = arith.constant dense<0xFF800000> : vector<8xf32>
    %107 = vector.multi_reduction <maximumf>, %106, %cst_48 [0] : vector<8x8xf32> to vector<8xf32>
    %108 = vector.shape_cast %107 : vector<8xf32> to vector<1x8xf32>
    %cst_49 = arith.constant 0.000000e+00 : f32
    %109 = vector.broadcast %cst_49 : f32 to vector<8x1xf32>
    %110 = arith.cmpf ogt, %92, %109 : vector<8x1xf32>
    %cst_50 = arith.constant -3.40282347E+38 : f32
    %111 = vector.shape_cast %110 : vector<8x1xi1> to vector<8x1xi1>
    %112 = vector.broadcast %111 : vector<8x1xi1> to vector<8x8xi1>
    %113 = vector.broadcast %cst_50 : f32 to vector<8x8xf32>
    %114 = arith.select %112, %66, %113 : vector<8x8xi1>, vector<8x8xf32>
    %cst_51 = arith.constant dense<0xFF800000> : vector<8xf32>
    %115 = vector.multi_reduction <maximumf>, %114, %cst_51 [0] : vector<8x8xf32> to vector<8xf32>
    %116 = vector.shape_cast %115 : vector<8xf32> to vector<1x8xf32>
    %117 = vector.extract_strided_slice %5 {offsets = [0, 5], sizes = [8, 1], strides = [1, 1]} : vector<8x12xf32> to vector<8x1xf32>
    %cst_52 = arith.constant 0.000000e+00 : f32
    %118 = vector.broadcast %cst_52 : f32 to vector<8x1xf32>
    %119 = arith.cmpf ogt, %117, %118 : vector<8x1xf32>
    %cst_53 = arith.constant -3.40282347E+38 : f32
    %120 = vector.shape_cast %119 : vector<8x1xi1> to vector<8x1xi1>
    %121 = vector.broadcast %120 : vector<8x1xi1> to vector<8x8xi1>
    %122 = vector.broadcast %cst_53 : f32 to vector<8x8xf32>
    %123 = arith.select %121, %62, %122 : vector<8x8xi1>, vector<8x8xf32>
    %cst_54 = arith.constant dense<0xFF800000> : vector<8xf32>
    %124 = vector.multi_reduction <maximumf>, %123, %cst_54 [0] : vector<8x8xf32> to vector<8xf32>
    %125 = vector.shape_cast %124 : vector<8xf32> to vector<1x8xf32>
    %cst_55 = arith.constant 0.000000e+00 : f32
    %126 = vector.broadcast %cst_55 : f32 to vector<8x1xf32>
    %127 = arith.cmpf ogt, %117, %126 : vector<8x1xf32>
    %cst_56 = arith.constant -3.40282347E+38 : f32
    %128 = vector.shape_cast %127 : vector<8x1xi1> to vector<8x1xi1>
    %129 = vector.broadcast %128 : vector<8x1xi1> to vector<8x8xi1>
    %130 = vector.broadcast %cst_56 : f32 to vector<8x8xf32>
    %131 = arith.select %129, %64, %130 : vector<8x8xi1>, vector<8x8xf32>
    %cst_57 = arith.constant dense<0xFF800000> : vector<8xf32>
    %132 = vector.multi_reduction <maximumf>, %131, %cst_57 [0] : vector<8x8xf32> to vector<8xf32>
    %133 = vector.shape_cast %132 : vector<8xf32> to vector<1x8xf32>
    %cst_58 = arith.constant 0.000000e+00 : f32
    %134 = vector.broadcast %cst_58 : f32 to vector<8x1xf32>
    %135 = arith.cmpf ogt, %117, %134 : vector<8x1xf32>
    %cst_59 = arith.constant -3.40282347E+38 : f32
    %136 = vector.shape_cast %135 : vector<8x1xi1> to vector<8x1xi1>
    %137 = vector.broadcast %136 : vector<8x1xi1> to vector<8x8xi1>
    %138 = vector.broadcast %cst_59 : f32 to vector<8x8xf32>
    %139 = arith.select %137, %66, %138 : vector<8x8xi1>, vector<8x8xf32>
    %cst_60 = arith.constant dense<0xFF800000> : vector<8xf32>
    %140 = vector.multi_reduction <maximumf>, %139, %cst_60 [0] : vector<8x8xf32> to vector<8xf32>
    %141 = vector.shape_cast %140 : vector<8xf32> to vector<1x8xf32>
    %142 = tpu.concatenate %75, %83, %91, %100, %108, %116, %125, %133, %141 in 0 : vector<1x8xf32>, vector<1x8xf32>, vector<1x8xf32>, vector<1x8xf32>, vector<1x8xf32>, vector<1x8xf32>, vector<1x8xf32>, vector<1x8xf32>, vector<1x8xf32> -> vector<9x8xf32>
    %c0_61 = arith.constant 0 : index
    %c0_62 = arith.constant 0 : index
    %143 = vector.load %arg10[%c0_61, %c0_62] : memref<9x8xf32, #tpu.memory_space<vmem>>, vector<9x8xf32>
    %144 = arith.maximumf %143, %142 : vector<9x8xf32>
    %c0_63 = arith.constant 0 : index
    %c0_64 = arith.constant 0 : index
    %145 = vector.load %arg10[%c0_63, %c0_64] : memref<9x8xf32, #tpu.memory_space<vmem>>, vector<9x8xf32>
    tpu.vector_store %arg10[%c0_63, %c0_64], %144 {strides = array<i32>} : memref<9x8xf32, #tpu.memory_space<vmem>>, vector<9x8xf32>,
    %146 = vector.extract_strided_slice %4 {offsets = [0, 0, 0], sizes = [8, 3, 8], strides = [1, 1, 1]} : vector<8x16x8xf32> to vector<8x3x8xf32>
    %cst_65 = arith.constant dense<0xFF800000> : vector<8x8xf32>
    %147 = vector.multi_reduction <maximumf>, %146, %cst_65 [1] : vector<8x3x8xf32> to vector<8x8xf32>
    %148 = vector.extract_strided_slice %4 {offsets = [0, 2, 0], sizes = [8, 4, 8], strides = [1, 1, 1]} : vector<8x16x8xf32> to vector<8x4x8xf32>
    %cst_66 = arith.constant dense<0xFF800000> : vector<8x8xf32>
    %149 = vector.multi_reduction <maximumf>, %148, %cst_66 [1] : vector<8x4x8xf32> to vector<8x8xf32>
    %150 = vector.extract_strided_slice %4 {offsets = [0, 5, 0], sizes = [8, 3, 8], strides = [1, 1, 1]} : vector<8x16x8xf32> to vector<8x3x8xf32>
    %cst_67 = arith.constant dense<0xFF800000> : vector<8x8xf32>
    %151 = vector.multi_reduction <maximumf>, %150, %cst_67 [1] : vector<8x3x8xf32> to vector<8x8xf32>
    %152 = vector.extract_strided_slice %4 {offsets = [0, 8, 0], sizes = [8, 3, 8], strides = [1, 1, 1]} : vector<8x16x8xf32> to vector<8x3x8xf32>
    %cst_68 = arith.constant dense<0xFF800000> : vector<8x8xf32>
    %153 = vector.multi_reduction <maximumf>, %152, %cst_68 [1] : vector<8x3x8xf32> to vector<8x8xf32>
    %154 = vector.extract_strided_slice %4 {offsets = [0, 10, 0], sizes = [8, 4, 8], strides = [1, 1, 1]} : vector<8x16x8xf32> to vector<8x4x8xf32>
    %cst_69 = arith.constant dense<0xFF800000> : vector<8x8xf32>
    %155 = vector.multi_reduction <maximumf>, %154, %cst_69 [1] : vector<8x4x8xf32> to vector<8x8xf32>
    %156 = vector.extract_strided_slice %4 {offsets = [0, 13, 0], sizes = [8, 3, 8], strides = [1, 1, 1]} : vector<8x16x8xf32> to vector<8x3x8xf32>
    %cst_70 = arith.constant dense<0xFF800000> : vector<8x8xf32>
    %157 = vector.multi_reduction <maximumf>, %156, %cst_70 [1] : vector<8x3x8xf32> to vector<8x8xf32>
    %158 = vector.extract_strided_slice %5 {offsets = [0, 6], sizes = [8, 1], strides = [1, 1]} : vector<8x12xf32> to vector<8x1xf32>
    %cst_71 = arith.constant 0.000000e+00 : f32
    %159 = vector.broadcast %cst_71 : f32 to vector<8x1xf32>
    %160 = arith.cmpf ogt, %158, %159 : vector<8x1xf32>
    %cst_72 = arith.constant -3.40282347E+38 : f32
    %161 = vector.shape_cast %160 : vector<8x1xi1> to vector<8x1xi1>
    %162 = vector.broadcast %161 : vector<8x1xi1> to vector<8x8xi1>
    %163 = vector.broadcast %cst_72 : f32 to vector<8x8xf32>
    %164 = arith.select %162, %147, %163 : vector<8x8xi1>, vector<8x8xf32>
    %cst_73 = arith.constant dense<0xFF800000> : vector<8xf32>
    %165 = vector.multi_reduction <maximumf>, %164, %cst_73 [0] : vector<8x8xf32> to vector<8xf32>
    %166 = vector.shape_cast %165 : vector<8xf32> to vector<1x8xf32>
    %cst_74 = arith.constant 0.000000e+00 : f32
    %167 = vector.broadcast %cst_74 : f32 to vector<8x1xf32>
    %168 = arith.cmpf ogt, %158, %167 : vector<8x1xf32>
    %cst_75 = arith.constant -3.40282347E+38 : f32
    %169 = vector.shape_cast %168 : vector<8x1xi1> to vector<8x1xi1>
    %170 = vector.broadcast %169 : vector<8x1xi1> to vector<8x8xi1>
    %171 = vector.broadcast %cst_75 : f32 to vector<8x8xf32>
    %172 = arith.select %170, %149, %171 : vector<8x8xi1>, vector<8x8xf32>
    %cst_76 = arith.constant dense<0xFF800000> : vector<8xf32>
    %173 = vector.multi_reduction <maximumf>, %172, %cst_76 [0] : vector<8x8xf32> to vector<8xf32>
    %174 = vector.shape_cast %173 : vector<8xf32> to vector<1x8xf32>
    %cst_77 = arith.constant 0.000000e+00 : f32
    %175 = vector.broadcast %cst_77 : f32 to vector<8x1xf32>
    %176 = arith.cmpf ogt, %158, %175 : vector<8x1xf32>
    %cst_78 = arith.constant -3.40282347E+38 : f32
    %177 = vector.shape_cast %176 : vector<8x1xi1> to vector<8x1xi1>
    %178 = vector.broadcast %177 : vector<8x1xi1> to vector<8x8xi1>
    %179 = vector.broadcast %cst_78 : f32 to vector<8x8xf32>
    %180 = arith.select %178, %151, %179 : vector<8x8xi1>, vector<8x8xf32>
    %cst_79 = arith.constant dense<0xFF800000> : vector<8xf32>
    %181 = vector.multi_reduction <maximumf>, %180, %cst_79 [0] : vector<8x8xf32> to vector<8xf32>
    %182 = vector.shape_cast %181 : vector<8xf32> to vector<1x8xf32>
    %cst_80 = arith.constant 0.000000e+00 : f32
    %183 = vector.broadcast %cst_80 : f32 to vector<8x1xf32>
    %184 = arith.cmpf ogt, %158, %183 : vector<8x1xf32>
    %cst_81 = arith.constant -3.40282347E+38 : f32
    %185 = vector.shape_cast %184 : vector<8x1xi1> to vector<8x1xi1>
    %186 = vector.broadcast %185 : vector<8x1xi1> to vector<8x8xi1>
    %187 = vector.broadcast %cst_81 : f32 to vector<8x8xf32>
    %188 = arith.select %186, %153, %187 : vector<8x8xi1>, vector<8x8xf32>
    %cst_82 = arith.constant dense<0xFF800000> : vector<8xf32>
    %189 = vector.multi_reduction <maximumf>, %188, %cst_82 [0] : vector<8x8xf32> to vector<8xf32>
    %190 = vector.shape_cast %189 : vector<8xf32> to vector<1x8xf32>
    %cst_83 = arith.constant 0.000000e+00 : f32
    %191 = vector.broadcast %cst_83 : f32 to vector<8x1xf32>
    %192 = arith.cmpf ogt, %158, %191 : vector<8x1xf32>
    %cst_84 = arith.constant -3.40282347E+38 : f32
    %193 = vector.shape_cast %192 : vector<8x1xi1> to vector<8x1xi1>
    %194 = vector.broadcast %193 : vector<8x1xi1> to vector<8x8xi1>
    %195 = vector.broadcast %cst_84 : f32 to vector<8x8xf32>
    %196 = arith.select %194, %155, %195 : vector<8x8xi1>, vector<8x8xf32>
    %cst_85 = arith.constant dense<0xFF800000> : vector<8xf32>
    %197 = vector.multi_reduction <maximumf>, %196, %cst_85 [0] : vector<8x8xf32> to vector<8xf32>
    %198 = vector.shape_cast %197 : vector<8xf32> to vector<1x8xf32>
    %cst_86 = arith.constant 0.000000e+00 : f32
    %199 = vector.broadcast %cst_86 : f32 to vector<8x1xf32>
    %200 = arith.cmpf ogt, %158, %199 : vector<8x1xf32>
    %cst_87 = arith.constant -3.40282347E+38 : f32
    %201 = vector.shape_cast %200 : vector<8x1xi1> to vector<8x1xi1>
    %202 = vector.broadcast %201 : vector<8x1xi1> to vector<8x8xi1>
    %203 = vector.broadcast %cst_87 : f32 to vector<8x8xf32>
    %204 = arith.select %202, %157, %203 : vector<8x8xi1>, vector<8x8xf32>
    %cst_88 = arith.constant dense<0xFF800000> : vector<8xf32>
    %205 = vector.multi_reduction <maximumf>, %204, %cst_88 [0] : vector<8x8xf32> to vector<8xf32>
    %206 = vector.shape_cast %205 : vector<8xf32> to vector<1x8xf32>
    %207 = vector.extract_strided_slice %5 {offsets = [0, 7], sizes = [8, 1], strides = [1, 1]} : vector<8x12xf32> to vector<8x1xf32>
    %cst_89 = arith.constant 0.000000e+00 : f32
    %208 = vector.broadcast %cst_89 : f32 to vector<8x1xf32>
    %209 = arith.cmpf ogt, %207, %208 : vector<8x1xf32>
    %cst_90 = arith.constant -3.40282347E+38 : f32
    %210 = vector.shape_cast %209 : vector<8x1xi1> to vector<8x1xi1>
    %211 = vector.broadcast %210 : vector<8x1xi1> to vector<8x8xi1>
    %212 = vector.broadcast %cst_90 : f32 to vector<8x8xf32>
    %213 = arith.select %211, %147, %212 : vector<8x8xi1>, vector<8x8xf32>
    %cst_91 = arith.constant dense<0xFF800000> : vector<8xf32>
    %214 = vector.multi_reduction <maximumf>, %213, %cst_91 [0] : vector<8x8xf32> to vector<8xf32>
    %215 = vector.shape_cast %214 : vector<8xf32> to vector<1x8xf32>
    %cst_92 = arith.constant 0.000000e+00 : f32
    %216 = vector.broadcast %cst_92 : f32 to vector<8x1xf32>
    %217 = arith.cmpf ogt, %207, %216 : vector<8x1xf32>
    %cst_93 = arith.constant -3.40282347E+38 : f32
    %218 = vector.shape_cast %217 : vector<8x1xi1> to vector<8x1xi1>
    %219 = vector.broadcast %218 : vector<8x1xi1> to vector<8x8xi1>
    %220 = vector.broadcast %cst_93 : f32 to vector<8x8xf32>
    %221 = arith.select %219, %149, %220 : vector<8x8xi1>, vector<8x8xf32>
    %cst_94 = arith.constant dense<0xFF800000> : vector<8xf32>
    %222 = vector.multi_reduction <maximumf>, %221, %cst_94 [0] : vector<8x8xf32> to vector<8xf32>
    %223 = vector.shape_cast %222 : vector<8xf32> to vector<1x8xf32>
    %cst_95 = arith.constant 0.000000e+00 : f32
    %224 = vector.broadcast %cst_95 : f32 to vector<8x1xf32>
    %225 = arith.cmpf ogt, %207, %224 : vector<8x1xf32>
    %cst_96 = arith.constant -3.40282347E+38 : f32
    %226 = vector.shape_cast %225 : vector<8x1xi1> to vector<8x1xi1>
    %227 = vector.broadcast %226 : vector<8x1xi1> to vector<8x8xi1>
    %228 = vector.broadcast %cst_96 : f32 to vector<8x8xf32>
    %229 = arith.select %227, %151, %228 : vector<8x8xi1>, vector<8x8xf32>
    %cst_97 = arith.constant dense<0xFF800000> : vector<8xf32>
    %230 = vector.multi_reduction <maximumf>, %229, %cst_97 [0] : vector<8x8xf32> to vector<8xf32>
    %231 = vector.shape_cast %230 : vector<8xf32> to vector<1x8xf32>
    %cst_98 = arith.constant 0.000000e+00 : f32
    %232 = vector.broadcast %cst_98 : f32 to vector<8x1xf32>
    %233 = arith.cmpf ogt, %207, %232 : vector<8x1xf32>
    %cst_99 = arith.constant -3.40282347E+38 : f32
    %234 = vector.shape_cast %233 : vector<8x1xi1> to vector<8x1xi1>
    %235 = vector.broadcast %234 : vector<8x1xi1> to vector<8x8xi1>
    %236 = vector.broadcast %cst_99 : f32 to vector<8x8xf32>
    %237 = arith.select %235, %153, %236 : vector<8x8xi1>, vector<8x8xf32>
    %cst_100 = arith.constant dense<0xFF800000> : vector<8xf32>
    %238 = vector.multi_reduction <maximumf>, %237, %cst_100 [0] : vector<8x8xf32> to vector<8xf32>
    %239 = vector.shape_cast %238 : vector<8xf32> to vector<1x8xf32>
    %cst_101 = arith.constant 0.000000e+00 : f32
    %240 = vector.broadcast %cst_101 : f32 to vector<8x1xf32>
    %241 = arith.cmpf ogt, %207, %240 : vector<8x1xf32>
    %cst_102 = arith.constant -3.40282347E+38 : f32
    %242 = vector.shape_cast %241 : vector<8x1xi1> to vector<8x1xi1>
    %243 = vector.broadcast %242 : vector<8x1xi1> to vector<8x8xi1>
    %244 = vector.broadcast %cst_102 : f32 to vector<8x8xf32>
    %245 = arith.select %243, %155, %244 : vector<8x8xi1>, vector<8x8xf32>
    %cst_103 = arith.constant dense<0xFF800000> : vector<8xf32>
    %246 = vector.multi_reduction <maximumf>, %245, %cst_103 [0] : vector<8x8xf32> to vector<8xf32>
    %247 = vector.shape_cast %246 : vector<8xf32> to vector<1x8xf32>
    %cst_104 = arith.constant 0.000000e+00 : f32
    %248 = vector.broadcast %cst_104 : f32 to vector<8x1xf32>
    %249 = arith.cmpf ogt, %207, %248 : vector<8x1xf32>
    %cst_105 = arith.constant -3.40282347E+38 : f32
    %250 = vector.shape_cast %249 : vector<8x1xi1> to vector<8x1xi1>
    %251 = vector.broadcast %250 : vector<8x1xi1> to vector<8x8xi1>
    %252 = vector.broadcast %cst_105 : f32 to vector<8x8xf32>
    %253 = arith.select %251, %157, %252 : vector<8x8xi1>, vector<8x8xf32>
    %cst_106 = arith.constant dense<0xFF800000> : vector<8xf32>
    %254 = vector.multi_reduction <maximumf>, %253, %cst_106 [0] : vector<8x8xf32> to vector<8xf32>
    %255 = vector.shape_cast %254 : vector<8xf32> to vector<1x8xf32>
    %256 = vector.extract_strided_slice %5 {offsets = [0, 8], sizes = [8, 1], strides = [1, 1]} : vector<8x12xf32> to vector<8x1xf32>
    %cst_107 = arith.constant 0.000000e+00 : f32
    %257 = vector.broadcast %cst_107 : f32 to vector<8x1xf32>
    %258 = arith.cmpf ogt, %256, %257 : vector<8x1xf32>
    %cst_108 = arith.constant -3.40282347E+38 : f32
    %259 = vector.shape_cast %258 : vector<8x1xi1> to vector<8x1xi1>
    %260 = vector.broadcast %259 : vector<8x1xi1> to vector<8x8xi1>
    %261 = vector.broadcast %cst_108 : f32 to vector<8x8xf32>
    %262 = arith.select %260, %147, %261 : vector<8x8xi1>, vector<8x8xf32>
    %cst_109 = arith.constant dense<0xFF800000> : vector<8xf32>
    %263 = vector.multi_reduction <maximumf>, %262, %cst_109 [0] : vector<8x8xf32> to vector<8xf32>
    %264 = vector.shape_cast %263 : vector<8xf32> to vector<1x8xf32>
    %cst_110 = arith.constant 0.000000e+00 : f32
    %265 = vector.broadcast %cst_110 : f32 to vector<8x1xf32>
    %266 = arith.cmpf ogt, %256, %265 : vector<8x1xf32>
    %cst_111 = arith.constant -3.40282347E+38 : f32
    %267 = vector.shape_cast %266 : vector<8x1xi1> to vector<8x1xi1>
    %268 = vector.broadcast %267 : vector<8x1xi1> to vector<8x8xi1>
    %269 = vector.broadcast %cst_111 : f32 to vector<8x8xf32>
    %270 = arith.select %268, %149, %269 : vector<8x8xi1>, vector<8x8xf32>
    %cst_112 = arith.constant dense<0xFF800000> : vector<8xf32>
    %271 = vector.multi_reduction <maximumf>, %270, %cst_112 [0] : vector<8x8xf32> to vector<8xf32>
    %272 = vector.shape_cast %271 : vector<8xf32> to vector<1x8xf32>
    %cst_113 = arith.constant 0.000000e+00 : f32
    %273 = vector.broadcast %cst_113 : f32 to vector<8x1xf32>
    %274 = arith.cmpf ogt, %256, %273 : vector<8x1xf32>
    %cst_114 = arith.constant -3.40282347E+38 : f32
    %275 = vector.shape_cast %274 : vector<8x1xi1> to vector<8x1xi1>
    %276 = vector.broadcast %275 : vector<8x1xi1> to vector<8x8xi1>
    %277 = vector.broadcast %cst_114 : f32 to vector<8x8xf32>
    %278 = arith.select %276, %151, %277 : vector<8x8xi1>, vector<8x8xf32>
    %cst_115 = arith.constant dense<0xFF800000> : vector<8xf32>
    %279 = vector.multi_reduction <maximumf>, %278, %cst_115 [0] : vector<8x8xf32> to vector<8xf32>
    %280 = vector.shape_cast %279 : vector<8xf32> to vector<1x8xf32>
    %cst_116 = arith.constant 0.000000e+00 : f32
    %281 = vector.broadcast %cst_116 : f32 to vector<8x1xf32>
    %282 = arith.cmpf ogt, %256, %281 : vector<8x1xf32>
    %cst_117 = arith.constant -3.40282347E+38 : f32
    %283 = vector.shape_cast %282 : vector<8x1xi1> to vector<8x1xi1>
    %284 = vector.broadcast %283 : vector<8x1xi1> to vector<8x8xi1>
    %285 = vector.broadcast %cst_117 : f32 to vector<8x8xf32>
    %286 = arith.select %284, %153, %285 : vector<8x8xi1>, vector<8x8xf32>
    %cst_118 = arith.constant dense<0xFF800000> : vector<8xf32>
    %287 = vector.multi_reduction <maximumf>, %286, %cst_118 [0] : vector<8x8xf32> to vector<8xf32>
    %288 = vector.shape_cast %287 : vector<8xf32> to vector<1x8xf32>
    %cst_119 = arith.constant 0.000000e+00 : f32
    %289 = vector.broadcast %cst_119 : f32 to vector<8x1xf32>
    %290 = arith.cmpf ogt, %256, %289 : vector<8x1xf32>
    %cst_120 = arith.constant -3.40282347E+38 : f32
    %291 = vector.shape_cast %290 : vector<8x1xi1> to vector<8x1xi1>
    %292 = vector.broadcast %291 : vector<8x1xi1> to vector<8x8xi1>
    %293 = vector.broadcast %cst_120 : f32 to vector<8x8xf32>
    %294 = arith.select %292, %155, %293 : vector<8x8xi1>, vector<8x8xf32>
    %cst_121 = arith.constant dense<0xFF800000> : vector<8xf32>
    %295 = vector.multi_reduction <maximumf>, %294, %cst_121 [0] : vector<8x8xf32> to vector<8xf32>
    %296 = vector.shape_cast %295 : vector<8xf32> to vector<1x8xf32>
    %cst_122 = arith.constant 0.000000e+00 : f32
    %297 = vector.broadcast %cst_122 : f32 to vector<8x1xf32>
    %298 = arith.cmpf ogt, %256, %297 : vector<8x1xf32>
    %cst_123 = arith.constant -3.40282347E+38 : f32
    %299 = vector.shape_cast %298 : vector<8x1xi1> to vector<8x1xi1>
    %300 = vector.broadcast %299 : vector<8x1xi1> to vector<8x8xi1>
    %301 = vector.broadcast %cst_123 : f32 to vector<8x8xf32>
    %302 = arith.select %300, %157, %301 : vector<8x8xi1>, vector<8x8xf32>
    %cst_124 = arith.constant dense<0xFF800000> : vector<8xf32>
    %303 = vector.multi_reduction <maximumf>, %302, %cst_124 [0] : vector<8x8xf32> to vector<8xf32>
    %304 = vector.shape_cast %303 : vector<8xf32> to vector<1x8xf32>
    %305 = vector.extract_strided_slice %5 {offsets = [0, 9], sizes = [8, 1], strides = [1, 1]} : vector<8x12xf32> to vector<8x1xf32>
    %cst_125 = arith.constant 0.000000e+00 : f32
    %306 = vector.broadcast %cst_125 : f32 to vector<8x1xf32>
    %307 = arith.cmpf ogt, %305, %306 : vector<8x1xf32>
    %cst_126 = arith.constant -3.40282347E+38 : f32
    %308 = vector.shape_cast %307 : vector<8x1xi1> to vector<8x1xi1>
    %309 = vector.broadcast %308 : vector<8x1xi1> to vector<8x8xi1>
    %310 = vector.broadcast %cst_126 : f32 to vector<8x8xf32>
    %311 = arith.select %309, %147, %310 : vector<8x8xi1>, vector<8x8xf32>
    %cst_127 = arith.constant dense<0xFF800000> : vector<8xf32>
    %312 = vector.multi_reduction <maximumf>, %311, %cst_127 [0] : vector<8x8xf32> to vector<8xf32>
    %313 = vector.shape_cast %312 : vector<8xf32> to vector<1x8xf32>
    %cst_128 = arith.constant 0.000000e+00 : f32
    %314 = vector.broadcast %cst_128 : f32 to vector<8x1xf32>
    %315 = arith.cmpf ogt, %305, %314 : vector<8x1xf32>
    %cst_129 = arith.constant -3.40282347E+38 : f32
    %316 = vector.shape_cast %315 : vector<8x1xi1> to vector<8x1xi1>
    %317 = vector.broadcast %316 : vector<8x1xi1> to vector<8x8xi1>
    %318 = vector.broadcast %cst_129 : f32 to vector<8x8xf32>
    %319 = arith.select %317, %149, %318 : vector<8x8xi1>, vector<8x8xf32>
    %cst_130 = arith.constant dense<0xFF800000> : vector<8xf32>
    %320 = vector.multi_reduction <maximumf>, %319, %cst_130 [0] : vector<8x8xf32> to vector<8xf32>
    %321 = vector.shape_cast %320 : vector<8xf32> to vector<1x8xf32>
    %cst_131 = arith.constant 0.000000e+00 : f32
    %322 = vector.broadcast %cst_131 : f32 to vector<8x1xf32>
    %323 = arith.cmpf ogt, %305, %322 : vector<8x1xf32>
    %cst_132 = arith.constant -3.40282347E+38 : f32
    %324 = vector.shape_cast %323 : vector<8x1xi1> to vector<8x1xi1>
    %325 = vector.broadcast %324 : vector<8x1xi1> to vector<8x8xi1>
    %326 = vector.broadcast %cst_132 : f32 to vector<8x8xf32>
    %327 = arith.select %325, %151, %326 : vector<8x8xi1>, vector<8x8xf32>
    %cst_133 = arith.constant dense<0xFF800000> : vector<8xf32>
    %328 = vector.multi_reduction <maximumf>, %327, %cst_133 [0] : vector<8x8xf32> to vector<8xf32>
    %329 = vector.shape_cast %328 : vector<8xf32> to vector<1x8xf32>
    %cst_134 = arith.constant 0.000000e+00 : f32
    %330 = vector.broadcast %cst_134 : f32 to vector<8x1xf32>
    %331 = arith.cmpf ogt, %305, %330 : vector<8x1xf32>
    %cst_135 = arith.constant -3.40282347E+38 : f32
    %332 = vector.shape_cast %331 : vector<8x1xi1> to vector<8x1xi1>
    %333 = vector.broadcast %332 : vector<8x1xi1> to vector<8x8xi1>
    %334 = vector.broadcast %cst_135 : f32 to vector<8x8xf32>
    %335 = arith.select %333, %153, %334 : vector<8x8xi1>, vector<8x8xf32>
    %cst_136 = arith.constant dense<0xFF800000> : vector<8xf32>
    %336 = vector.multi_reduction <maximumf>, %335, %cst_136 [0] : vector<8x8xf32> to vector<8xf32>
    %337 = vector.shape_cast %336 : vector<8xf32> to vector<1x8xf32>
    %cst_137 = arith.constant 0.000000e+00 : f32
    %338 = vector.broadcast %cst_137 : f32 to vector<8x1xf32>
    %339 = arith.cmpf ogt, %305, %338 : vector<8x1xf32>
    %cst_138 = arith.constant -3.40282347E+38 : f32
    %340 = vector.shape_cast %339 : vector<8x1xi1> to vector<8x1xi1>
    %341 = vector.broadcast %340 : vector<8x1xi1> to vector<8x8xi1>
    %342 = vector.broadcast %cst_138 : f32 to vector<8x8xf32>
    %343 = arith.select %341, %155, %342 : vector<8x8xi1>, vector<8x8xf32>
    %cst_139 = arith.constant dense<0xFF800000> : vector<8xf32>
    %344 = vector.multi_reduction <maximumf>, %343, %cst_139 [0] : vector<8x8xf32> to vector<8xf32>
    %345 = vector.shape_cast %344 : vector<8xf32> to vector<1x8xf32>
    %cst_140 = arith.constant 0.000000e+00 : f32
    %346 = vector.broadcast %cst_140 : f32 to vector<8x1xf32>
    %347 = arith.cmpf ogt, %305, %346 : vector<8x1xf32>
    %cst_141 = arith.constant -3.40282347E+38 : f32
    %348 = vector.shape_cast %347 : vector<8x1xi1> to vector<8x1xi1>
    %349 = vector.broadcast %348 : vector<8x1xi1> to vector<8x8xi1>
    %350 = vector.broadcast %cst_141 : f32 to vector<8x8xf32>
    %351 = arith.select %349, %157, %350 : vector<8x8xi1>, vector<8x8xf32>
    %cst_142 = arith.constant dense<0xFF800000> : vector<8xf32>
    %352 = vector.multi_reduction <maximumf>, %351, %cst_142 [0] : vector<8x8xf32> to vector<8xf32>
    %353 = vector.shape_cast %352 : vector<8xf32> to vector<1x8xf32>
    %354 = vector.extract_strided_slice %5 {offsets = [0, 10], sizes = [8, 1], strides = [1, 1]} : vector<8x12xf32> to vector<8x1xf32>
    %cst_143 = arith.constant 0.000000e+00 : f32
    %355 = vector.broadcast %cst_143 : f32 to vector<8x1xf32>
    %356 = arith.cmpf ogt, %354, %355 : vector<8x1xf32>
    %cst_144 = arith.constant -3.40282347E+38 : f32
    %357 = vector.shape_cast %356 : vector<8x1xi1> to vector<8x1xi1>
    %358 = vector.broadcast %357 : vector<8x1xi1> to vector<8x8xi1>
    %359 = vector.broadcast %cst_144 : f32 to vector<8x8xf32>
    %360 = arith.select %358, %147, %359 : vector<8x8xi1>, vector<8x8xf32>
    %cst_145 = arith.constant dense<0xFF800000> : vector<8xf32>
    %361 = vector.multi_reduction <maximumf>, %360, %cst_145 [0] : vector<8x8xf32> to vector<8xf32>
    %362 = vector.shape_cast %361 : vector<8xf32> to vector<1x8xf32>
    %cst_146 = arith.constant 0.000000e+00 : f32
    %363 = vector.broadcast %cst_146 : f32 to vector<8x1xf32>
    %364 = arith.cmpf ogt, %354, %363 : vector<8x1xf32>
    %cst_147 = arith.constant -3.40282347E+38 : f32
    %365 = vector.shape_cast %364 : vector<8x1xi1> to vector<8x1xi1>
    %366 = vector.broadcast %365 : vector<8x1xi1> to vector<8x8xi1>
    %367 = vector.broadcast %cst_147 : f32 to vector<8x8xf32>
    %368 = arith.select %366, %149, %367 : vector<8x8xi1>, vector<8x8xf32>
    %cst_148 = arith.constant dense<0xFF800000> : vector<8xf32>
    %369 = vector.multi_reduction <maximumf>, %368, %cst_148 [0] : vector<8x8xf32> to vector<8xf32>
    %370 = vector.shape_cast %369 : vector<8xf32> to vector<1x8xf32>
    %cst_149 = arith.constant 0.000000e+00 : f32
    %371 = vector.broadcast %cst_149 : f32 to vector<8x1xf32>
    %372 = arith.cmpf ogt, %354, %371 : vector<8x1xf32>
    %cst_150 = arith.constant -3.40282347E+38 : f32
    %373 = vector.shape_cast %372 : vector<8x1xi1> to vector<8x1xi1>
    %374 = vector.broadcast %373 : vector<8x1xi1> to vector<8x8xi1>
    %375 = vector.broadcast %cst_150 : f32 to vector<8x8xf32>
    %376 = arith.select %374, %151, %375 : vector<8x8xi1>, vector<8x8xf32>
    %cst_151 = arith.constant dense<0xFF800000> : vector<8xf32>
    %377 = vector.multi_reduction <maximumf>, %376, %cst_151 [0] : vector<8x8xf32> to vector<8xf32>
    %378 = vector.shape_cast %377 : vector<8xf32> to vector<1x8xf32>
    %cst_152 = arith.constant 0.000000e+00 : f32
    %379 = vector.broadcast %cst_152 : f32 to vector<8x1xf32>
    %380 = arith.cmpf ogt, %354, %379 : vector<8x1xf32>
    %cst_153 = arith.constant -3.40282347E+38 : f32
    %381 = vector.shape_cast %380 : vector<8x1xi1> to vector<8x1xi1>
    %382 = vector.broadcast %381 : vector<8x1xi1> to vector<8x8xi1>
    %383 = vector.broadcast %cst_153 : f32 to vector<8x8xf32>
    %384 = arith.select %382, %153, %383 : vector<8x8xi1>, vector<8x8xf32>
    %cst_154 = arith.constant dense<0xFF800000> : vector<8xf32>
    %385 = vector.multi_reduction <maximumf>, %384, %cst_154 [0] : vector<8x8xf32> to vector<8xf32>
    %386 = vector.shape_cast %385 : vector<8xf32> to vector<1x8xf32>
    %cst_155 = arith.constant 0.000000e+00 : f32
    %387 = vector.broadcast %cst_155 : f32 to vector<8x1xf32>
    %388 = arith.cmpf ogt, %354, %387 : vector<8x1xf32>
    %cst_156 = arith.constant -3.40282347E+38 : f32
    %389 = vector.shape_cast %388 : vector<8x1xi1> to vector<8x1xi1>
    %390 = vector.broadcast %389 : vector<8x1xi1> to vector<8x8xi1>
    %391 = vector.broadcast %cst_156 : f32 to vector<8x8xf32>
    %392 = arith.select %390, %155, %391 : vector<8x8xi1>, vector<8x8xf32>
    %cst_157 = arith.constant dense<0xFF800000> : vector<8xf32>
    %393 = vector.multi_reduction <maximumf>, %392, %cst_157 [0] : vector<8x8xf32> to vector<8xf32>
    %394 = vector.shape_cast %393 : vector<8xf32> to vector<1x8xf32>
    %cst_158 = arith.constant 0.000000e+00 : f32
    %395 = vector.broadcast %cst_158 : f32 to vector<8x1xf32>
    %396 = arith.cmpf ogt, %354, %395 : vector<8x1xf32>
    %cst_159 = arith.constant -3.40282347E+38 : f32
    %397 = vector.shape_cast %396 : vector<8x1xi1> to vector<8x1xi1>
    %398 = vector.broadcast %397 : vector<8x1xi1> to vector<8x8xi1>
    %399 = vector.broadcast %cst_159 : f32 to vector<8x8xf32>
    %400 = arith.select %398, %157, %399 : vector<8x8xi1>, vector<8x8xf32>
    %cst_160 = arith.constant dense<0xFF800000> : vector<8xf32>
    %401 = vector.multi_reduction <maximumf>, %400, %cst_160 [0] : vector<8x8xf32> to vector<8xf32>
    %402 = vector.shape_cast %401 : vector<8xf32> to vector<1x8xf32>
    %403 = vector.extract_strided_slice %5 {offsets = [0, 11], sizes = [8, 1], strides = [1, 1]} : vector<8x12xf32> to vector<8x1xf32>
    %cst_161 = arith.constant 0.000000e+00 : f32
    %404 = vector.broadcast %cst_161 : f32 to vector<8x1xf32>
    %405 = arith.cmpf ogt, %403, %404 : vector<8x1xf32>
    %cst_162 = arith.constant -3.40282347E+38 : f32
    %406 = vector.shape_cast %405 : vector<8x1xi1> to vector<8x1xi1>
    %407 = vector.broadcast %406 : vector<8x1xi1> to vector<8x8xi1>
    %408 = vector.broadcast %cst_162 : f32 to vector<8x8xf32>
    %409 = arith.select %407, %147, %408 : vector<8x8xi1>, vector<8x8xf32>
    %cst_163 = arith.constant dense<0xFF800000> : vector<8xf32>
    %410 = vector.multi_reduction <maximumf>, %409, %cst_163 [0] : vector<8x8xf32> to vector<8xf32>
    %411 = vector.shape_cast %410 : vector<8xf32> to vector<1x8xf32>
    %cst_164 = arith.constant 0.000000e+00 : f32
    %412 = vector.broadcast %cst_164 : f32 to vector<8x1xf32>
    %413 = arith.cmpf ogt, %403, %412 : vector<8x1xf32>
    %cst_165 = arith.constant -3.40282347E+38 : f32
    %414 = vector.shape_cast %413 : vector<8x1xi1> to vector<8x1xi1>
    %415 = vector.broadcast %414 : vector<8x1xi1> to vector<8x8xi1>
    %416 = vector.broadcast %cst_165 : f32 to vector<8x8xf32>
    %417 = arith.select %415, %149, %416 : vector<8x8xi1>, vector<8x8xf32>
    %cst_166 = arith.constant dense<0xFF800000> : vector<8xf32>
    %418 = vector.multi_reduction <maximumf>, %417, %cst_166 [0] : vector<8x8xf32> to vector<8xf32>
    %419 = vector.shape_cast %418 : vector<8xf32> to vector<1x8xf32>
    %cst_167 = arith.constant 0.000000e+00 : f32
    %420 = vector.broadcast %cst_167 : f32 to vector<8x1xf32>
    %421 = arith.cmpf ogt, %403, %420 : vector<8x1xf32>
    %cst_168 = arith.constant -3.40282347E+38 : f32
    %422 = vector.shape_cast %421 : vector<8x1xi1> to vector<8x1xi1>
    %423 = vector.broadcast %422 : vector<8x1xi1> to vector<8x8xi1>
    %424 = vector.broadcast %cst_168 : f32 to vector<8x8xf32>
    %425 = arith.select %423, %151, %424 : vector<8x8xi1>, vector<8x8xf32>
    %cst_169 = arith.constant dense<0xFF800000> : vector<8xf32>
    %426 = vector.multi_reduction <maximumf>, %425, %cst_169 [0] : vector<8x8xf32> to vector<8xf32>
    %427 = vector.shape_cast %426 : vector<8xf32> to vector<1x8xf32>
    %cst_170 = arith.constant 0.000000e+00 : f32
    %428 = vector.broadcast %cst_170 : f32 to vector<8x1xf32>
    %429 = arith.cmpf ogt, %403, %428 : vector<8x1xf32>
    %cst_171 = arith.constant -3.40282347E+38 : f32
    %430 = vector.shape_cast %429 : vector<8x1xi1> to vector<8x1xi1>
    %431 = vector.broadcast %430 : vector<8x1xi1> to vector<8x8xi1>
    %432 = vector.broadcast %cst_171 : f32 to vector<8x8xf32>
    %433 = arith.select %431, %153, %432 : vector<8x8xi1>, vector<8x8xf32>
    %cst_172 = arith.constant dense<0xFF800000> : vector<8xf32>
    %434 = vector.multi_reduction <maximumf>, %433, %cst_172 [0] : vector<8x8xf32> to vector<8xf32>
    %435 = vector.shape_cast %434 : vector<8xf32> to vector<1x8xf32>
    %cst_173 = arith.constant 0.000000e+00 : f32
    %436 = vector.broadcast %cst_173 : f32 to vector<8x1xf32>
    %437 = arith.cmpf ogt, %403, %436 : vector<8x1xf32>
    %cst_174 = arith.constant -3.40282347E+38 : f32
    %438 = vector.shape_cast %437 : vector<8x1xi1> to vector<8x1xi1>
    %439 = vector.broadcast %438 : vector<8x1xi1> to vector<8x8xi1>
    %440 = vector.broadcast %cst_174 : f32 to vector<8x8xf32>
    %441 = arith.select %439, %155, %440 : vector<8x8xi1>, vector<8x8xf32>
    %cst_175 = arith.constant dense<0xFF800000> : vector<8xf32>
    %442 = vector.multi_reduction <maximumf>, %441, %cst_175 [0] : vector<8x8xf32> to vector<8xf32>
    %443 = vector.shape_cast %442 : vector<8xf32> to vector<1x8xf32>
    %cst_176 = arith.constant 0.000000e+00 : f32
    %444 = vector.broadcast %cst_176 : f32 to vector<8x1xf32>
    %445 = arith.cmpf ogt, %403, %444 : vector<8x1xf32>
    %cst_177 = arith.constant -3.40282347E+38 : f32
    %446 = vector.shape_cast %445 : vector<8x1xi1> to vector<8x1xi1>
    %447 = vector.broadcast %446 : vector<8x1xi1> to vector<8x8xi1>
    %448 = vector.broadcast %cst_177 : f32 to vector<8x8xf32>
    %449 = arith.select %447, %157, %448 : vector<8x8xi1>, vector<8x8xf32>
    %cst_178 = arith.constant dense<0xFF800000> : vector<8xf32>
    %450 = vector.multi_reduction <maximumf>, %449, %cst_178 [0] : vector<8x8xf32> to vector<8xf32>
    %451 = vector.shape_cast %450 : vector<8xf32> to vector<1x8xf32>
    %452 = tpu.concatenate %166, %174, %182, %190, %198, %206, %215, %223, %231, %239, %247, %255, %264, %272, %280, %288 in 0 : vector<1x8xf32>, vector<1x8xf32>, vector<1x8xf32>, vector<1x8xf32>, vector<1x8xf32>, vector<1x8xf32>, vector<1x8xf32>, vector<1x8xf32>, vector<1x8xf32>, vector<1x8xf32>, vector<1x8xf32>, vector<1x8xf32>, vector<1x8xf32>, vector<1x8xf32>, vector<1x8xf32>, vector<1x8xf32> -> vector<16x8xf32>
    %453 = tpu.concatenate %296, %304, %313, %321, %329, %337, %345, %353, %362, %370, %378, %386, %394, %402, %411, %419 in 0 : vector<1x8xf32>, vector<1x8xf32>, vector<1x8xf32>, vector<1x8xf32>, vector<1x8xf32>, vector<1x8xf32>, vector<1x8xf32>, vector<1x8xf32>, vector<1x8xf32>, vector<1x8xf32>, vector<1x8xf32>, vector<1x8xf32>, vector<1x8xf32>, vector<1x8xf32>, vector<1x8xf32>, vector<1x8xf32> -> vector<16x8xf32>
    %454 = tpu.concatenate %427, %435, %443, %451 in 0 : vector<1x8xf32>, vector<1x8xf32>, vector<1x8xf32>, vector<1x8xf32> -> vector<4x8xf32>
    %455 = tpu.concatenate %452, %453, %454 in 0 : vector<16x8xf32>, vector<16x8xf32>, vector<4x8xf32> -> vector<36x8xf32>
    %c0_179 = arith.constant 0 : index
    %c0_180 = arith.constant 0 : index
    %456 = vector.load %arg11[%c0_179, %c0_180] : memref<36x8xf32, #tpu.memory_space<vmem>>, vector<36x8xf32>
    %457 = arith.maximumf %456, %455 : vector<36x8xf32>
    %c0_181 = arith.constant 0 : index
    %c0_182 = arith.constant 0 : index
    %458 = vector.load %arg11[%c0_181, %c0_182] : memref<36x8xf32, #tpu.memory_space<vmem>>, vector<36x8xf32>
    tpu.vector_store %arg11[%c0_181, %c0_182], %457 {strides = array<i32>} : memref<36x8xf32, #tpu.memory_space<vmem>>, vector<36x8xf32>,
    %c1_i32 = arith.constant 1 : i32
    %459 = arith.cmpi eq, %arg1, %c1_i32 : i32
    %460 = arith.extui %459 : i1 to i32
    %c0_i32_183 = arith.constant 0 : i32
    %461 = arith.cmpi ne, %460, %c0_i32_183 : i32
    scf.if %461 {
      %c0_184 = arith.constant 0 : index
      %c0_185 = arith.constant 0 : index
      %462 = vector.load %arg5[%c0_184, %c0_185] : memref<8x8xf32, #tpu.memory_space<vmem>>, vector<8x8xf32>
      %c0_186 = arith.constant 0 : index
      %c0_187 = arith.constant 0 : index
      %463 = vector.load %arg6[%c0_186, %c0_187] : memref<1x8xf32, #tpu.memory_space<vmem>>, vector<1x8xf32>
      %c0_188 = arith.constant 0 : index
      %c0_189 = arith.constant 0 : index
      %464 = vector.load %arg4[%c0_188, %c0_189] : memref<16x12xf32, #tpu.memory_space<vmem>>, vector<16x12xf32>
      %465 = vector.extract_strided_slice %462 {offsets = [0, 0], sizes = [8, 2], strides = [1, 1]} : vector<8x8xf32> to vector<8x2xf32>
      %466 = vector.extract_strided_slice %463 {offsets = [0, 0], sizes = [1, 2], strides = [1, 1]} : vector<1x8xf32> to vector<1x2xf32>
      %467 = vector.extract_strided_slice %464 {offsets = [0, 0], sizes = [16, 1], strides = [1, 1]} : vector<16x12xf32> to vector<16x1xf32>
      %c0_190 = arith.constant 0 : index
      %c0_191 = arith.constant 0 : index
      %468 = vector.load %arg8[%c0_190, %c0_191] : memref<1x8xf32, #tpu.memory_space<vmem>>, vector<1x8xf32>
      %cst_192 = arith.constant dense<0.000000e+00> : vector<1x2xf32>
      %469 = tpu.matmul %468, %465, %cst_192 {dimension_numbers = #tpu.dot_dimension_numbers<[1], [0], [0], [1], [0, 0, 1, 1], [], []>} : vector<1x8xf32>, vector<8x2xf32>, vector<1x2xf32> -> vector<1x2xf32>
      %470 = arith.addf %469, %466 : vector<1x2xf32>
      %cst_193 = arith.constant 0.000000e+00 : f32
      %471 = vector.broadcast %cst_193 : f32 to vector<1x2xf32>
      %472 = arith.maximumf %470, %471 : vector<1x2xf32>
      %473 = vector.broadcast %467 : vector<16x1xf32> to vector<16x2xf32>
      %474 = vector.broadcast %472 : vector<1x2xf32> to vector<16x2xf32>
      %475 = arith.mulf %473, %474 : vector<16x2xf32>
      %c0_194 = arith.constant 0 : index
      %c0_195 = arith.constant 0 : index
      %c0_196 = arith.constant 0 : index
      %c0_197 = arith.constant 0 : index
      %476 = vector.load %arg7[%c0_194, %c0_195, %c0_196, %c0_197] : memref<1x12x16x2xf32, #tpu.memory_space<vmem>>, vector<1x1x16x2xf32>
      %477 = vector.shape_cast %476 : vector<1x1x16x2xf32> to vector<16x2xf32>
      %478 = vector.shape_cast %475 : vector<16x2xf32> to vector<1x1x16x2xf32>
      tpu.vector_store %arg7[%c0_194, %c0_195, %c0_196, %c0_197], %478 {strides = array<i32>} : memref<1x12x16x2xf32, #tpu.memory_space<vmem>>, vector<1x1x16x2xf32>,
      %479 = vector.extract_strided_slice %462 {offsets = [0, 2], sizes = [8, 2], strides = [1, 1]} : vector<8x8xf32> to vector<8x2xf32>
      %480 = vector.extract_strided_slice %463 {offsets = [0, 2], sizes = [1, 2], strides = [1, 1]} : vector<1x8xf32> to vector<1x2xf32>
      %481 = vector.extract_strided_slice %464 {offsets = [0, 1], sizes = [16, 2], strides = [1, 1]} : vector<16x12xf32> to vector<16x2xf32>
      %c0_198 = arith.constant 0 : index
      %c0_199 = arith.constant 0 : index
      %482 = vector.load %arg9[%c0_198, %c0_199] : memref<4x8xf32, #tpu.memory_space<vmem>>, vector<2x8xf32>
      %cst_200 = arith.constant dense<0.000000e+00> : vector<2x2xf32>
      %483 = tpu.matmul %482, %479, %cst_200 {dimension_numbers = #tpu.dot_dimension_numbers<[1], [0], [0], [1], [0, 0, 1, 1], [], []>} : vector<2x8xf32>, vector<8x2xf32>, vector<2x2xf32> -> vector<2x2xf32>
      %484 = vector.broadcast %480 : vector<1x2xf32> to vector<2x2xf32>
      %485 = arith.addf %483, %484 : vector<2x2xf32>
      %cst_201 = arith.constant 0.000000e+00 : f32
      %486 = vector.broadcast %cst_201 : f32 to vector<2x2xf32>
      %487 = arith.maximumf %485, %486 : vector<2x2xf32>
      %488 = vector.extract_strided_slice %481 {offsets = [0, 0], sizes = [16, 1], strides = [1, 1]} : vector<16x2xf32> to vector<16x1xf32>
      %489 = vector.extract_strided_slice %487 {offsets = [0, 0], sizes = [1, 2], strides = [1, 1]} : vector<2x2xf32> to vector<1x2xf32>
      %490 = vector.broadcast %488 : vector<16x1xf32> to vector<16x2xf32>
      %491 = vector.broadcast %489 : vector<1x2xf32> to vector<16x2xf32>
      %492 = arith.mulf %490, %491 : vector<16x2xf32>
      %493 = vector.extract_strided_slice %481 {offsets = [0, 1], sizes = [16, 1], strides = [1, 1]} : vector<16x2xf32> to vector<16x1xf32>
      %494 = vector.extract_strided_slice %487 {offsets = [1, 0], sizes = [1, 2], strides = [1, 1]} : vector<2x2xf32> to vector<1x2xf32>
      %495 = vector.broadcast %493 : vector<16x1xf32> to vector<16x2xf32>
      %496 = vector.broadcast %494 : vector<1x2xf32> to vector<16x2xf32>
      %497 = arith.mulf %495, %496 : vector<16x2xf32>
      %498 = arith.addf %492, %497 : vector<16x2xf32>
      %c0_202 = arith.constant 0 : index
      %c1 = arith.constant 1 : index
      %c0_203 = arith.constant 0 : index
      %c0_204 = arith.constant 0 : index
      %499 = vector.load %arg7[%c0_202, %c1, %c0_203, %c0_204] : memref<1x12x16x2xf32, #tpu.memory_space<vmem>>, vector<1x1x16x2xf32>
      %500 = vector.shape_cast %499 : vector<1x1x16x2xf32> to vector<16x2xf32>
      %501 = vector.shape_cast %498 : vector<16x2xf32> to vector<1x1x16x2xf32>
      tpu.vector_store %arg7[%c0_202, %c1, %c0_203, %c0_204], %501 {strides = array<i32>} : memref<1x12x16x2xf32, #tpu.memory_space<vmem>>, vector<1x1x16x2xf32>,
      %c2 = arith.constant 2 : index
      %c0_205 = arith.constant 0 : index
      %502 = vector.load %arg9[%c2, %c0_205] : memref<4x8xf32, #tpu.memory_space<vmem>>, vector<2x8xf32>
      %cst_206 = arith.constant dense<0.000000e+00> : vector<2x2xf32>
      %503 = tpu.matmul %502, %479, %cst_206 {dimension_numbers = #tpu.dot_dimension_numbers<[1], [0], [0], [1], [0, 0, 1, 1], [], []>} : vector<2x8xf32>, vector<8x2xf32>, vector<2x2xf32> -> vector<2x2xf32>
      %504 = vector.broadcast %480 : vector<1x2xf32> to vector<2x2xf32>
      %505 = arith.addf %503, %504 : vector<2x2xf32>
      %cst_207 = arith.constant 0.000000e+00 : f32
      %506 = vector.broadcast %cst_207 : f32 to vector<2x2xf32>
      %507 = arith.maximumf %505, %506 : vector<2x2xf32>
      %508 = vector.extract_strided_slice %481 {offsets = [0, 0], sizes = [16, 1], strides = [1, 1]} : vector<16x2xf32> to vector<16x1xf32>
      %509 = vector.extract_strided_slice %507 {offsets = [0, 0], sizes = [1, 2], strides = [1, 1]} : vector<2x2xf32> to vector<1x2xf32>
      %510 = vector.broadcast %508 : vector<16x1xf32> to vector<16x2xf32>
      %511 = vector.broadcast %509 : vector<1x2xf32> to vector<16x2xf32>
      %512 = arith.mulf %510, %511 : vector<16x2xf32>
      %513 = vector.extract_strided_slice %481 {offsets = [0, 1], sizes = [16, 1], strides = [1, 1]} : vector<16x2xf32> to vector<16x1xf32>
      %514 = vector.extract_strided_slice %507 {offsets = [1, 0], sizes = [1, 2], strides = [1, 1]} : vector<2x2xf32> to vector<1x2xf32>
      %515 = vector.broadcast %513 : vector<16x1xf32> to vector<16x2xf32>
      %516 = vector.broadcast %514 : vector<1x2xf32> to vector<16x2xf32>
      %517 = arith.mulf %515, %516 : vector<16x2xf32>
      %518 = arith.addf %512, %517 : vector<16x2xf32>
      %c0_208 = arith.constant 0 : index
      %c2_209 = arith.constant 2 : index
      %c0_210 = arith.constant 0 : index
      %c0_211 = arith.constant 0 : index
      %519 = vector.load %arg7[%c0_208, %c2_209, %c0_210, %c0_211] : memref<1x12x16x2xf32, #tpu.memory_space<vmem>>, vector<1x1x16x2xf32>
      %520 = vector.shape_cast %519 : vector<1x1x16x2xf32> to vector<16x2xf32>
      %521 = vector.shape_cast %518 : vector<16x2xf32> to vector<1x1x16x2xf32>
      tpu.vector_store %arg7[%c0_208, %c2_209, %c0_210, %c0_211], %521 {strides = array<i32>} : memref<1x12x16x2xf32, #tpu.memory_space<vmem>>, vector<1x1x16x2xf32>,
      %522 = vector.extract_strided_slice %462 {offsets = [0, 4], sizes = [8, 2], strides = [1, 1]} : vector<8x8xf32> to vector<8x2xf32>
      %523 = vector.extract_strided_slice %463 {offsets = [0, 4], sizes = [1, 2], strides = [1, 1]} : vector<1x8xf32> to vector<1x2xf32>
      %524 = vector.extract_strided_slice %464 {offsets = [0, 3], sizes = [16, 3], strides = [1, 1]} : vector<16x12xf32> to vector<16x3xf32>
      %c0_212 = arith.constant 0 : index
      %c0_213 = arith.constant 0 : index
      %525 = vector.load %arg10[%c0_212, %c0_213] : memref<9x8xf32, #tpu.memory_space<vmem>>, vector<3x8xf32>
      %cst_214 = arith.constant dense<0.000000e+00> : vector<3x2xf32>
      %526 = tpu.matmul %525, %522, %cst_214 {dimension_numbers = #tpu.dot_dimension_numbers<[1], [0], [0], [1], [0, 0, 1, 1], [], []>} : vector<3x8xf32>, vector<8x2xf32>, vector<3x2xf32> -> vector<3x2xf32>
      %527 = vector.broadcast %523 : vector<1x2xf32> to vector<3x2xf32>
      %528 = arith.addf %526, %527 : vector<3x2xf32>
      %cst_215 = arith.constant 0.000000e+00 : f32
      %529 = vector.broadcast %cst_215 : f32 to vector<3x2xf32>
      %530 = arith.maximumf %528, %529 : vector<3x2xf32>
      %531 = vector.extract_strided_slice %524 {offsets = [0, 0], sizes = [16, 1], strides = [1, 1]} : vector<16x3xf32> to vector<16x1xf32>
      %532 = vector.extract_strided_slice %530 {offsets = [0, 0], sizes = [1, 2], strides = [1, 1]} : vector<3x2xf32> to vector<1x2xf32>
      %533 = vector.broadcast %531 : vector<16x1xf32> to vector<16x2xf32>
      %534 = vector.broadcast %532 : vector<1x2xf32> to vector<16x2xf32>
      %535 = arith.mulf %533, %534 : vector<16x2xf32>
      %536 = vector.extract_strided_slice %524 {offsets = [0, 1], sizes = [16, 1], strides = [1, 1]} : vector<16x3xf32> to vector<16x1xf32>
      %537 = vector.extract_strided_slice %530 {offsets = [1, 0], sizes = [1, 2], strides = [1, 1]} : vector<3x2xf32> to vector<1x2xf32>
      %538 = vector.broadcast %536 : vector<16x1xf32> to vector<16x2xf32>
      %539 = vector.broadcast %537 : vector<1x2xf32> to vector<16x2xf32>
      %540 = arith.mulf %538, %539 : vector<16x2xf32>
      %541 = arith.addf %535, %540 : vector<16x2xf32>
      %542 = vector.extract_strided_slice %524 {offsets = [0, 2], sizes = [16, 1], strides = [1, 1]} : vector<16x3xf32> to vector<16x1xf32>
      %543 = vector.extract_strided_slice %530 {offsets = [2, 0], sizes = [1, 2], strides = [1, 1]} : vector<3x2xf32> to vector<1x2xf32>
      %544 = vector.broadcast %542 : vector<16x1xf32> to vector<16x2xf32>
      %545 = vector.broadcast %543 : vector<1x2xf32> to vector<16x2xf32>
      %546 = arith.mulf %544, %545 : vector<16x2xf32>
      %547 = arith.addf %541, %546 : vector<16x2xf32>
      %c0_216 = arith.constant 0 : index
      %c3 = arith.constant 3 : index
      %c0_217 = arith.constant 0 : index
      %c0_218 = arith.constant 0 : index
      %548 = vector.load %arg7[%c0_216, %c3, %c0_217, %c0_218] : memref<1x12x16x2xf32, #tpu.memory_space<vmem>>, vector<1x1x16x2xf32>
      %549 = vector.shape_cast %548 : vector<1x1x16x2xf32> to vector<16x2xf32>
      %550 = vector.shape_cast %547 : vector<16x2xf32> to vector<1x1x16x2xf32>
      tpu.vector_store %arg7[%c0_216, %c3, %c0_217, %c0_218], %550 {strides = array<i32>} : memref<1x12x16x2xf32, #tpu.memory_space<vmem>>, vector<1x1x16x2xf32>,
      %c3_219 = arith.constant 3 : index
      %c0_220 = arith.constant 0 : index
      %551 = vector.load %arg10[%c3_219, %c0_220] : memref<9x8xf32, #tpu.memory_space<vmem>>, vector<3x8xf32>
      %cst_221 = arith.constant dense<0.000000e+00> : vector<3x2xf32>
      %552 = tpu.matmul %551, %522, %cst_221 {dimension_numbers = #tpu.dot_dimension_numbers<[1], [0], [0], [1], [0, 0, 1, 1], [], []>} : vector<3x8xf32>, vector<8x2xf32>, vector<3x2xf32> -> vector<3x2xf32>
      %553 = vector.broadcast %523 : vector<1x2xf32> to vector<3x2xf32>
      %554 = arith.addf %552, %553 : vector<3x2xf32>
      %cst_222 = arith.constant 0.000000e+00 : f32
      %555 = vector.broadcast %cst_222 : f32 to vector<3x2xf32>
      %556 = arith.maximumf %554, %555 : vector<3x2xf32>
      %557 = vector.extract_strided_slice %524 {offsets = [0, 0], sizes = [16, 1], strides = [1, 1]} : vector<16x3xf32> to vector<16x1xf32>
      %558 = vector.extract_strided_slice %556 {offsets = [0, 0], sizes = [1, 2], strides = [1, 1]} : vector<3x2xf32> to vector<1x2xf32>
      %559 = vector.broadcast %557 : vector<16x1xf32> to vector<16x2xf32>
      %560 = vector.broadcast %558 : vector<1x2xf32> to vector<16x2xf32>
      %561 = arith.mulf %559, %560 : vector<16x2xf32>
      %562 = vector.extract_strided_slice %524 {offsets = [0, 1], sizes = [16, 1], strides = [1, 1]} : vector<16x3xf32> to vector<16x1xf32>
      %563 = vector.extract_strided_slice %556 {offsets = [1, 0], sizes = [1, 2], strides = [1, 1]} : vector<3x2xf32> to vector<1x2xf32>
      %564 = vector.broadcast %562 : vector<16x1xf32> to vector<16x2xf32>
      %565 = vector.broadcast %563 : vector<1x2xf32> to vector<16x2xf32>
      %566 = arith.mulf %564, %565 : vector<16x2xf32>
      %567 = arith.addf %561, %566 : vector<16x2xf32>
      %568 = vector.extract_strided_slice %524 {offsets = [0, 2], sizes = [16, 1], strides = [1, 1]} : vector<16x3xf32> to vector<16x1xf32>
      %569 = vector.extract_strided_slice %556 {offsets = [2, 0], sizes = [1, 2], strides = [1, 1]} : vector<3x2xf32> to vector<1x2xf32>
      %570 = vector.broadcast %568 : vector<16x1xf32> to vector<16x2xf32>
      %571 = vector.broadcast %569 : vector<1x2xf32> to vector<16x2xf32>
      %572 = arith.mulf %570, %571 : vector<16x2xf32>
      %573 = arith.addf %567, %572 : vector<16x2xf32>
      %c0_223 = arith.constant 0 : index
      %c4 = arith.constant 4 : index
      %c0_224 = arith.constant 0 : index
      %c0_225 = arith.constant 0 : index
      %574 = vector.load %arg7[%c0_223, %c4, %c0_224, %c0_225] : memref<1x12x16x2xf32, #tpu.memory_space<vmem>>, vector<1x1x16x2xf32>
      %575 = vector.shape_cast %574 : vector<1x1x16x2xf32> to vector<16x2xf32>
      %576 = vector.shape_cast %573 : vector<16x2xf32> to vector<1x1x16x2xf32>
      tpu.vector_store %arg7[%c0_223, %c4, %c0_224, %c0_225], %576 {strides = array<i32>} : memref<1x12x16x2xf32, #tpu.memory_space<vmem>>, vector<1x1x16x2xf32>,
      %c6 = arith.constant 6 : index
      %c0_226 = arith.constant 0 : index
      %577 = vector.load %arg10[%c6, %c0_226] : memref<9x8xf32, #tpu.memory_space<vmem>>, vector<3x8xf32>
      %cst_227 = arith.constant dense<0.000000e+00> : vector<3x2xf32>
      %578 = tpu.matmul %577, %522, %cst_227 {dimension_numbers = #tpu.dot_dimension_numbers<[1], [0], [0], [1], [0, 0, 1, 1], [], []>} : vector<3x8xf32>, vector<8x2xf32>, vector<3x2xf32> -> vector<3x2xf32>
      %579 = vector.broadcast %523 : vector<1x2xf32> to vector<3x2xf32>
      %580 = arith.addf %578, %579 : vector<3x2xf32>
      %cst_228 = arith.constant 0.000000e+00 : f32
      %581 = vector.broadcast %cst_228 : f32 to vector<3x2xf32>
      %582 = arith.maximumf %580, %581 : vector<3x2xf32>
      %583 = vector.extract_strided_slice %524 {offsets = [0, 0], sizes = [16, 1], strides = [1, 1]} : vector<16x3xf32> to vector<16x1xf32>
      %584 = vector.extract_strided_slice %582 {offsets = [0, 0], sizes = [1, 2], strides = [1, 1]} : vector<3x2xf32> to vector<1x2xf32>
      %585 = vector.broadcast %583 : vector<16x1xf32> to vector<16x2xf32>
      %586 = vector.broadcast %584 : vector<1x2xf32> to vector<16x2xf32>
      %587 = arith.mulf %585, %586 : vector<16x2xf32>
      %588 = vector.extract_strided_slice %524 {offsets = [0, 1], sizes = [16, 1], strides = [1, 1]} : vector<16x3xf32> to vector<16x1xf32>
      %589 = vector.extract_strided_slice %582 {offsets = [1, 0], sizes = [1, 2], strides = [1, 1]} : vector<3x2xf32> to vector<1x2xf32>
      %590 = vector.broadcast %588 : vector<16x1xf32> to vector<16x2xf32>
      %591 = vector.broadcast %589 : vector<1x2xf32> to vector<16x2xf32>
      %592 = arith.mulf %590, %591 : vector<16x2xf32>
      %593 = arith.addf %587, %592 : vector<16x2xf32>
      %594 = vector.extract_strided_slice %524 {offsets = [0, 2], sizes = [16, 1], strides = [1, 1]} : vector<16x3xf32> to vector<16x1xf32>
      %595 = vector.extract_strided_slice %582 {offsets = [2, 0], sizes = [1, 2], strides = [1, 1]} : vector<3x2xf32> to vector<1x2xf32>
      %596 = vector.broadcast %594 : vector<16x1xf32> to vector<16x2xf32>
      %597 = vector.broadcast %595 : vector<1x2xf32> to vector<16x2xf32>
      %598 = arith.mulf %596, %597 : vector<16x2xf32>
      %599 = arith.addf %593, %598 : vector<16x2xf32>
      %c0_229 = arith.constant 0 : index
      %c5 = arith.constant 5 : index
      %c0_230 = arith.constant 0 : index
      %c0_231 = arith.constant 0 : index
      %600 = vector.load %arg7[%c0_229, %c5, %c0_230, %c0_231] : memref<1x12x16x2xf32, #tpu.memory_space<vmem>>, vector<1x1x16x2xf32>
      %601 = vector.shape_cast %600 : vector<1x1x16x2xf32> to vector<16x2xf32>
      %602 = vector.shape_cast %599 : vector<16x2xf32> to vector<1x1x16x2xf32>
      tpu.vector_store %arg7[%c0_229, %c5, %c0_230, %c0_231], %602 {strides = array<i32>} : memref<1x12x16x2xf32, #tpu.memory_space<vmem>>, vector<1x1x16x2xf32>,
      %603 = vector.extract_strided_slice %462 {offsets = [0, 6], sizes = [8, 2], strides = [1, 1]} : vector<8x8xf32> to vector<8x2xf32>
      %604 = vector.extract_strided_slice %463 {offsets = [0, 6], sizes = [1, 2], strides = [1, 1]} : vector<1x8xf32> to vector<1x2xf32>
      %605 = vector.extract_strided_slice %464 {offsets = [0, 6], sizes = [16, 6], strides = [1, 1]} : vector<16x12xf32> to vector<16x6xf32>
      %c0_232 = arith.constant 0 : index
      %c0_233 = arith.constant 0 : index
      %606 = vector.load %arg11[%c0_232, %c0_233] : memref<36x8xf32, #tpu.memory_space<vmem>>, vector<6x8xf32>
      %cst_234 = arith.constant dense<0.000000e+00> : vector<6x2xf32>
      %607 = tpu.matmul %606, %603, %cst_234 {dimension_numbers = #tpu.dot_dimension_numbers<[1], [0], [0], [1], [0, 0, 1, 1], [], []>} : vector<6x8xf32>, vector<8x2xf32>, vector<6x2xf32> -> vector<6x2xf32>
      %608 = vector.broadcast %604 : vector<1x2xf32> to vector<6x2xf32>
      %609 = arith.addf %607, %608 : vector<6x2xf32>
      %cst_235 = arith.constant 0.000000e+00 : f32
      %610 = vector.broadcast %cst_235 : f32 to vector<6x2xf32>
      %611 = arith.maximumf %609, %610 : vector<6x2xf32>
      %612 = vector.extract_strided_slice %605 {offsets = [0, 0], sizes = [16, 1], strides = [1, 1]} : vector<16x6xf32> to vector<16x1xf32>
      %613 = vector.extract_strided_slice %611 {offsets = [0, 0], sizes = [1, 2], strides = [1, 1]} : vector<6x2xf32> to vector<1x2xf32>
      %614 = vector.broadcast %612 : vector<16x1xf32> to vector<16x2xf32>
      %615 = vector.broadcast %613 : vector<1x2xf32> to vector<16x2xf32>
      %616 = arith.mulf %614, %615 : vector<16x2xf32>
      %617 = vector.extract_strided_slice %605 {offsets = [0, 1], sizes = [16, 1], strides = [1, 1]} : vector<16x6xf32> to vector<16x1xf32>
      %618 = vector.extract_strided_slice %611 {offsets = [1, 0], sizes = [1, 2], strides = [1, 1]} : vector<6x2xf32> to vector<1x2xf32>
      %619 = vector.broadcast %617 : vector<16x1xf32> to vector<16x2xf32>
      %620 = vector.broadcast %618 : vector<1x2xf32> to vector<16x2xf32>
      %621 = arith.mulf %619, %620 : vector<16x2xf32>
      %622 = arith.addf %616, %621 : vector<16x2xf32>
      %623 = vector.extract_strided_slice %605 {offsets = [0, 2], sizes = [16, 1], strides = [1, 1]} : vector<16x6xf32> to vector<16x1xf32>
      %624 = vector.extract_strided_slice %611 {offsets = [2, 0], sizes = [1, 2], strides = [1, 1]} : vector<6x2xf32> to vector<1x2xf32>
      %625 = vector.broadcast %623 : vector<16x1xf32> to vector<16x2xf32>
      %626 = vector.broadcast %624 : vector<1x2xf32> to vector<16x2xf32>
      %627 = arith.mulf %625, %626 : vector<16x2xf32>
      %628 = arith.addf %622, %627 : vector<16x2xf32>
      %629 = vector.extract_strided_slice %605 {offsets = [0, 3], sizes = [16, 1], strides = [1, 1]} : vector<16x6xf32> to vector<16x1xf32>
      %630 = vector.extract_strided_slice %611 {offsets = [3, 0], sizes = [1, 2], strides = [1, 1]} : vector<6x2xf32> to vector<1x2xf32>
      %631 = vector.broadcast %629 : vector<16x1xf32> to vector<16x2xf32>
      %632 = vector.broadcast %630 : vector<1x2xf32> to vector<16x2xf32>
      %633 = arith.mulf %631, %632 : vector<16x2xf32>
      %634 = arith.addf %628, %633 : vector<16x2xf32>
      %635 = vector.extract_strided_slice %605 {offsets = [0, 4], sizes = [16, 1], strides = [1, 1]} : vector<16x6xf32> to vector<16x1xf32>
      %636 = vector.extract_strided_slice %611 {offsets = [4, 0], sizes = [1, 2], strides = [1, 1]} : vector<6x2xf32> to vector<1x2xf32>
      %637 = vector.broadcast %635 : vector<16x1xf32> to vector<16x2xf32>
      %638 = vector.broadcast %636 : vector<1x2xf32> to vector<16x2xf32>
      %639 = arith.mulf %637, %638 : vector<16x2xf32>
      %640 = arith.addf %634, %639 : vector<16x2xf32>
      %641 = vector.extract_strided_slice %605 {offsets = [0, 5], sizes = [16, 1], strides = [1, 1]} : vector<16x6xf32> to vector<16x1xf32>
      %642 = vector.extract_strided_slice %611 {offsets = [5, 0], sizes = [1, 2], strides = [1, 1]} : vector<6x2xf32> to vector<1x2xf32>
      %643 = vector.broadcast %641 : vector<16x1xf32> to vector<16x2xf32>
      %644 = vector.broadcast %642 : vector<1x2xf32> to vector<16x2xf32>
      %645 = arith.mulf %643, %644 : vector<16x2xf32>
      %646 = arith.addf %640, %645 : vector<16x2xf32>
      %c0_236 = arith.constant 0 : index
      %c6_237 = arith.constant 6 : index
      %c0_238 = arith.constant 0 : index
      %c0_239 = arith.constant 0 : index
      %647 = vector.load %arg7[%c0_236, %c6_237, %c0_238, %c0_239] : memref<1x12x16x2xf32, #tpu.memory_space<vmem>>, vector<1x1x16x2xf32>
      %648 = vector.shape_cast %647 : vector<1x1x16x2xf32> to vector<16x2xf32>
      %649 = vector.shape_cast %646 : vector<16x2xf32> to vector<1x1x16x2xf32>
      tpu.vector_store %arg7[%c0_236, %c6_237, %c0_238, %c0_239], %649 {strides = array<i32>} : memref<1x12x16x2xf32, #tpu.memory_space<vmem>>, vector<1x1x16x2xf32>,
      %c6_240 = arith.constant 6 : index
      %c0_241 = arith.constant 0 : index
      %650 = vector.load %arg11[%c6_240, %c0_241] : memref<36x8xf32, #tpu.memory_space<vmem>>, vector<6x8xf32>
      %cst_242 = arith.constant dense<0.000000e+00> : vector<6x2xf32>
      %651 = tpu.matmul %650, %603, %cst_242 {dimension_numbers = #tpu.dot_dimension_numbers<[1], [0], [0], [1], [0, 0, 1, 1], [], []>} : vector<6x8xf32>, vector<8x2xf32>, vector<6x2xf32> -> vector<6x2xf32>
      %652 = vector.broadcast %604 : vector<1x2xf32> to vector<6x2xf32>
      %653 = arith.addf %651, %652 : vector<6x2xf32>
      %cst_243 = arith.constant 0.000000e+00 : f32
      %654 = vector.broadcast %cst_243 : f32 to vector<6x2xf32>
      %655 = arith.maximumf %653, %654 : vector<6x2xf32>
      %656 = vector.extract_strided_slice %605 {offsets = [0, 0], sizes = [16, 1], strides = [1, 1]} : vector<16x6xf32> to vector<16x1xf32>
      %657 = vector.extract_strided_slice %655 {offsets = [0, 0], sizes = [1, 2], strides = [1, 1]} : vector<6x2xf32> to vector<1x2xf32>
      %658 = vector.broadcast %656 : vector<16x1xf32> to vector<16x2xf32>
      %659 = vector.broadcast %657 : vector<1x2xf32> to vector<16x2xf32>
      %660 = arith.mulf %658, %659 : vector<16x2xf32>
      %661 = vector.extract_strided_slice %605 {offsets = [0, 1], sizes = [16, 1], strides = [1, 1]} : vector<16x6xf32> to vector<16x1xf32>
      %662 = vector.extract_strided_slice %655 {offsets = [1, 0], sizes = [1, 2], strides = [1, 1]} : vector<6x2xf32> to vector<1x2xf32>
      %663 = vector.broadcast %661 : vector<16x1xf32> to vector<16x2xf32>
      %664 = vector.broadcast %662 : vector<1x2xf32> to vector<16x2xf32>
      %665 = arith.mulf %663, %664 : vector<16x2xf32>
      %666 = arith.addf %660, %665 : vector<16x2xf32>
      %667 = vector.extract_strided_slice %605 {offsets = [0, 2], sizes = [16, 1], strides = [1, 1]} : vector<16x6xf32> to vector<16x1xf32>
      %668 = vector.extract_strided_slice %655 {offsets = [2, 0], sizes = [1, 2], strides = [1, 1]} : vector<6x2xf32> to vector<1x2xf32>
      %669 = vector.broadcast %667 : vector<16x1xf32> to vector<16x2xf32>
      %670 = vector.broadcast %668 : vector<1x2xf32> to vector<16x2xf32>
      %671 = arith.mulf %669, %670 : vector<16x2xf32>
      %672 = arith.addf %666, %671 : vector<16x2xf32>
      %673 = vector.extract_strided_slice %605 {offsets = [0, 3], sizes = [16, 1], strides = [1, 1]} : vector<16x6xf32> to vector<16x1xf32>
      %674 = vector.extract_strided_slice %655 {offsets = [3, 0], sizes = [1, 2], strides = [1, 1]} : vector<6x2xf32> to vector<1x2xf32>
      %675 = vector.broadcast %673 : vector<16x1xf32> to vector<16x2xf32>
      %676 = vector.broadcast %674 : vector<1x2xf32> to vector<16x2xf32>
      %677 = arith.mulf %675, %676 : vector<16x2xf32>
      %678 = arith.addf %672, %677 : vector<16x2xf32>
      %679 = vector.extract_strided_slice %605 {offsets = [0, 4], sizes = [16, 1], strides = [1, 1]} : vector<16x6xf32> to vector<16x1xf32>
      %680 = vector.extract_strided_slice %655 {offsets = [4, 0], sizes = [1, 2], strides = [1, 1]} : vector<6x2xf32> to vector<1x2xf32>
      %681 = vector.broadcast %679 : vector<16x1xf32> to vector<16x2xf32>
      %682 = vector.broadcast %680 : vector<1x2xf32> to vector<16x2xf32>
      %683 = arith.mulf %681, %682 : vector<16x2xf32>
      %684 = arith.addf %678, %683 : vector<16x2xf32>
      %685 = vector.extract_strided_slice %605 {offsets = [0, 5], sizes = [16, 1], strides = [1, 1]} : vector<16x6xf32> to vector<16x1xf32>
      %686 = vector.extract_strided_slice %655 {offsets = [5, 0], sizes = [1, 2], strides = [1, 1]} : vector<6x2xf32> to vector<1x2xf32>
      %687 = vector.broadcast %685 : vector<16x1xf32> to vector<16x2xf32>
      %688 = vector.broadcast %686 : vector<1x2xf32> to vector<16x2xf32>
      %689 = arith.mulf %687, %688 : vector<16x2xf32>
      %690 = arith.addf %684, %689 : vector<16x2xf32>
      %c0_244 = arith.constant 0 : index
      %c7 = arith.constant 7 : index
      %c0_245 = arith.constant 0 : index
      %c0_246 = arith.constant 0 : index
      %691 = vector.load %arg7[%c0_244, %c7, %c0_245, %c0_246] : memref<1x12x16x2xf32, #tpu.memory_space<vmem>>, vector<1x1x16x2xf32>
      %692 = vector.shape_cast %691 : vector<1x1x16x2xf32> to vector<16x2xf32>
      %693 = vector.shape_cast %690 : vector<16x2xf32> to vector<1x1x16x2xf32>
      tpu.vector_store %arg7[%c0_244, %c7, %c0_245, %c0_246], %693 {strides = array<i32>} : memref<1x12x16x2xf32, #tpu.memory_space<vmem>>, vector<1x1x16x2xf32>,
      %c12 = arith.constant 12 : index
      %c0_247 = arith.constant 0 : index
      %694 = vector.load %arg11[%c12, %c0_247] : memref<36x8xf32, #tpu.memory_space<vmem>>, vector<6x8xf32>
      %cst_248 = arith.constant dense<0.000000e+00> : vector<6x2xf32>
      %695 = tpu.matmul %694, %603, %cst_248 {dimension_numbers = #tpu.dot_dimension_numbers<[1], [0], [0], [1], [0, 0, 1, 1], [], []>} : vector<6x8xf32>, vector<8x2xf32>, vector<6x2xf32> -> vector<6x2xf32>
      %696 = vector.broadcast %604 : vector<1x2xf32> to vector<6x2xf32>
      %697 = arith.addf %695, %696 : vector<6x2xf32>
      %cst_249 = arith.constant 0.000000e+00 : f32
      %698 = vector.broadcast %cst_249 : f32 to vector<6x2xf32>
      %699 = arith.maximumf %697, %698 : vector<6x2xf32>
      %700 = vector.extract_strided_slice %605 {offsets = [0, 0], sizes = [16, 1], strides = [1, 1]} : vector<16x6xf32> to vector<16x1xf32>
      %701 = vector.extract_strided_slice %699 {offsets = [0, 0], sizes = [1, 2], strides = [1, 1]} : vector<6x2xf32> to vector<1x2xf32>
      %702 = vector.broadcast %700 : vector<16x1xf32> to vector<16x2xf32>
      %703 = vector.broadcast %701 : vector<1x2xf32> to vector<16x2xf32>
      %704 = arith.mulf %702, %703 : vector<16x2xf32>
      %705 = vector.extract_strided_slice %605 {offsets = [0, 1], sizes = [16, 1], strides = [1, 1]} : vector<16x6xf32> to vector<16x1xf32>
      %706 = vector.extract_strided_slice %699 {offsets = [1, 0], sizes = [1, 2], strides = [1, 1]} : vector<6x2xf32> to vector<1x2xf32>
      %707 = vector.broadcast %705 : vector<16x1xf32> to vector<16x2xf32>
      %708 = vector.broadcast %706 : vector<1x2xf32> to vector<16x2xf32>
      %709 = arith.mulf %707, %708 : vector<16x2xf32>
      %710 = arith.addf %704, %709 : vector<16x2xf32>
      %711 = vector.extract_strided_slice %605 {offsets = [0, 2], sizes = [16, 1], strides = [1, 1]} : vector<16x6xf32> to vector<16x1xf32>
      %712 = vector.extract_strided_slice %699 {offsets = [2, 0], sizes = [1, 2], strides = [1, 1]} : vector<6x2xf32> to vector<1x2xf32>
      %713 = vector.broadcast %711 : vector<16x1xf32> to vector<16x2xf32>
      %714 = vector.broadcast %712 : vector<1x2xf32> to vector<16x2xf32>
      %715 = arith.mulf %713, %714 : vector<16x2xf32>
      %716 = arith.addf %710, %715 : vector<16x2xf32>
      %717 = vector.extract_strided_slice %605 {offsets = [0, 3], sizes = [16, 1], strides = [1, 1]} : vector<16x6xf32> to vector<16x1xf32>
      %718 = vector.extract_strided_slice %699 {offsets = [3, 0], sizes = [1, 2], strides = [1, 1]} : vector<6x2xf32> to vector<1x2xf32>
      %719 = vector.broadcast %717 : vector<16x1xf32> to vector<16x2xf32>
      %720 = vector.broadcast %718 : vector<1x2xf32> to vector<16x2xf32>
      %721 = arith.mulf %719, %720 : vector<16x2xf32>
      %722 = arith.addf %716, %721 : vector<16x2xf32>
      %723 = vector.extract_strided_slice %605 {offsets = [0, 4], sizes = [16, 1], strides = [1, 1]} : vector<16x6xf32> to vector<16x1xf32>
      %724 = vector.extract_strided_slice %699 {offsets = [4, 0], sizes = [1, 2], strides = [1, 1]} : vector<6x2xf32> to vector<1x2xf32>
      %725 = vector.broadcast %723 : vector<16x1xf32> to vector<16x2xf32>
      %726 = vector.broadcast %724 : vector<1x2xf32> to vector<16x2xf32>
      %727 = arith.mulf %725, %726 : vector<16x2xf32>
      %728 = arith.addf %722, %727 : vector<16x2xf32>
      %729 = vector.extract_strided_slice %605 {offsets = [0, 5], sizes = [16, 1], strides = [1, 1]} : vector<16x6xf32> to vector<16x1xf32>
      %730 = vector.extract_strided_slice %699 {offsets = [5, 0], sizes = [1, 2], strides = [1, 1]} : vector<6x2xf32> to vector<1x2xf32>
      %731 = vector.broadcast %729 : vector<16x1xf32> to vector<16x2xf32>
      %732 = vector.broadcast %730 : vector<1x2xf32> to vector<16x2xf32>
      %733 = arith.mulf %731, %732 : vector<16x2xf32>
      %734 = arith.addf %728, %733 : vector<16x2xf32>
      %c0_250 = arith.constant 0 : index
      %c8 = arith.constant 8 : index
      %c0_251 = arith.constant 0 : index
      %c0_252 = arith.constant 0 : index
      %735 = vector.load %arg7[%c0_250, %c8, %c0_251, %c0_252] : memref<1x12x16x2xf32, #tpu.memory_space<vmem>>, vector<1x1x16x2xf32>
      %736 = vector.shape_cast %735 : vector<1x1x16x2xf32> to vector<16x2xf32>
      %737 = vector.shape_cast %734 : vector<16x2xf32> to vector<1x1x16x2xf32>
      tpu.vector_store %arg7[%c0_250, %c8, %c0_251, %c0_252], %737 {strides = array<i32>} : memref<1x12x16x2xf32, #tpu.memory_space<vmem>>, vector<1x1x16x2xf32>,
      %c18 = arith.constant 18 : index
      %c0_253 = arith.constant 0 : index
      %738 = vector.load %arg11[%c18, %c0_253] : memref<36x8xf32, #tpu.memory_space<vmem>>, vector<6x8xf32>
      %cst_254 = arith.constant dense<0.000000e+00> : vector<6x2xf32>
      %739 = tpu.matmul %738, %603, %cst_254 {dimension_numbers = #tpu.dot_dimension_numbers<[1], [0], [0], [1], [0, 0, 1, 1], [], []>} : vector<6x8xf32>, vector<8x2xf32>, vector<6x2xf32> -> vector<6x2xf32>
      %740 = vector.broadcast %604 : vector<1x2xf32> to vector<6x2xf32>
      %741 = arith.addf %739, %740 : vector<6x2xf32>
      %cst_255 = arith.constant 0.000000e+00 : f32
      %742 = vector.broadcast %cst_255 : f32 to vector<6x2xf32>
      %743 = arith.maximumf %741, %742 : vector<6x2xf32>
      %744 = vector.extract_strided_slice %605 {offsets = [0, 0], sizes = [16, 1], strides = [1, 1]} : vector<16x6xf32> to vector<16x1xf32>
      %745 = vector.extract_strided_slice %743 {offsets = [0, 0], sizes = [1, 2], strides = [1, 1]} : vector<6x2xf32> to vector<1x2xf32>
      %746 = vector.broadcast %744 : vector<16x1xf32> to vector<16x2xf32>
      %747 = vector.broadcast %745 : vector<1x2xf32> to vector<16x2xf32>
      %748 = arith.mulf %746, %747 : vector<16x2xf32>
      %749 = vector.extract_strided_slice %605 {offsets = [0, 1], sizes = [16, 1], strides = [1, 1]} : vector<16x6xf32> to vector<16x1xf32>
      %750 = vector.extract_strided_slice %743 {offsets = [1, 0], sizes = [1, 2], strides = [1, 1]} : vector<6x2xf32> to vector<1x2xf32>
      %751 = vector.broadcast %749 : vector<16x1xf32> to vector<16x2xf32>
      %752 = vector.broadcast %750 : vector<1x2xf32> to vector<16x2xf32>
      %753 = arith.mulf %751, %752 : vector<16x2xf32>
      %754 = arith.addf %748, %753 : vector<16x2xf32>
      %755 = vector.extract_strided_slice %605 {offsets = [0, 2], sizes = [16, 1], strides = [1, 1]} : vector<16x6xf32> to vector<16x1xf32>
      %756 = vector.extract_strided_slice %743 {offsets = [2, 0], sizes = [1, 2], strides = [1, 1]} : vector<6x2xf32> to vector<1x2xf32>
      %757 = vector.broadcast %755 : vector<16x1xf32> to vector<16x2xf32>
      %758 = vector.broadcast %756 : vector<1x2xf32> to vector<16x2xf32>
      %759 = arith.mulf %757, %758 : vector<16x2xf32>
      %760 = arith.addf %754, %759 : vector<16x2xf32>
      %761 = vector.extract_strided_slice %605 {offsets = [0, 3], sizes = [16, 1], strides = [1, 1]} : vector<16x6xf32> to vector<16x1xf32>
      %762 = vector.extract_strided_slice %743 {offsets = [3, 0], sizes = [1, 2], strides = [1, 1]} : vector<6x2xf32> to vector<1x2xf32>
      %763 = vector.broadcast %761 : vector<16x1xf32> to vector<16x2xf32>
      %764 = vector.broadcast %762 : vector<1x2xf32> to vector<16x2xf32>
      %765 = arith.mulf %763, %764 : vector<16x2xf32>
      %766 = arith.addf %760, %765 : vector<16x2xf32>
      %767 = vector.extract_strided_slice %605 {offsets = [0, 4], sizes = [16, 1], strides = [1, 1]} : vector<16x6xf32> to vector<16x1xf32>
      %768 = vector.extract_strided_slice %743 {offsets = [4, 0], sizes = [1, 2], strides = [1, 1]} : vector<6x2xf32> to vector<1x2xf32>
      %769 = vector.broadcast %767 : vector<16x1xf32> to vector<16x2xf32>
      %770 = vector.broadcast %768 : vector<1x2xf32> to vector<16x2xf32>
      %771 = arith.mulf %769, %770 : vector<16x2xf32>
      %772 = arith.addf %766, %771 : vector<16x2xf32>
      %773 = vector.extract_strided_slice %605 {offsets = [0, 5], sizes = [16, 1], strides = [1, 1]} : vector<16x6xf32> to vector<16x1xf32>
      %774 = vector.extract_strided_slice %743 {offsets = [5, 0], sizes = [1, 2], strides = [1, 1]} : vector<6x2xf32> to vector<1x2xf32>
      %775 = vector.broadcast %773 : vector<16x1xf32> to vector<16x2xf32>
      %776 = vector.broadcast %774 : vector<1x2xf32> to vector<16x2xf32>
      %777 = arith.mulf %775, %776 : vector<16x2xf32>
      %778 = arith.addf %772, %777 : vector<16x2xf32>
      %c0_256 = arith.constant 0 : index
      %c9 = arith.constant 9 : index
      %c0_257 = arith.constant 0 : index
      %c0_258 = arith.constant 0 : index
      %779 = vector.load %arg7[%c0_256, %c9, %c0_257, %c0_258] : memref<1x12x16x2xf32, #tpu.memory_space<vmem>>, vector<1x1x16x2xf32>
      %780 = vector.shape_cast %779 : vector<1x1x16x2xf32> to vector<16x2xf32>
      %781 = vector.shape_cast %778 : vector<16x2xf32> to vector<1x1x16x2xf32>
      tpu.vector_store %arg7[%c0_256, %c9, %c0_257, %c0_258], %781 {strides = array<i32>} : memref<1x12x16x2xf32, #tpu.memory_space<vmem>>, vector<1x1x16x2xf32>,
      %c24 = arith.constant 24 : index
      %c0_259 = arith.constant 0 : index
      %782 = vector.load %arg11[%c24, %c0_259] : memref<36x8xf32, #tpu.memory_space<vmem>>, vector<6x8xf32>
      %cst_260 = arith.constant dense<0.000000e+00> : vector<6x2xf32>
      %783 = tpu.matmul %782, %603, %cst_260 {dimension_numbers = #tpu.dot_dimension_numbers<[1], [0], [0], [1], [0, 0, 1, 1], [], []>} : vector<6x8xf32>, vector<8x2xf32>, vector<6x2xf32> -> vector<6x2xf32>
      %784 = vector.broadcast %604 : vector<1x2xf32> to vector<6x2xf32>
      %785 = arith.addf %783, %784 : vector<6x2xf32>
      %cst_261 = arith.constant 0.000000e+00 : f32
      %786 = vector.broadcast %cst_261 : f32 to vector<6x2xf32>
      %787 = arith.maximumf %785, %786 : vector<6x2xf32>
      %788 = vector.extract_strided_slice %605 {offsets = [0, 0], sizes = [16, 1], strides = [1, 1]} : vector<16x6xf32> to vector<16x1xf32>
      %789 = vector.extract_strided_slice %787 {offsets = [0, 0], sizes = [1, 2], strides = [1, 1]} : vector<6x2xf32> to vector<1x2xf32>
      %790 = vector.broadcast %788 : vector<16x1xf32> to vector<16x2xf32>
      %791 = vector.broadcast %789 : vector<1x2xf32> to vector<16x2xf32>
      %792 = arith.mulf %790, %791 : vector<16x2xf32>
      %793 = vector.extract_strided_slice %605 {offsets = [0, 1], sizes = [16, 1], strides = [1, 1]} : vector<16x6xf32> to vector<16x1xf32>
      %794 = vector.extract_strided_slice %787 {offsets = [1, 0], sizes = [1, 2], strides = [1, 1]} : vector<6x2xf32> to vector<1x2xf32>
      %795 = vector.broadcast %793 : vector<16x1xf32> to vector<16x2xf32>
      %796 = vector.broadcast %794 : vector<1x2xf32> to vector<16x2xf32>
      %797 = arith.mulf %795, %796 : vector<16x2xf32>
      %798 = arith.addf %792, %797 : vector<16x2xf32>
      %799 = vector.extract_strided_slice %605 {offsets = [0, 2], sizes = [16, 1], strides = [1, 1]} : vector<16x6xf32> to vector<16x1xf32>
      %800 = vector.extract_strided_slice %787 {offsets = [2, 0], sizes = [1, 2], strides = [1, 1]} : vector<6x2xf32> to vector<1x2xf32>
      %801 = vector.broadcast %799 : vector<16x1xf32> to vector<16x2xf32>
      %802 = vector.broadcast %800 : vector<1x2xf32> to vector<16x2xf32>
      %803 = arith.mulf %801, %802 : vector<16x2xf32>
      %804 = arith.addf %798, %803 : vector<16x2xf32>
      %805 = vector.extract_strided_slice %605 {offsets = [0, 3], sizes = [16, 1], strides = [1, 1]} : vector<16x6xf32> to vector<16x1xf32>
      %806 = vector.extract_strided_slice %787 {offsets = [3, 0], sizes = [1, 2], strides = [1, 1]} : vector<6x2xf32> to vector<1x2xf32>
      %807 = vector.broadcast %805 : vector<16x1xf32> to vector<16x2xf32>
      %808 = vector.broadcast %806 : vector<1x2xf32> to vector<16x2xf32>
      %809 = arith.mulf %807, %808 : vector<16x2xf32>
      %810 = arith.addf %804, %809 : vector<16x2xf32>
      %811 = vector.extract_strided_slice %605 {offsets = [0, 4], sizes = [16, 1], strides = [1, 1]} : vector<16x6xf32> to vector<16x1xf32>
      %812 = vector.extract_strided_slice %787 {offsets = [4, 0], sizes = [1, 2], strides = [1, 1]} : vector<6x2xf32> to vector<1x2xf32>
      %813 = vector.broadcast %811 : vector<16x1xf32> to vector<16x2xf32>
      %814 = vector.broadcast %812 : vector<1x2xf32> to vector<16x2xf32>
      %815 = arith.mulf %813, %814 : vector<16x2xf32>
      %816 = arith.addf %810, %815 : vector<16x2xf32>
      %817 = vector.extract_strided_slice %605 {offsets = [0, 5], sizes = [16, 1], strides = [1, 1]} : vector<16x6xf32> to vector<16x1xf32>
      %818 = vector.extract_strided_slice %787 {offsets = [5, 0], sizes = [1, 2], strides = [1, 1]} : vector<6x2xf32> to vector<1x2xf32>
      %819 = vector.broadcast %817 : vector<16x1xf32> to vector<16x2xf32>
      %820 = vector.broadcast %818 : vector<1x2xf32> to vector<16x2xf32>
      %821 = arith.mulf %819, %820 : vector<16x2xf32>
      %822 = arith.addf %816, %821 : vector<16x2xf32>
      %c0_262 = arith.constant 0 : index
      %c10 = arith.constant 10 : index
      %c0_263 = arith.constant 0 : index
      %c0_264 = arith.constant 0 : index
      %823 = vector.load %arg7[%c0_262, %c10, %c0_263, %c0_264] : memref<1x12x16x2xf32, #tpu.memory_space<vmem>>, vector<1x1x16x2xf32>
      %824 = vector.shape_cast %823 : vector<1x1x16x2xf32> to vector<16x2xf32>
      %825 = vector.shape_cast %822 : vector<16x2xf32> to vector<1x1x16x2xf32>
      tpu.vector_store %arg7[%c0_262, %c10, %c0_263, %c0_264], %825 {strides = array<i32>} : memref<1x12x16x2xf32, #tpu.memory_space<vmem>>, vector<1x1x16x2xf32>,
      %c30 = arith.constant 30 : index
      %c0_265 = arith.constant 0 : index
      %826 = vector.load %arg11[%c30, %c0_265] : memref<36x8xf32, #tpu.memory_space<vmem>>, vector<6x8xf32>
      %cst_266 = arith.constant dense<0.000000e+00> : vector<6x2xf32>
      %827 = tpu.matmul %826, %603, %cst_266 {dimension_numbers = #tpu.dot_dimension_numbers<[1], [0], [0], [1], [0, 0, 1, 1], [], []>} : vector<6x8xf32>, vector<8x2xf32>, vector<6x2xf32> -> vector<6x2xf32>
      %828 = vector.broadcast %604 : vector<1x2xf32> to vector<6x2xf32>
      %829 = arith.addf %827, %828 : vector<6x2xf32>
      %cst_267 = arith.constant 0.000000e+00 : f32
      %830 = vector.broadcast %cst_267 : f32 to vector<6x2xf32>
      %831 = arith.maximumf %829, %830 : vector<6x2xf32>
      %832 = vector.extract_strided_slice %605 {offsets = [0, 0], sizes = [16, 1], strides = [1, 1]} : vector<16x6xf32> to vector<16x1xf32>
      %833 = vector.extract_strided_slice %831 {offsets = [0, 0], sizes = [1, 2], strides = [1, 1]} : vector<6x2xf32> to vector<1x2xf32>
      %834 = vector.broadcast %832 : vector<16x1xf32> to vector<16x2xf32>
      %835 = vector.broadcast %833 : vector<1x2xf32> to vector<16x2xf32>
      %836 = arith.mulf %834, %835 : vector<16x2xf32>
      %837 = vector.extract_strided_slice %605 {offsets = [0, 1], sizes = [16, 1], strides = [1, 1]} : vector<16x6xf32> to vector<16x1xf32>
      %838 = vector.extract_strided_slice %831 {offsets = [1, 0], sizes = [1, 2], strides = [1, 1]} : vector<6x2xf32> to vector<1x2xf32>
      %839 = vector.broadcast %837 : vector<16x1xf32> to vector<16x2xf32>
      %840 = vector.broadcast %838 : vector<1x2xf32> to vector<16x2xf32>
      %841 = arith.mulf %839, %840 : vector<16x2xf32>
      %842 = arith.addf %836, %841 : vector<16x2xf32>
      %843 = vector.extract_strided_slice %605 {offsets = [0, 2], sizes = [16, 1], strides = [1, 1]} : vector<16x6xf32> to vector<16x1xf32>
      %844 = vector.extract_strided_slice %831 {offsets = [2, 0], sizes = [1, 2], strides = [1, 1]} : vector<6x2xf32> to vector<1x2xf32>
      %845 = vector.broadcast %843 : vector<16x1xf32> to vector<16x2xf32>
      %846 = vector.broadcast %844 : vector<1x2xf32> to vector<16x2xf32>
      %847 = arith.mulf %845, %846 : vector<16x2xf32>
      %848 = arith.addf %842, %847 : vector<16x2xf32>
      %849 = vector.extract_strided_slice %605 {offsets = [0, 3], sizes = [16, 1], strides = [1, 1]} : vector<16x6xf32> to vector<16x1xf32>
      %850 = vector.extract_strided_slice %831 {offsets = [3, 0], sizes = [1, 2], strides = [1, 1]} : vector<6x2xf32> to vector<1x2xf32>
      %851 = vector.broadcast %849 : vector<16x1xf32> to vector<16x2xf32>
      %852 = vector.broadcast %850 : vector<1x2xf32> to vector<16x2xf32>
      %853 = arith.mulf %851, %852 : vector<16x2xf32>
      %854 = arith.addf %848, %853 : vector<16x2xf32>
      %855 = vector.extract_strided_slice %605 {offsets = [0, 4], sizes = [16, 1], strides = [1, 1]} : vector<16x6xf32> to vector<16x1xf32>
      %856 = vector.extract_strided_slice %831 {offsets = [4, 0], sizes = [1, 2], strides = [1, 1]} : vector<6x2xf32> to vector<1x2xf32>
      %857 = vector.broadcast %855 : vector<16x1xf32> to vector<16x2xf32>
      %858 = vector.broadcast %856 : vector<1x2xf32> to vector<16x2xf32>
      %859 = arith.mulf %857, %858 : vector<16x2xf32>
      %860 = arith.addf %854, %859 : vector<16x2xf32>
      %861 = vector.extract_strided_slice %605 {offsets = [0, 5], sizes = [16, 1], strides = [1, 1]} : vector<16x6xf32> to vector<16x1xf32>
      %862 = vector.extract_strided_slice %831 {offsets = [5, 0], sizes = [1, 2], strides = [1, 1]} : vector<6x2xf32> to vector<1x2xf32>
      %863 = vector.broadcast %861 : vector<16x1xf32> to vector<16x2xf32>
      %864 = vector.broadcast %862 : vector<1x2xf32> to vector<16x2xf32>
      %865 = arith.mulf %863, %864 : vector<16x2xf32>
      %866 = arith.addf %860, %865 : vector<16x2xf32>
      %c0_268 = arith.constant 0 : index
      %c11 = arith.constant 11 : index
      %c0_269 = arith.constant 0 : index
      %c0_270 = arith.constant 0 : index
      %867 = vector.load %arg7[%c0_268, %c11, %c0_269, %c0_270] : memref<1x12x16x2xf32, #tpu.memory_space<vmem>>, vector<1x1x16x2xf32>
      %868 = vector.shape_cast %867 : vector<1x1x16x2xf32> to vector<16x2xf32>
      %869 = vector.shape_cast %866 : vector<16x2xf32> to vector<1x1x16x2xf32>
      tpu.vector_store %arg7[%c0_268, %c11, %c0_269, %c0_270], %869 {strides = array<i32>} : memref<1x12x16x2xf32, #tpu.memory_space<vmem>>, vector<1x1x16x2xf32>,
    } else {
    }
    return
  }
  func.func @transform_0(%arg0: i32, %arg1: i32) -> (i32, i32, i32, i32) {
    %c0_i32 = arith.constant 0 : i32
    %c0_i32_0 = arith.constant 0 : i32
    %c0_i32_1 = arith.constant 0 : i32
    return %arg0, %arg1, %c0_i32, %c0_i32_0 : i32, i32, i32, i32
  }
  func.func @transform_1(%arg0: i32, %arg1: i32) -> (i32, i32) {
    %c0_i32 = arith.constant 0 : i32
    %c0_i32_0 = arith.constant 0 : i32
    return %arg1, %c0_i32 : i32, i32
  }
  func.func @transform_2(%arg0: i32, %arg1: i32) -> (i32, i32) {
    %c0_i32 = arith.constant 0 : i32
    %c0_i32_0 = arith.constant 0 : i32
    %c0_i32_1 = arith.constant 0 : i32
    return %c0_i32, %c0_i32_0 : i32, i32
  }
  func.func @transform_3(%arg0: i32, %arg1: i32) -> (i32, i32) {
    %c0_i32 = arith.constant 0 : i32
    %c0_i32_0 = arith.constant 0 : i32
    %c0_i32_1 = arith.constant 0 : i32
    return %c0_i32, %c0_i32_0 : i32, i32
  }
  func.func @transform_4(%arg0: i32, %arg1: i32) -> (i32, i32) {
    %c0_i32 = arith.constant 0 : i32
    %c0_i32_0 = arith.constant 0 : i32
    %c0_i32_1 = arith.constant 0 : i32
    return %c0_i32, %c0_i32_0 : i32, i32
  }
  func.func @transform_5(%arg0: i32, %arg1: i32) -> (i32, i32, i32, i32) {
    %c0_i32 = arith.constant 0 : i32
    %c0_i32_0 = arith.constant 0 : i32
    %c0_i32_1 = arith.constant 0 : i32
    %c0_i32_2 = arith.constant 0 : i32
    return %arg0, %c0_i32, %c0_i32_0, %c0_i32_1 : i32, i32, i32, i32
  }
}

</mosaic_0001>

<llo_original>
// kernel: tpu_custom_call.1
$region0: #{tpu_custom_call.1}
  #allocation0 [shape = 'u32[]', space=smem, size = 0x4, offset = 0x4, fixed_abs, tag = 'smem constant byte address 0x4 - core index']
  #allocation1 [shape = 'u32[144,128]{1,0:T(1,128)}', space=vmem, size = 0x12000, scoped, tag = 'internal scratch']
  #allocation2 [shape = 'f32[1,8]{1,0:T(1,128)}', space=vmem, size = 0x200, scoped, tag = 'scratch operand']
  #allocation3 [shape = 'f32[4,8]{1,0:T(4,128)}', space=vmem, size = 0x800, scoped, tag = 'scratch operand']
  #allocation4 [shape = 'f32[9,8]{1,0:T(8,128)}', space=vmem, size = 0x2000, scoped, tag = 'scratch operand']
  #allocation5 [shape = 'f32[36,8]{1,0:T(8,128)}', space=vmem, size = 0x5000, scoped, tag = 'scratch operand']
  %s0 = inlined_call_operand.vmem [shape: f32[2,16,16,8], index: 0, kind: input, shape index: {}]
  %s1 = inlined_call_operand.vmem [shape: f32[16,12], index: 1, kind: input, shape index: {}]
  %s2 = inlined_call_operand.vmem [shape: f32[16,12], index: 2, kind: input, shape index: {}]
  %s3 = inlined_call_operand.vmem [shape: f32[8,8], index: 3, kind: input, shape index: {}]
  %s4 = inlined_call_operand.vmem [shape: f32[1,8], index: 4, kind: input, shape index: {}]
  %s5 = inlined_call_operand.vmem [shape: f32[2,12,16,2], index: 5, kind: output, shape index: {}]
  %s6 = sld [smem:[#allocation0]]
  $region61: #{tpu_custom_call.1} parent=0
    _
  %s8 = ssub.s32 1, %s6
  %s9 = scalar_select 0, %s8, %s6
  loop: start=0, step=1, limit=6
  $region2: #{tpu_custom_call.1} parent=0 // loop_pre_header
    _
  $region3: #{tpu_custom_call.1} parent=0 // loop_header
    %s11 = sphi 0, %s15
    %p12 = scmp.ge.s32.totalorder %s11, 6
    %s18 = sphi 0, %s30
    %s19 = sphi 0, %s26
    %s20 = sphi 0, %s18
    %s21 = sphi 0, %s19
    %s22 = sphi 0, %s20
    %s23 = sphi 0, %s21
    %s35 = sphi 0, %s37
    %s38 = sphi 0, %s35
    %s39 = sphi 0, %s38
    %s55 = sphi 0, %s39
    %s61 = sphi 0, %s63
    %s64 = sphi 0, %s61
    %s65 = sphi 0, %s64
    %s81 = sphi 0, %s65
    %s85 = sphi 0, %s85
    %s87 = sphi 0, %s85
    %s88 = sphi 0, %s87
    %s102 = sphi 0, %s88
    %s106 = sphi 0, %s106
    %s108 = sphi 0, %s106
    %s109 = sphi 0, %s108
    %s123 = sphi 0, %s109
    %s127 = sphi 0, %s127
    %s129 = sphi 0, %s127
    %s130 = sphi 0, %s129
    %s144 = sphi 0, %s130
    %s150 = sphi 0, %s152
    %s153 = sphi 0, %s150
    %s154 = sphi 0, %s153
    %s170 = sphi 0, %s154
  $region4: #{tpu_custom_call.1} parent=0 // loop_header_branch
    %14 = sbr.rel (%p12) target = $region8
  $region5: #{tpu_custom_call.1} parent=0 // loop_body
    %s16 = ssub.s32 %s11, 1
    %s17 = ssub.s32 %s11, 2
    %s24 = sadd.s32 1, %s19
    %p25 = scmp.ge.s32.totalorder %s24, 2
    %s26 = scalar_select %p25, 0, %s24
    %s27 = sadd.s32 1, %s18
    %s28 = scalar_select %p25, %s27, %s18
    %p29 = scmp.ge.s32.totalorder %s28, 2
    %s30 = scalar_select %p29, 0, %s28
    %s31 = ssub.s32 %s18, %s30
    %s32 = ssub.s32 %s19, %s26
    %s33 = sor.u32 %s31, %s32
    %p34 = scmp.eq.s32.totalorder %s33, 0
    %s36 = sadd.s32 %s35, 1
    %s37 = scalar_select %p34, %s35, %s36
    %p40 = pneg %p34
    %p41 = scmp.eq.s32.totalorder %s11, 3
    %p42 = por %p40, %p41
    %p43 = scmp.ne.s32.totalorder %s35, %s38
    %p44 = scmp.eq.s32.totalorder %s11, 0
    %p45 = por %p43, %p44
    %p46 = scmp.ne.s32.totalorder %s35, %s38
    %p47 = scmp.eq.s32.totalorder %s16, 3
    %p48 = por %p46, %p47
    %p49 = scmp.ne.s32.totalorder %s38, %s39
    %p50 = scmp.eq.s32.totalorder %s16, 0
    %p51 = por %p49, %p50
    %p52 = scmp.ne.s32.totalorder %s38, %s39
    %p53 = scmp.eq.s32.totalorder %s17, 3
    %p54 = por %p52, %p53
    %p56 = scmp.ne.s32.totalorder %s39, %s55
    %p57 = scmp.eq.s32.totalorder %s17, 0
    %p58 = por %p56, %p57
    %s59 = ssub.s32 %s19, %s26
    %p60 = scmp.eq.s32.totalorder %s59, 0
    %s62 = sadd.s32 %s61, 1
    %s63 = scalar_select %p60, %s61, %s62
    %p66 = pneg %p60
    %p67 = scmp.eq.s32.totalorder %s11, 3
    %p68 = por %p66, %p67
    %p69 = scmp.ne.s32.totalorder %s61, %s64
    %p70 = scmp.eq.s32.totalorder %s11, 0
    %p71 = por %p69, %p70
    %p72 = scmp.ne.s32.totalorder %s61, %s64
    %p73 = scmp.eq.s32.totalorder %s16, 3
    %p74 = por %p72, %p73
    %p75 = scmp.ne.s32.totalorder %s64, %s65
    %p76 = scmp.eq.s32.totalorder %s16, 0
    %p77 = por %p75, %p76
    %p78 = scmp.ne.s32.totalorder %s64, %s65
    %p79 = scmp.eq.s32.totalorder %s17, 3
    %p80 = por %p78, %p79
    %p82 = scmp.ne.s32.totalorder %s65, %s81
    %p83 = scmp.eq.s32.totalorder %s17, 0
    %p84 = por %p82, %p83
    %s86 = sadd.s32 %s85, 1
    %p89 = scmp.eq.s32.totalorder %s11, 3
    %p90 = scmp.ne.s32.totalorder %s85, %s87
    %p91 = scmp.eq.s32.totalorder %s11, 0
    %p92 = por %p90, %p91
    %p93 = scmp.ne.s32.totalorder %s85, %s87
    %p94 = scmp.eq.s32.totalorder %s16, 3
    %p95 = por %p93, %p94
    %p96 = scmp.ne.s32.totalorder %s87, %s88
    %p97 = scmp.eq.s32.totalorder %s16, 0
    %p98 = por %p96, %p97
    %p99 = scmp.ne.s32.totalorder %s87, %s88
    %p100 = scmp.eq.s32.totalorder %s17, 3
    %p101 = por %p99, %p100
    %p103 = scmp.ne.s32.totalorder %s88, %s102
    %p104 = scmp.eq.s32.totalorder %s17, 0
    %p105 = por %p103, %p104
    %s107 = sadd.s32 %s106, 1
    %p110 = scmp.eq.s32.totalorder %s11, 3
    %p111 = scmp.ne.s32.totalorder %s106, %s108
    %p112 = scmp.eq.s32.totalorder %s11, 0
    %p113 = por %p111, %p112
    %p114 = scmp.ne.s32.totalorder %s106, %s108
    %p115 = scmp.eq.s32.totalorder %s16, 3
    %p116 = por %p114, %p115
    %p117 = scmp.ne.s32.totalorder %s108, %s109
    %p118 = scmp.eq.s32.totalorder %s16, 0
    %p119 = por %p117, %p118
    %p120 = scmp.ne.s32.totalorder %s108, %s109
    %p121 = scmp.eq.s32.totalorder %s17, 3
    %p122 = por %p120, %p121
    %p124 = scmp.ne.s32.totalorder %s109, %s123
    %p125 = scmp.eq.s32.totalorder %s17, 0
    %p126 = por %p124, %p125
    %s128 = sadd.s32 %s127, 1
    %p131 = scmp.eq.s32.totalorder %s11, 3
    %p132 = scmp.ne.s32.totalorder %s127, %s129
    %p133 = scmp.eq.s32.totalorder %s11, 0
    %p134 = por %p132, %p133
    %p135 = scmp.ne.s32.totalorder %s127, %s129
    %p136 = scmp.eq.s32.totalorder %s16, 3
    %p137 = por %p135, %p136
    %p138 = scmp.ne.s32.totalorder %s129, %s130
    %p139 = scmp.eq.s32.totalorder %s16, 0
    %p140 = por %p138, %p139
    %p141 = scmp.ne.s32.totalorder %s129, %s130
    %p142 = scmp.eq.s32.totalorder %s17, 3
    %p143 = por %p141, %p142
    %p145 = scmp.ne.s32.totalorder %s130, %s144
    %p146 = scmp.eq.s32.totalorder %s17, 0
    %p147 = por %p145, %p146
    %s148 = ssub.s32 %s18, %s30
    %p149 = scmp.eq.s32.totalorder %s148, 0
    %s151 = sadd.s32 %s150, 1
    %s152 = scalar_select %p149, %s150, %s151
    %p155 = pneg %p149
    %p156 = scmp.eq.s32.totalorder %s11, 3
    %p157 = por %p155, %p156
    %p158 = scmp.ne.s32.totalorder %s150, %s153
    %p159 = scmp.eq.s32.totalorder %s11, 0
    %p160 = por %p158, %p159
    %p161 = scmp.ne.s32.totalorder %s150, %s153
    %p162 = scmp.eq.s32.totalorder %s16, 3
    %p163 = por %p161, %p162
    %p164 = scmp.ne.s32.totalorder %s153, %s154
    %p165 = scmp.eq.s32.totalorder %s16, 0
    %p166 = por %p164, %p165
    %p167 = scmp.ne.s32.totalorder %s153, %s154
    %p168 = scmp.eq.s32.totalorder %s17, 3
    %p169 = por %p167, %p168
    %p171 = scmp.ne.s32.totalorder %s154, %s170
    %p172 = scmp.eq.s32.totalorder %s17, 0
    %p173 = por %p171, %p172
    %p174 = scmp.le.s32.totalorder 1, %s11
    %p175 = scmp.lt.s32.totalorder %s11, 5
    %p176 = pnand %p174, %p175
    %p177 = pneg %p176
    // Predicated region
    $region9: #{tpu_custom_call.1} parent=5 // pred_check
      _
    $region10: #{tpu_custom_call.1} parent=5 // pred_check_branch
      %179 = sbr.rel (%p176) target = $region12
    $region11: #{tpu_custom_call.1} parent=5 // pred_region
      %s180 = ssub.s32 %s11, 1
      // Predicated region
      $region13: #{tpu_custom_call.1} parent=11 // pred_check
        %p181 = pneg %p98
      $region14: #{tpu_custom_call.1} parent=11 // pred_check_branch
        %183 = sbr.rel (%p181) target = $region16
      $region15: #{tpu_custom_call.1} parent=11 // pred_region
        _
      $region16: #{tpu_custom_call.1} parent=11 // pred_fallthru
        _
      // Predicated region
      $region17: #{tpu_custom_call.1} parent=11 // pred_check
        %p184 = pneg %p119
      $region18: #{tpu_custom_call.1} parent=11 // pred_check_branch
        %186 = sbr.rel (%p184) target = $region20
      $region19: #{tpu_custom_call.1} parent=11 // pred_region
        _
      $region20: #{tpu_custom_call.1} parent=11 // pred_fallthru
        _
      // Predicated region
      $region21: #{tpu_custom_call.1} parent=11 // pred_check
        %p187 = pneg %p140
      $region22: #{tpu_custom_call.1} parent=11 // pred_check_branch
        %189 = sbr.rel (%p187) target = $region24
      $region23: #{tpu_custom_call.1} parent=11 // pred_region
        _
      $region24: #{tpu_custom_call.1} parent=11 // pred_fallthru
        _
    $region12: #{tpu_custom_call.1} parent=5 // pred_fallthru
      _
    %p190 = scmp.lt.s32.totalorder %s11, 4
    // Predicated region
    $region25: #{tpu_custom_call.1} parent=5 // pred_check
      %p191 = pneg %p190
    $region26: #{tpu_custom_call.1} parent=5 // pred_check_branch
      %193 = sbr.rel (%p191) target = $region28
    $region27: #{tpu_custom_call.1} parent=5 // pred_region
      // Predicated region
      $region29: #{tpu_custom_call.1} parent=27 // pred_check
        %p194 = pneg %p45
      $region30: #{tpu_custom_call.1} parent=27 // pred_check_branch
        %196 = sbr.rel (%p194) target = $region32
      $region31: #{tpu_custom_call.1} parent=27 // pred_region
        %s197 = smul.u32 8, %s19
        %p198 = scmp.lt.s32.totalorder %s18, 1
        %s199 = scalar_select %p198, %s18, 1
        %p200 = scmp.lt.s32.totalorder %s197, 15
        %s201 = scalar_select %p200, %s197, 15
        %s202 = smul.addr %s201, 2
        %s203 = smul.addr %s199, 32
        %s204 = sadd.s32 %s202, %s203
        %s205 = smul.addr %s204, 8
        %s206 = scalar_lea.vmem %s0, %s205
        %s207 = smul.u32 8, %s19
      $region32: #{tpu_custom_call.1} parent=27 // pred_fallthru
        _
      // Predicated region
      $region33: #{tpu_custom_call.1} parent=27 // pred_check
        %p208 = pneg %p71
      $region34: #{tpu_custom_call.1} parent=27 // pred_check_branch
        %210 = sbr.rel (%p208) target = $region36
      $region35: #{tpu_custom_call.1} parent=27 // pred_region
        %p211 = scmp.lt.s32.totalorder %s19, 1
        %s212 = scalar_select %p211, %s19, 1
        %s213 = smul.addr %s212, 8
        %s214 = scalar_lea.vmem %s1, %s213
      $region36: #{tpu_custom_call.1} parent=27 // pred_fallthru
        _
    $region28: #{tpu_custom_call.1} parent=5 // pred_fallthru
      _
    %p215 = scmp.le.s32.totalorder 1, %s11
    %p216 = scmp.lt.s32.totalorder %s11, 5
    %p217 = pnand %p215, %p216
    %p218 = pneg %p217
    // Predicated region
    $region37: #{tpu_custom_call.1} parent=5 // pred_check
      _
    $region38: #{tpu_custom_call.1} parent=5 // pred_check_branch
      %220 = sbr.rel (%p217) target = $region40
    $region39: #{tpu_custom_call.1} parent=5 // pred_region
      %s221 = ssub.s32 %s11, 1
      %s222 = smul.u32 8, %s21
      %p223 = scmp.lt.s32.totalorder %s20, 1
      %s224 = scalar_select %p223, %s20, 1
      %p225 = scmp.lt.s32.totalorder %s222, 15
      %s226 = scalar_select %p225, %s222, 15
      %s227 = smul.addr %s226, 2
      %s228 = smul.addr %s224, 32
      %s229 = sadd.s32 %s227, %s228
      %s230 = smul.addr %s229, 8
      %s231 = scalar_lea.vmem %s0, %s230
      %p232 = pneg %p51
      %p233 = pneg %p48
      %p234 = scmp.lt.s32.totalorder %s21, 1
      %s235 = scalar_select %p234, %s21, 1
      %s236 = smul.addr %s235, 8
      %s237 = scalar_lea.vmem %s1, %s236
      %p238 = pneg %p77
      %p239 = pneg %p74
      %p240 = pneg %p98
      %p241 = pneg %p95
      %p242 = pneg %p119
      %p243 = pneg %p116
      %p244 = pneg %p140
      %p245 = pneg %p137
      %p246 = pneg %p166
      %p247 = pneg %p163
      %p248 = scmp.lt.s32.totalorder %s20, 1
      %s249 = scalar_select %p248, %s20, 1
      %s250 = smul.addr %s249, 24
      %s251 = smul.addr %s250, 8
      %s252 = scalar_lea.vmem %s5, %s251
      %s253 = smul.u32 8, %s21
      %p254 = scmp.lt.s32.totalorder %s20, 1
      %s255 = scalar_select %p254, %s20, 1
      %p256 = scmp.lt.s32.totalorder %s253, 15
      %s257 = scalar_select %p256, %s253, 15
      %s258 = smul.addr %s257, 2
      %s259 = smul.addr %s255, 32
      %s260 = sadd.s32 %s258, %s259
      %s261 = smul.addr %s260, 8
      %s262 = scalar_lea.vmem %s0, %s261
      %s263 = smul.u32 8, %s21
      %p264 = scmp.lt.s32.totalorder %s21, 1
      %s265 = scalar_select %p264, %s21, 1
      %s266 = smul.addr %s265, 8
      %s267 = scalar_lea.vmem %s1, %s266
      %p268 = scmp.lt.s32.totalorder %s20, 1
      %s269 = scalar_select %p268, %s20, 1
      %s270 = smul.addr %s269, 24
      %s271 = smul.addr %s270, 8
      %s272 = scalar_lea.vmem %s5, %s271
      %p273 = scmp.eq.s32.totalorder %s21, 0
      // Predicated region
      $region41: #{tpu_custom_call.1} parent=39 // pred_check
        %p274 = pneg %p273
      $region42: #{tpu_custom_call.1} parent=39 // pred_check_branch
        %276 = sbr.rel (%p274) target = $region44
      $region43: #{tpu_custom_call.1} parent=39 // pred_region
        %vm277 = vcmask 57344
        %278 = vst.msk [vmem:[#allocation2] sm:$0x1] %vm277, -3.4028235e+38
        %vm279 = vcmask 60416
        %280 = vst.msk [vmem:[#allocation3] sm:$0xf] %vm279, -3.4028235e+38
        %vm281 = vcmask 64512
        %282 = vst.msk [vmem:[#allocation4] sm:$0xff] %vm281, -3.4028235e+38
        %283 = vst.msk [vmem:[#allocation4 + $0x8] sm:$0x1] %vm277, -3.4028235e+38
        %284 = vst.msk [vmem:[#allocation5] sm:$0xff] %vm281, -3.4028235e+38
        %285 = vst.msk [vmem:[#allocation5 + $0x8] sm:$0xff] %vm281, -3.4028235e+38
        %286 = vst.msk [vmem:[#allocation5 + $0x10] sm:$0xff] %vm281, -3.4028235e+38
        %287 = vst.msk [vmem:[#allocation5 + $0x18] sm:$0xff] %vm281, -3.4028235e+38
        %288 = vst.msk [vmem:[#allocation5 + $0x20] sm:$0xf] %vm279, -3.4028235e+38
      $region44: #{tpu_custom_call.1} parent=39 // pred_fallthru
        _
      %v289 = vld [vmem:[%s262] sm:$0xff]
      %v290 = vld [vmem:[%s262 + $0x8] sm:$0xff]
      %v291 = vld [vmem:[%s262 + $0x10] sm:$0xff]
      %v292 = vld [vmem:[%s262 + $0x18] sm:$0xff]
      %v293 = vld [vmem:[%s262 + $0x20] sm:$0xff]
      %v294 = vld [vmem:[%s262 + $0x28] sm:$0xff]
      %v295 = vld [vmem:[%s262 + $0x30] sm:$0xff]
      %v296 = vld [vmem:[%s262 + $0x38] sm:$0xff]
      %v297 = vld [vmem:[%s262 + $0x40] sm:$0xff]
      %v298 = vld [vmem:[%s262 + $0x48] sm:$0xff]
      %v299 = vld [vmem:[%s262 + $0x50] sm:$0xff]
      %v300 = vld [vmem:[%s262 + $0x58] sm:$0xff]
      %v301 = vld [vmem:[%s262 + $0x60] sm:$0xff]
      %v302 = vld [vmem:[%s262 + $0x68] sm:$0xff]
      %v303 = vld [vmem:[%s262 + $0x70] sm:$0xff]
      %v304 = vld [vmem:[%s262 + $0x78] sm:$0xff]
      %v305 = vld [vmem:[%s267] sm:$0xff]
      %vm306 = vcmask 64512
      %v307 = vsel %vm306, %v289, -inf
      %v308 = vsel %vm306, %v290, -inf
      %v309 = vmax.f32 %v307, %v308
      %v310 = vrot.slane %v309, 4
      %v311 = vmax.f32 %v309, %v310
      %v312 = vrot.slane %v311, 2
      %v313 = vmax.f32 %v311, %v312
      %v314 = vrot.slane %v313, 1
      %v315 = vmax.f32 %v313, %v314
      %v316 = vsel %vm306, %v291, -inf
      %v317 = vsel %vm306, %v292, -inf
      %v318 = vmax.f32 %v316, %v317
      %v319 = vrot.slane %v318, 4
      %v320 = vmax.f32 %v318, %v319
      %v321 = vrot.slane %v320, 2
      %v322 = vmax.f32 %v320, %v321
      %v323 = vrot.slane %v322, 1
      %v324 = vmax.f32 %v322, %v323
      %v325 = vsel %vm306, %v293, -inf
      %v326 = vsel %vm306, %v294, -inf
      %v327 = vmax.f32 %v325, %v326
      %v328 = vrot.slane %v327, 4
      %v329 = vmax.f32 %v327, %v328
      %v330 = vrot.slane %v329, 2
      %v331 = vmax.f32 %v329, %v330
      %v332 = vrot.slane %v331, 1
      %v333 = vmax.f32 %v331, %v332
      %v334 = vsel %vm306, %v295, -inf
      %v335 = vsel %vm306, %v296, -inf
      %v336 = vmax.f32 %v334, %v335
      %v337 = vrot.slane %v336, 4
      %v338 = vmax.f32 %v336, %v337
      %v339 = vrot.slane %v338, 2
      %v340 = vmax.f32 %v338, %v339
      %v341 = vrot.slane %v340, 1
      %v342 = vmax.f32 %v340, %v341
      %v343 = vsel %vm306, %v297, -inf
      %v344 = vsel %vm306, %v298, -inf
      %v345 = vmax.f32 %v343, %v344
      %v346 = vrot.slane %v345, 4
      %v347 = vmax.f32 %v345, %v346
      %v348 = vrot.slane %v347, 2
      %v349 = vmax.f32 %v347, %v348
      %v350 = vrot.slane %v349, 1
      %v351 = vmax.f32 %v349, %v350
      %v352 = vsel %vm306, %v299, -inf
      %v353 = vsel %vm306, %v300, -inf
      %v354 = vmax.f32 %v352, %v353
      %v355 = vrot.slane %v354, 4
      %v356 = vmax.f32 %v354, %v355
      %v357 = vrot.slane %v356, 2
      %v358 = vmax.f32 %v356, %v357
      %v359 = vrot.slane %v358, 1
      %v360 = vmax.f32 %v358, %v359
      %v361 = vsel %vm306, %v301, -inf
      %v362 = vsel %vm306, %v302, -inf
      %v363 = vmax.f32 %v361, %v362
      %v364 = vrot.slane %v363, 4
      %v365 = vmax.f32 %v363, %v364
      %v366 = vrot.slane %v365, 2
      %v367 = vmax.f32 %v365, %v366
      %v368 = vrot.slane %v367, 1
      %v369 = vmax.f32 %v367, %v368
      %v370 = vsel %vm306, %v303, -inf
      %v371 = vsel %vm306, %v304, -inf
      %v372 = vmax.f32 %v370, %v371
      %v373 = vrot.slane %v372, 4
      %v374 = vmax.f32 %v372, %v373
      %v375 = vrot.slane %v374, 2
      %v376 = vmax.f32 %v374, %v375
      %v377 = vrot.slane %v376, 1
      %v378 = vmax.f32 %v376, %v377
      %vm379 = vcmp.gt.f32.partialorder %v305, 0.0
      %v380 = vsel %vm379, 1, 0
      %381 = vset.pattern.permute.xlu0 0
      %382 = vperm.xlu0 %381, %v380
      %v383 = vpop.permute.xlu0 %382
      %vm384 = vcmp.eq.s32.totalorder %v383, 1
      %vm393 = vcmask 1041409
      %v394 = vsel %vm393, %v324, %v315
      %vm395 = vcmask 1042434
      %v396 = vsel %vm395, %v333, %v394
      %vm397 = vcmask 1043459
      %v398 = vsel %vm397, %v342, %v396
      %vm399 = vcmask 1044484
      %v400 = vsel %vm399, %v351, %v398
      %vm401 = vcmask 1045509
      %v402 = vsel %vm401, %v360, %v400
      %vm403 = vcmask 1046534
      %v404 = vsel %vm403, %v369, %v402
      %vm405 = vcmask 1047559
      %v406 = vsel %vm405, %v378, %v404
      %v408 = vsel %vm384, %v406, -3.4028235e+38
      %v409 = vsel %vm306, %v408, -inf
      %v410 = vrot.slane %v409, 4
      %v411 = vmax.f32 %v409, %v410
      %v412 = vrot.slane %v411, 2
      %v413 = vmax.f32 %v411, %v412
      %v414 = vrot.slane %v413, 1
      %v415 = vmax.f32 %v413, %v414
      %v416 = vld [vmem:[#allocation2] sm:$0x1]
      %v417 = vmax.f32 %v416, %v415
      %vm418 = vcmask 57344
      %419 = vst.msk [vmem:[#allocation2] sm:$0x1] %vm418, %v417
      %v420 = vrot.slane %v307, 4
      %v421 = vmax.f32 %v307, %v420
      %v422 = vrot.slane %v421, 2
      %v423 = vmax.f32 %v421, %v422
      %v424 = vrot.slane %v423, 1
      %v425 = vmax.f32 %v423, %v424
      %v426 = vrot.slane %v316, 4
      %v427 = vmax.f32 %v316, %v426
      %v428 = vrot.slane %v427, 2
      %v429 = vmax.f32 %v427, %v428
      %v430 = vrot.slane %v429, 1
      %v431 = vmax.f32 %v429, %v430
      %v432 = vrot.slane %v325, 4
      %v433 = vmax.f32 %v325, %v432
      %v434 = vrot.slane %v433, 2
      %v435 = vmax.f32 %v433, %v434
      %v436 = vrot.slane %v435, 1
      %v437 = vmax.f32 %v435, %v436
      %v438 = vrot.slane %v334, 4
      %v439 = vmax.f32 %v334, %v438
      %v440 = vrot.slane %v439, 2
      %v441 = vmax.f32 %v439, %v440
      %v442 = vrot.slane %v441, 1
      %v443 = vmax.f32 %v441, %v442
      %v444 = vrot.slane %v343, 4
      %v445 = vmax.f32 %v343, %v444
      %v446 = vrot.slane %v445, 2
      %v447 = vmax.f32 %v445, %v446
      %v448 = vrot.slane %v447, 1
      %v449 = vmax.f32 %v447, %v448
      %v450 = vrot.slane %v352, 4
      %v451 = vmax.f32 %v352, %v450
      %v452 = vrot.slane %v451, 2
      %v453 = vmax.f32 %v451, %v452
      %v454 = vrot.slane %v453, 1
      %v455 = vmax.f32 %v453, %v454
      %v456 = vrot.slane %v361, 4
      %v457 = vmax.f32 %v361, %v456
      %v458 = vrot.slane %v457, 2
      %v459 = vmax.f32 %v457, %v458
      %v460 = vrot.slane %v459, 1
      %v461 = vmax.f32 %v459, %v460
      %v462 = vrot.slane %v370, 4
      %v463 = vmax.f32 %v370, %v462
      %v464 = vrot.slane %v463, 2
      %v465 = vmax.f32 %v463, %v464
      %v466 = vrot.slane %v465, 1
      %v467 = vmax.f32 %v465, %v466
      %v468 = vrot.slane %v308, 4
      %v469 = vmax.f32 %v308, %v468
      %v470 = vrot.slane %v469, 2
      %v471 = vmax.f32 %v469, %v470
      %v472 = vrot.slane %v471, 1
      %v473 = vmax.f32 %v471, %v472
      %v474 = vrot.slane %v317, 4
      %v475 = vmax.f32 %v317, %v474
      %v476 = vrot.slane %v475, 2
      %v477 = vmax.f32 %v475, %v476
      %v478 = vrot.slane %v477, 1
      %v479 = vmax.f32 %v477, %v478
      %v480 = vrot.slane %v326, 4
      %v481 = vmax.f32 %v326, %v480
      %v482 = vrot.slane %v481, 2
      %v483 = vmax.f32 %v481, %v482
      %v484 = vrot.slane %v483, 1
      %v485 = vmax.f32 %v483, %v484
      %v486 = vrot.slane %v335, 4
      %v487 = vmax.f32 %v335, %v486
      %v488 = vrot.slane %v487, 2
      %v489 = vmax.f32 %v487, %v488
      %v490 = vrot.slane %v489, 1
      %v491 = vmax.f32 %v489, %v490
      %v492 = vrot.slane %v344, 4
      %v493 = vmax.f32 %v344, %v492
      %v494 = vrot.slane %v493, 2
      %v495 = vmax.f32 %v493, %v494
      %v496 = vrot.slane %v495, 1
      %v497 = vmax.f32 %v495, %v496
      %v498 = vrot.slane %v353, 4
      %v499 = vmax.f32 %v353, %v498
      %v500 = vrot.slane %v499, 2
      %v501 = vmax.f32 %v499, %v500
      %v502 = vrot.slane %v501, 1
      %v503 = vmax.f32 %v501, %v502
      %v504 = vrot.slane %v362, 4
      %v505 = vmax.f32 %v362, %v504
      %v506 = vrot.slane %v505, 2
      %v507 = vmax.f32 %v505, %v506
      %v508 = vrot.slane %v507, 1
      %v509 = vmax.f32 %v507, %v508
      %v510 = vrot.slane %v371, 4
      %v511 = vmax.f32 %v371, %v510
      %v512 = vrot.slane %v511, 2
      %v513 = vmax.f32 %v511, %v512
      %v514 = vrot.slane %v513, 1
      %v515 = vmax.f32 %v513, %v514
      %516 = vset.pattern.permute.xlu0 1
      %517 = vperm.xlu0 %516, %v380
      %v518 = vpop.permute.xlu0 %517
      %vm519 = vcmp.eq.s32.totalorder %v518, 1
      %v528 = vsel %vm393, %v431, %v425
      %v529 = vsel %vm395, %v437, %v528
      %v530 = vsel %vm397, %v443, %v529
      %v531 = vsel %vm399, %v449, %v530
      %v532 = vsel %vm401, %v455, %v531
      %v533 = vsel %vm403, %v461, %v532
      %v534 = vsel %vm405, %v467, %v533
      %v536 = vsel %vm519, %v534, -3.4028235e+38
      %v537 = vsel %vm306, %v536, -inf
      %v538 = vrot.slane %v537, 4
      %v539 = vmax.f32 %v537, %v538
      %v540 = vrot.slane %v539, 2
      %v541 = vmax.f32 %v539, %v540
      %v542 = vrot.slane %v541, 1
      %v543 = vmax.f32 %v541, %v542
      %v552 = vsel %vm393, %v479, %v473
      %v553 = vsel %vm395, %v485, %v552
      %v554 = vsel %vm397, %v491, %v553
      %v555 = vsel %vm399, %v497, %v554
      %v556 = vsel %vm401, %v503, %v555
      %v557 = vsel %vm403, %v509, %v556
      %v558 = vsel %vm405, %v515, %v557
      %v560 = vsel %vm519, %v558, -3.4028235e+38
      %v561 = vsel %vm306, %v560, -inf
      %v562 = vrot.slane %v561, 4
      %v563 = vmax.f32 %v561, %v562
      %v564 = vrot.slane %v563, 2
      %v565 = vmax.f32 %v563, %v564
      %v566 = vrot.slane %v565, 1
      %v567 = vmax.f32 %v565, %v566
      %568 = vset.pattern.permute.xlu0 2
      %569 = vperm.xlu0 %568, %v380
      %v570 = vpop.permute.xlu0 %569
      %vm571 = vcmp.eq.s32.totalorder %v570, 1
      %v572 = vsel %vm571, %v534, -3.4028235e+38
      %v573 = vsel %vm306, %v572, -inf
      %v574 = vrot.slane %v573, 4
      %v575 = vmax.f32 %v573, %v574
      %v576 = vrot.slane %v575, 2
      %v577 = vmax.f32 %v575, %v576
      %v578 = vrot.slane %v577, 1
      %v579 = vmax.f32 %v577, %v578
      %v580 = vsel %vm571, %v558, -3.4028235e+38
      %v581 = vsel %vm306, %v580, -inf
      %v582 = vrot.slane %v581, 4
      %v583 = vmax.f32 %v581, %v582
      %v584 = vrot.slane %v583, 2
      %v585 = vmax.f32 %v583, %v584
      %v586 = vrot.slane %v585, 1
      %v587 = vmax.f32 %v585, %v586
      %vm588 = vcmask 1040384
      %v589 = vsel %vm588, %v543, %v567
      %vm590 = vcmask 1041408
      %v591 = vsel %vm590, %v589, %v579
      %vm592 = vcmask 1042432
      %v593 = vsel %vm592, %v591, %v587
      %v594 = vld [vmem:[#allocation3] sm:$0xf]
      %v595 = vmax.f32 %v594, %v593
      %vm596 = vcmask 60416
      %597 = vst.msk [vmem:[#allocation3] sm:$0xf] %vm596, %v595
      %vm598 = vcmask 62464
      %v599 = vsel %vm598, %v289, -inf
      %v600 = vrot.slane %v599, 4
      %v601 = vmax.f32 %v599, %v600
      %v602 = vrot.slane %v601, 2
      %v603 = vmax.f32 %v601, %v602
      %v604 = vrot.slane %v603, 1
      %v605 = vmax.f32 %v603, %v604
      %v606 = vsel %vm598, %v291, -inf
      %v607 = vrot.slane %v606, 4
      %v608 = vmax.f32 %v606, %v607
      %v609 = vrot.slane %v608, 2
      %v610 = vmax.f32 %v608, %v609
      %v611 = vrot.slane %v610, 1
      %v612 = vmax.f32 %v610, %v611
      %v613 = vsel %vm598, %v293, -inf
      %v614 = vrot.slane %v613, 4
      %v615 = vmax.f32 %v613, %v614
      %v616 = vrot.slane %v615, 2
      %v617 = vmax.f32 %v615, %v616
      %v618 = vrot.slane %v617, 1
      %v619 = vmax.f32 %v617, %v618
      %v620 = vsel %vm598, %v295, -inf
      %v621 = vrot.slane %v620, 4
      %v622 = vmax.f32 %v620, %v621
      %v623 = vrot.slane %v622, 2
      %v624 = vmax.f32 %v622, %v623
      %v625 = vrot.slane %v624, 1
      %v626 = vmax.f32 %v624, %v625
      %v627 = vsel %vm598, %v297, -inf
      %v628 = vrot.slane %v627, 4
      %v629 = vmax.f32 %v627, %v628
      %v630 = vrot.slane %v629, 2
      %v631 = vmax.f32 %v629, %v630
      %v632 = vrot.slane %v631, 1
      %v633 = vmax.f32 %v631, %v632
      %v634 = vsel %vm598, %v299, -inf
      %v635 = vrot.slane %v634, 4
      %v636 = vmax.f32 %v634, %v635
      %v637 = vrot.slane %v636, 2
      %v638 = vmax.f32 %v636, %v637
      %v639 = vrot.slane %v638, 1
      %v640 = vmax.f32 %v638, %v639
      %v641 = vsel %vm598, %v301, -inf
      %v642 = vrot.slane %v641, 4
      %v643 = vmax.f32 %v641, %v642
      %v644 = vrot.slane %v643, 2
      %v645 = vmax.f32 %v643, %v644
      %v646 = vrot.slane %v645, 1
      %v647 = vmax.f32 %v645, %v646
      %v648 = vsel %vm598, %v303, -inf
      %v649 = vrot.slane %v648, 4
      %v650 = vmax.f32 %v648, %v649
      %v651 = vrot.slane %v650, 2
      %v652 = vmax.f32 %v650, %v651
      %v653 = vrot.slane %v652, 1
      %v654 = vmax.f32 %v652, %v653
      %vm655 = vcmask 64517
      %v656 = vsel %vm655, %v289, -inf
      %vm657 = vcmask 59392
      %v658 = vsel %vm657, %v290, -inf
      %v659 = vmax.f32 %v656, %v658
      %v660 = vrot.slane %v659, 4
      %v661 = vmax.f32 %v659, %v660
      %v662 = vrot.slane %v661, 2
      %v663 = vmax.f32 %v661, %v662
      %v664 = vrot.slane %v663, 1
      %v665 = vmax.f32 %v663, %v664
      %v666 = vsel %vm655, %v291, -inf
      %v667 = vsel %vm657, %v292, -inf
      %v668 = vmax.f32 %v666, %v667
      %v669 = vrot.slane %v668, 4
      %v670 = vmax.f32 %v668, %v669
      %v671 = vrot.slane %v670, 2
      %v672 = vmax.f32 %v670, %v671
      %v673 = vrot.slane %v672, 1
      %v674 = vmax.f32 %v672, %v673
      %v675 = vsel %vm655, %v293, -inf
      %v676 = vsel %vm657, %v294, -inf
      %v677 = vmax.f32 %v675, %v676
      %v678 = vrot.slane %v677, 4
      %v679 = vmax.f32 %v677, %v678
      %v680 = vrot.slane %v679, 2
      %v681 = vmax.f32 %v679, %v680
      %v682 = vrot.slane %v681, 1
      %v683 = vmax.f32 %v681, %v682
      %v684 = vsel %vm655, %v295, -inf
      %v685 = vsel %vm657, %v296, -inf
      %v686 = vmax.f32 %v684, %v685
      %v687 = vrot.slane %v686, 4
      %v688 = vmax.f32 %v686, %v687
      %v689 = vrot.slane %v688, 2
      %v690 = vmax.f32 %v688, %v689
      %v691 = vrot.slane %v690, 1
      %v692 = vmax.f32 %v690, %v691
      %v693 = vsel %vm655, %v297, -inf
      %v694 = vsel %vm657, %v298, -inf
      %v695 = vmax.f32 %v693, %v694
      %v696 = vrot.slane %v695, 4
      %v697 = vmax.f32 %v695, %v696
      %v698 = vrot.slane %v697, 2
      %v699 = vmax.f32 %v697, %v698
      %v700 = vrot.slane %v699, 1
      %v701 = vmax.f32 %v699, %v700
      %v702 = vsel %vm655, %v299, -inf
      %v703 = vsel %vm657, %v300, -inf
      %v704 = vmax.f32 %v702, %v703
      %v705 = vrot.slane %v704, 4
      %v706 = vmax.f32 %v704, %v705
      %v707 = vrot.slane %v706, 2
      %v708 = vmax.f32 %v706, %v707
      %v709 = vrot.slane %v708, 1
      %v710 = vmax.f32 %v708, %v709
      %v711 = vsel %vm655, %v301, -inf
      %v712 = vsel %vm657, %v302, -inf
      %v713 = vmax.f32 %v711, %v712
      %v714 = vrot.slane %v713, 4
      %v715 = vmax.f32 %v713, %v714
      %v716 = vrot.slane %v715, 2
      %v717 = vmax.f32 %v715, %v716
      %v718 = vrot.slane %v717, 1
      %v719 = vmax.f32 %v717, %v718
      %v720 = vsel %vm655, %v303, -inf
      %v721 = vsel %vm657, %v304, -inf
      %v722 = vmax.f32 %v720, %v721
      %v723 = vrot.slane %v722, 4
      %v724 = vmax.f32 %v722, %v723
      %v725 = vrot.slane %v724, 2
      %v726 = vmax.f32 %v724, %v725
      %v727 = vrot.slane %v726, 1
      %v728 = vmax.f32 %v726, %v727
      %vm729 = vcmask 64514
      %v730 = vsel %vm729, %v290, -inf
      %v731 = vrot.slane %v730, 4
      %v732 = vmax.f32 %v730, %v731
      %v733 = vrot.slane %v732, 2
      %v734 = vmax.f32 %v732, %v733
      %v735 = vrot.slane %v734, 1
      %v736 = vmax.f32 %v734, %v735
      %v737 = vsel %vm729, %v292, -inf
      %v738 = vrot.slane %v737, 4
      %v739 = vmax.f32 %v737, %v738
      %v740 = vrot.slane %v739, 2
      %v741 = vmax.f32 %v739, %v740
      %v742 = vrot.slane %v741, 1
      %v743 = vmax.f32 %v741, %v742
      %v744 = vsel %vm729, %v294, -inf
      %v745 = vrot.slane %v744, 4
      %v746 = vmax.f32 %v744, %v745
      %v747 = vrot.slane %v746, 2
      %v748 = vmax.f32 %v746, %v747
      %v749 = vrot.slane %v748, 1
      %v750 = vmax.f32 %v748, %v749
      %v751 = vsel %vm729, %v296, -inf
      %v752 = vrot.slane %v751, 4
      %v753 = vmax.f32 %v751, %v752
      %v754 = vrot.slane %v753, 2
      %v755 = vmax.f32 %v753, %v754
      %v756 = vrot.slane %v755, 1
      %v757 = vmax.f32 %v755, %v756
      %v758 = vsel %vm729, %v298, -inf
      %v759 = vrot.slane %v758, 4
      %v760 = vmax.f32 %v758, %v759
      %v761 = vrot.slane %v760, 2
      %v762 = vmax.f32 %v760, %v761
      %v763 = vrot.slane %v762, 1
      %v764 = vmax.f32 %v762, %v763
      %v765 = vsel %vm729, %v300, -inf
      %v766 = vrot.slane %v765, 4
      %v767 = vmax.f32 %v765, %v766
      %v768 = vrot.slane %v767, 2
      %v769 = vmax.f32 %v767, %v768
      %v770 = vrot.slane %v769, 1
      %v771 = vmax.f32 %v769, %v770
      %v772 = vsel %vm729, %v302, -inf
      %v773 = vrot.slane %v772, 4
      %v774 = vmax.f32 %v772, %v773
      %v775 = vrot.slane %v774, 2
      %v776 = vmax.f32 %v774, %v775
      %v777 = vrot.slane %v776, 1
      %v778 = vmax.f32 %v776, %v777
      %v779 = vsel %vm729, %v304, -inf
      %v780 = vrot.slane %v779, 4
      %v781 = vmax.f32 %v779, %v780
      %v782 = vrot.slane %v781, 2
      %v783 = vmax.f32 %v781, %v782
      %v784 = vrot.slane %v783, 1
      %v785 = vmax.f32 %v783, %v784
      %786 = vset.pattern.permute.xlu0 3
      %787 = vperm.xlu0 %786, %v380
      %v788 = vpop.permute.xlu0 %787
      %vm789 = vcmp.eq.s32.totalorder %v788, 1
      %v798 = vsel %vm393, %v612, %v605
      %v799 = vsel %vm395, %v619, %v798
      %v800 = vsel %vm397, %v626, %v799
      %v801 = vsel %vm399, %v633, %v800
      %v802 = vsel %vm401, %v640, %v801
      %v803 = vsel %vm403, %v647, %v802
      %v804 = vsel %vm405, %v654, %v803
      %v806 = vsel %vm789, %v804, -3.4028235e+38
      %v807 = vsel %vm306, %v806, -inf
      %v808 = vrot.slane %v807, 4
      %v809 = vmax.f32 %v807, %v808
      %v810 = vrot.slane %v809, 2
      %v811 = vmax.f32 %v809, %v810
      %v812 = vrot.slane %v811, 1
      %v813 = vmax.f32 %v811, %v812
      %v822 = vsel %vm393, %v674, %v665
      %v823 = vsel %vm395, %v683, %v822
      %v824 = vsel %vm397, %v692, %v823
      %v825 = vsel %vm399, %v701, %v824
      %v826 = vsel %vm401, %v710, %v825
      %v827 = vsel %vm403, %v719, %v826
      %v828 = vsel %vm405, %v728, %v827
      %v830 = vsel %vm789, %v828, -3.4028235e+38
      %v831 = vsel %vm306, %v830, -inf
      %v832 = vrot.slane %v831, 4
      %v833 = vmax.f32 %v831, %v832
      %v834 = vrot.slane %v833, 2
      %v835 = vmax.f32 %v833, %v834
      %v836 = vrot.slane %v835, 1
      %v837 = vmax.f32 %v835, %v836
      %v846 = vsel %vm393, %v743, %v736
      %v847 = vsel %vm395, %v750, %v846
      %v848 = vsel %vm397, %v757, %v847
      %v849 = vsel %vm399, %v764, %v848
      %v850 = vsel %vm401, %v771, %v849
      %v851 = vsel %vm403, %v778, %v850
      %v852 = vsel %vm405, %v785, %v851
      %v854 = vsel %vm789, %v852, -3.4028235e+38
      %v855 = vsel %vm306, %v854, -inf
      %v856 = vrot.slane %v855, 4
      %v857 = vmax.f32 %v855, %v856
      %v858 = vrot.slane %v857, 2
      %v859 = vmax.f32 %v857, %v858
      %v860 = vrot.slane %v859, 1
      %v861 = vmax.f32 %v859, %v860
      %862 = vset.pattern.permute.xlu0 4
      %863 = vperm.xlu0 %862, %v380
      %v864 = vpop.permute.xlu0 %863
      %vm865 = vcmp.eq.s32.totalorder %v864, 1
      %v866 = vsel %vm865, %v804, -3.4028235e+38
      %v867 = vsel %vm306, %v866, -inf
      %v868 = vrot.slane %v867, 4
      %v869 = vmax.f32 %v867, %v868
      %v870 = vrot.slane %v869, 2
      %v871 = vmax.f32 %v869, %v870
      %v872 = vrot.slane %v871, 1
      %v873 = vmax.f32 %v871, %v872
      %v874 = vsel %vm865, %v828, -3.4028235e+38
      %v875 = vsel %vm306, %v874, -inf
      %v876 = vrot.slane %v875, 4
      %v877 = vmax.f32 %v875, %v876
      %v878 = vrot.slane %v877, 2
      %v879 = vmax.f32 %v877, %v878
      %v880 = vrot.slane %v879, 1
      %v881 = vmax.f32 %v879, %v880
      %v882 = vsel %vm865, %v852, -3.4028235e+38
      %v883 = vsel %vm306, %v882, -inf
      %v884 = vrot.slane %v883, 4
      %v885 = vmax.f32 %v883, %v884
      %v886 = vrot.slane %v885, 2
      %v887 = vmax.f32 %v885, %v886
      %v888 = vrot.slane %v887, 1
      %v889 = vmax.f32 %v887, %v888
      %890 = vset.pattern.permute.xlu0 5
      %891 = vperm.xlu0 %890, %v380
      %v892 = vpop.permute.xlu0 %891
      %vm893 = vcmp.eq.s32.totalorder %v892, 1
      %v894 = vsel %vm893, %v804, -3.4028235e+38
      %v895 = vsel %vm306, %v894, -inf
      %v896 = vrot.slane %v895, 4
      %v897 = vmax.f32 %v895, %v896
      %v898 = vrot.slane %v897, 2
      %v899 = vmax.f32 %v897, %v898
      %v900 = vrot.slane %v899, 1
      %v901 = vmax.f32 %v899, %v900
      %v902 = vsel %vm893, %v828, -3.4028235e+38
      %v903 = vsel %vm306, %v902, -inf
      %v904 = vrot.slane %v903, 4
      %v905 = vmax.f32 %v903, %v904
      %v906 = vrot.slane %v905, 2
      %v907 = vmax.f32 %v905, %v906
      %v908 = vrot.slane %v907, 1
      %v909 = vmax.f32 %v907, %v908
      %v910 = vsel %vm893, %v852, -3.4028235e+38
      %v911 = vsel %vm306, %v910, -inf
      %v912 = vrot.slane %v911, 4
      %v913 = vmax.f32 %v911, %v912
      %v914 = vrot.slane %v913, 2
      %v915 = vmax.f32 %v913, %v914
      %v916 = vrot.slane %v915, 1
      %v917 = vmax.f32 %v915, %v916
      %v918 = vsel %vm588, %v813, %v837
      %v919 = vsel %vm590, %v918, %v861
      %v920 = vsel %vm592, %v919, %v873
      %vm921 = vcmask 1043456
      %v922 = vsel %vm921, %v920, %v881
      %vm923 = vcmask 1044480
      %v924 = vsel %vm923, %v922, %v889
      %vm925 = vcmask 1045504
      %v926 = vsel %vm925, %v924, %v901
      %vm927 = vcmask 1046528
      %v928 = vsel %vm927, %v926, %v909
      %v929 = vld [vmem:[#allocation4] sm:$0xff]
      %v930 = vld [vmem:[#allocation4 + $0x8] sm:$0x1]
      %v931 = vmax.f32 %v929, %v928
      %v932 = vmax.f32 %v930, %v917
      %933 = vst.msk [vmem:[#allocation4] sm:$0xff] %vm306, %v931
      %934 = vst.msk [vmem:[#allocation4 + $0x8] sm:$0x1] %vm418, %v932
      %v935 = vsel %vm657, %v289, -inf
      %v936 = vrot.slane %v935, 4
      %v937 = vmax.f32 %v935, %v936
      %v938 = vrot.slane %v937, 2
      %v939 = vmax.f32 %v937, %v938
      %v940 = vrot.slane %v939, 1
      %v941 = vmax.f32 %v939, %v940
      %v942 = vsel %vm657, %v291, -inf
      %v943 = vrot.slane %v942, 4
      %v944 = vmax.f32 %v942, %v943
      %v945 = vrot.slane %v944, 2
      %v946 = vmax.f32 %v944, %v945
      %v947 = vrot.slane %v946, 1
      %v948 = vmax.f32 %v946, %v947
      %v949 = vsel %vm657, %v293, -inf
      %v950 = vrot.slane %v949, 4
      %v951 = vmax.f32 %v949, %v950
      %v952 = vrot.slane %v951, 2
      %v953 = vmax.f32 %v951, %v952
      %v954 = vrot.slane %v953, 1
      %v955 = vmax.f32 %v953, %v954
      %v956 = vsel %vm657, %v295, -inf
      %v957 = vrot.slane %v956, 4
      %v958 = vmax.f32 %v956, %v957
      %v959 = vrot.slane %v958, 2
      %v960 = vmax.f32 %v958, %v959
      %v961 = vrot.slane %v960, 1
      %v962 = vmax.f32 %v960, %v961
      %v963 = vsel %vm657, %v297, -inf
      %v964 = vrot.slane %v963, 4
      %v965 = vmax.f32 %v963, %v964
      %v966 = vrot.slane %v965, 2
      %v967 = vmax.f32 %v965, %v966
      %v968 = vrot.slane %v967, 1
      %v969 = vmax.f32 %v967, %v968
      %v970 = vsel %vm657, %v299, -inf
      %v971 = vrot.slane %v970, 4
      %v972 = vmax.f32 %v970, %v971
      %v973 = vrot.slane %v972, 2
      %v974 = vmax.f32 %v972, %v973
      %v975 = vrot.slane %v974, 1
      %v976 = vmax.f32 %v974, %v975
      %v977 = vsel %vm657, %v301, -inf
      %v978 = vrot.slane %v977, 4
      %v979 = vmax.f32 %v977, %v978
      %v980 = vrot.slane %v979, 2
      %v981 = vmax.f32 %v979, %v980
      %v982 = vrot.slane %v981, 1
      %v983 = vmax.f32 %v981, %v982
      %v984 = vsel %vm657, %v303, -inf
      %v985 = vrot.slane %v984, 4
      %v986 = vmax.f32 %v984, %v985
      %v987 = vrot.slane %v986, 2
      %v988 = vmax.f32 %v986, %v987
      %v989 = vrot.slane %v988, 1
      %v990 = vmax.f32 %v988, %v989
      %vm991 = vcmask 62466
      %v992 = vsel %vm991, %v289, -inf
      %v993 = vrot.slane %v992, 4
      %v994 = vmax.f32 %v992, %v993
      %v995 = vrot.slane %v994, 2
      %v996 = vmax.f32 %v994, %v995
      %v997 = vrot.slane %v996, 1
      %v998 = vmax.f32 %v996, %v997
      %v999 = vsel %vm991, %v291, -inf
      %v1000 = vrot.slane %v999, 4
      %v1001 = vmax.f32 %v999, %v1000
      %v1002 = vrot.slane %v1001, 2
      %v1003 = vmax.f32 %v1001, %v1002
      %v1004 = vrot.slane %v1003, 1
      %v1005 = vmax.f32 %v1003, %v1004
      %v1006 = vsel %vm991, %v293, -inf
      %v1007 = vrot.slane %v1006, 4
      %v1008 = vmax.f32 %v1006, %v1007
      %v1009 = vrot.slane %v1008, 2
      %v1010 = vmax.f32 %v1008, %v1009
      %v1011 = vrot.slane %v1010, 1
      %v1012 = vmax.f32 %v1010, %v1011
      %v1013 = vsel %vm991, %v295, -inf
      %v1014 = vrot.slane %v1013, 4
      %v1015 = vmax.f32 %v1013, %v1014
      %v1016 = vrot.slane %v1015, 2
      %v1017 = vmax.f32 %v1015, %v1016
      %v1018 = vrot.slane %v1017, 1
      %v1019 = vmax.f32 %v1017, %v1018
      %v1020 = vsel %vm991, %v297, -inf
      %v1021 = vrot.slane %v1020, 4
      %v1022 = vmax.f32 %v1020, %v1021
      %v1023 = vrot.slane %v1022, 2
      %v1024 = vmax.f32 %v1022, %v1023
      %v1025 = vrot.slane %v1024, 1
      %v1026 = vmax.f32 %v1024, %v1025
      %v1027 = vsel %vm991, %v299, -inf
      %v1028 = vrot.slane %v1027, 4
      %v1029 = vmax.f32 %v1027, %v1028
      %v1030 = vrot.slane %v1029, 2
      %v1031 = vmax.f32 %v1029, %v1030
      %v1032 = vrot.slane %v1031, 1
      %v1033 = vmax.f32 %v1031, %v1032
      %v1034 = vsel %vm991, %v301, -inf
      %v1035 = vrot.slane %v1034, 4
      %v1036 = vmax.f32 %v1034, %v1035
      %v1037 = vrot.slane %v1036, 2
      %v1038 = vmax.f32 %v1036, %v1037
      %v1039 = vrot.slane %v1038, 1
      %v1040 = vmax.f32 %v1038, %v1039
      %v1041 = vsel %vm991, %v303, -inf
      %v1042 = vrot.slane %v1041, 4
      %v1043 = vmax.f32 %v1041, %v1042
      %v1044 = vrot.slane %v1043, 2
      %v1045 = vmax.f32 %v1043, %v1044
      %v1046 = vrot.slane %v1045, 1
      %v1047 = vmax.f32 %v1045, %v1046
      %v1048 = vrot.slane %v656, 4
      %v1049 = vmax.f32 %v656, %v1048
      %v1050 = vrot.slane %v1049, 2
      %v1051 = vmax.f32 %v1049, %v1050
      %v1052 = vrot.slane %v1051, 1
      %v1053 = vmax.f32 %v1051, %v1052
      %v1054 = vrot.slane %v666, 4
      %v1055 = vmax.f32 %v666, %v1054
      %v1056 = vrot.slane %v1055, 2
      %v1057 = vmax.f32 %v1055, %v1056
      %v1058 = vrot.slane %v1057, 1
      %v1059 = vmax.f32 %v1057, %v1058
      %v1060 = vrot.slane %v675, 4
      %v1061 = vmax.f32 %v675, %v1060
      %v1062 = vrot.slane %v1061, 2
      %v1063 = vmax.f32 %v1061, %v1062
      %v1064 = vrot.slane %v1063, 1
      %v1065 = vmax.f32 %v1063, %v1064
      %v1066 = vrot.slane %v684, 4
      %v1067 = vmax.f32 %v684, %v1066
      %v1068 = vrot.slane %v1067, 2
      %v1069 = vmax.f32 %v1067, %v1068
      %v1070 = vrot.slane %v1069, 1
      %v1071 = vmax.f32 %v1069, %v1070
      %v1072 = vrot.slane %v693, 4
      %v1073 = vmax.f32 %v693, %v1072
      %v1074 = vrot.slane %v1073, 2
      %v1075 = vmax.f32 %v1073, %v1074
      %v1076 = vrot.slane %v1075, 1
      %v1077 = vmax.f32 %v1075, %v1076
      %v1078 = vrot.slane %v702, 4
      %v1079 = vmax.f32 %v702, %v1078
      %v1080 = vrot.slane %v1079, 2
      %v1081 = vmax.f32 %v1079, %v1080
      %v1082 = vrot.slane %v1081, 1
      %v1083 = vmax.f32 %v1081, %v1082
      %v1084 = vrot.slane %v711, 4
      %v1085 = vmax.f32 %v711, %v1084
      %v1086 = vrot.slane %v1085, 2
      %v1087 = vmax.f32 %v1085, %v1086
      %v1088 = vrot.slane %v1087, 1
      %v1089 = vmax.f32 %v1087, %v1088
      %v1090 = vrot.slane %v720, 4
      %v1091 = vmax.f32 %v720, %v1090
      %v1092 = vrot.slane %v1091, 2
      %v1093 = vmax.f32 %v1091, %v1092
      %v1094 = vrot.slane %v1093, 1
      %v1095 = vmax.f32 %v1093, %v1094
      %v1096 = vrot.slane %v658, 4
      %v1097 = vmax.f32 %v658, %v1096
      %v1098 = vrot.slane %v1097, 2
      %v1099 = vmax.f32 %v1097, %v1098
      %v1100 = vrot.slane %v1099, 1
      %v1101 = vmax.f32 %v1099, %v1100
      %v1102 = vrot.slane %v667, 4
      %v1103 = vmax.f32 %v667, %v1102
      %v1104 = vrot.slane %v1103, 2
      %v1105 = vmax.f32 %v1103, %v1104
      %v1106 = vrot.slane %v1105, 1
      %v1107 = vmax.f32 %v1105, %v1106
      %v1108 = vrot.slane %v676, 4
      %v1109 = vmax.f32 %v676, %v1108
      %v1110 = vrot.slane %v1109, 2
      %v1111 = vmax.f32 %v1109, %v1110
      %v1112 = vrot.slane %v1111, 1
      %v1113 = vmax.f32 %v1111, %v1112
      %v1114 = vrot.slane %v685, 4
      %v1115 = vmax.f32 %v685, %v1114
      %v1116 = vrot.slane %v1115, 2
      %v1117 = vmax.f32 %v1115, %v1116
      %v1118 = vrot.slane %v1117, 1
      %v1119 = vmax.f32 %v1117, %v1118
      %v1120 = vrot.slane %v694, 4
      %v1121 = vmax.f32 %v694, %v1120
      %v1122 = vrot.slane %v1121, 2
      %v1123 = vmax.f32 %v1121, %v1122
      %v1124 = vrot.slane %v1123, 1
      %v1125 = vmax.f32 %v1123, %v1124
      %v1126 = vrot.slane %v703, 4
      %v1127 = vmax.f32 %v703, %v1126
      %v1128 = vrot.slane %v1127, 2
      %v1129 = vmax.f32 %v1127, %v1128
      %v1130 = vrot.slane %v1129, 1
      %v1131 = vmax.f32 %v1129, %v1130
      %v1132 = vrot.slane %v712, 4
      %v1133 = vmax.f32 %v712, %v1132
      %v1134 = vrot.slane %v1133, 2
      %v1135 = vmax.f32 %v1133, %v1134
      %v1136 = vrot.slane %v1135, 1
      %v1137 = vmax.f32 %v1135, %v1136
      %v1138 = vrot.slane %v721, 4
      %v1139 = vmax.f32 %v721, %v1138
      %v1140 = vrot.slane %v1139, 2
      %v1141 = vmax.f32 %v1139, %v1140
      %v1142 = vrot.slane %v1141, 1
      %v1143 = vmax.f32 %v1141, %v1142
      %v1144 = vsel %vm991, %v290, -inf
      %v1145 = vrot.slane %v1144, 4
      %v1146 = vmax.f32 %v1144, %v1145
      %v1147 = vrot.slane %v1146, 2
      %v1148 = vmax.f32 %v1146, %v1147
      %v1149 = vrot.slane %v1148, 1
      %v1150 = vmax.f32 %v1148, %v1149
      %v1151 = vsel %vm991, %v292, -inf
      %v1152 = vrot.slane %v1151, 4
      %v1153 = vmax.f32 %v1151, %v1152
      %v1154 = vrot.slane %v1153, 2
      %v1155 = vmax.f32 %v1153, %v1154
      %v1156 = vrot.slane %v1155, 1
      %v1157 = vmax.f32 %v1155, %v1156
      %v1158 = vsel %vm991, %v294, -inf
      %v1159 = vrot.slane %v1158, 4
      %v1160 = vmax.f32 %v1158, %v1159
      %v1161 = vrot.slane %v1160, 2
      %v1162 = vmax.f32 %v1160, %v1161
      %v1163 = vrot.slane %v1162, 1
      %v1164 = vmax.f32 %v1162, %v1163
      %v1165 = vsel %vm991, %v296, -inf
      %v1166 = vrot.slane %v1165, 4
      %v1167 = vmax.f32 %v1165, %v1166
      %v1168 = vrot.slane %v1167, 2
      %v1169 = vmax.f32 %v1167, %v1168
      %v1170 = vrot.slane %v1169, 1
      %v1171 = vmax.f32 %v1169, %v1170
      %v1172 = vsel %vm991, %v298, -inf
      %v1173 = vrot.slane %v1172, 4
      %v1174 = vmax.f32 %v1172, %v1173
      %v1175 = vrot.slane %v1174, 2
      %v1176 = vmax.f32 %v1174, %v1175
      %v1177 = vrot.slane %v1176, 1
      %v1178 = vmax.f32 %v1176, %v1177
      %v1179 = vsel %vm991, %v300, -inf
      %v1180 = vrot.slane %v1179, 4
      %v1181 = vmax.f32 %v1179, %v1180
      %v1182 = vrot.slane %v1181, 2
      %v1183 = vmax.f32 %v1181, %v1182
      %v1184 = vrot.slane %v1183, 1
      %v1185 = vmax.f32 %v1183, %v1184
      %v1186 = vsel %vm991, %v302, -inf
      %v1187 = vrot.slane %v1186, 4
      %v1188 = vmax.f32 %v1186, %v1187
      %v1189 = vrot.slane %v1188, 2
      %v1190 = vmax.f32 %v1188, %v1189
      %v1191 = vrot.slane %v1190, 1
      %v1192 = vmax.f32 %v1190, %v1191
      %v1193 = vsel %vm991, %v304, -inf
      %v1194 = vrot.slane %v1193, 4
      %v1195 = vmax.f32 %v1193, %v1194
      %v1196 = vrot.slane %v1195, 2
      %v1197 = vmax.f32 %v1195, %v1196
      %v1198 = vrot.slane %v1197, 1
      %v1199 = vmax.f32 %v1197, %v1198
      %v1200 = vsel %vm655, %v290, -inf
      %v1201 = vrot.slane %v1200, 4
      %v1202 = vmax.f32 %v1200, %v1201
      %v1203 = vrot.slane %v1202, 2
      %v1204 = vmax.f32 %v1202, %v1203
      %v1205 = vrot.slane %v1204, 1
      %v1206 = vmax.f32 %v1204, %v1205
      %v1207 = vsel %vm655, %v292, -inf
      %v1208 = vrot.slane %v1207, 4
      %v1209 = vmax.f32 %v1207, %v1208
      %v1210 = vrot.slane %v1209, 2
      %v1211 = vmax.f32 %v1209, %v1210
      %v1212 = vrot.slane %v1211, 1
      %v1213 = vmax.f32 %v1211, %v1212
      %v1214 = vsel %vm655, %v294, -inf
      %v1215 = vrot.slane %v1214, 4
      %v1216 = vmax.f32 %v1214, %v1215
      %v1217 = vrot.slane %v1216, 2
      %v1218 = vmax.f32 %v1216, %v1217
      %v1219 = vrot.slane %v1218, 1
      %v1220 = vmax.f32 %v1218, %v1219
      %v1221 = vsel %vm655, %v296, -inf
      %v1222 = vrot.slane %v1221, 4
      %v1223 = vmax.f32 %v1221, %v1222
      %v1224 = vrot.slane %v1223, 2
      %v1225 = vmax.f32 %v1223, %v1224
      %v1226 = vrot.slane %v1225, 1
      %v1227 = vmax.f32 %v1225, %v1226
      %v1228 = vsel %vm655, %v298, -inf
      %v1229 = vrot.slane %v1228, 4
      %v1230 = vmax.f32 %v1228, %v1229
      %v1231 = vrot.slane %v1230, 2
      %v1232 = vmax.f32 %v1230, %v1231
      %v1233 = vrot.slane %v1232, 1
      %v1234 = vmax.f32 %v1232, %v1233
      %v1235 = vsel %vm655, %v300, -inf
      %v1236 = vrot.slane %v1235, 4
      %v1237 = vmax.f32 %v1235, %v1236
      %v1238 = vrot.slane %v1237, 2
      %v1239 = vmax.f32 %v1237, %v1238
      %v1240 = vrot.slane %v1239, 1
      %v1241 = vmax.f32 %v1239, %v1240
      %v1242 = vsel %vm655, %v302, -inf
      %v1243 = vrot.slane %v1242, 4
      %v1244 = vmax.f32 %v1242, %v1243
      %v1245 = vrot.slane %v1244, 2
      %v1246 = vmax.f32 %v1244, %v1245
      %v1247 = vrot.slane %v1246, 1
      %v1248 = vmax.f32 %v1246, %v1247
      %v1249 = vsel %vm655, %v304, -inf
      %v1250 = vrot.slane %v1249, 4
      %v1251 = vmax.f32 %v1249, %v1250
      %v1252 = vrot.slane %v1251, 2
      %v1253 = vmax.f32 %v1251, %v1252
      %v1254 = vrot.slane %v1253, 1
      %v1255 = vmax.f32 %v1253, %v1254
      %1256 = vset.pattern.permute.xlu0 6
      %1257 = vperm.xlu0 %1256, %v380
      %v1258 = vpop.permute.xlu0 %1257
      %vm1259 = vcmp.eq.s32.totalorder %v1258, 1
      %v1268 = vsel %vm393, %v948, %v941
      %v1269 = vsel %vm395, %v955, %v1268
      %v1270 = vsel %vm397, %v962, %v1269
      %v1271 = vsel %vm399, %v969, %v1270
      %v1272 = vsel %vm401, %v976, %v1271
      %v1273 = vsel %vm403, %v983, %v1272
      %v1274 = vsel %vm405, %v990, %v1273
      %v1276 = vsel %vm1259, %v1274, -3.4028235e+38
      %v1277 = vsel %vm306, %v1276, -inf
      %v1278 = vrot.slane %v1277, 4
      %v1279 = vmax.f32 %v1277, %v1278
      %v1280 = vrot.slane %v1279, 2
      %v1281 = vmax.f32 %v1279, %v1280
      %v1282 = vrot.slane %v1281, 1
      %v1283 = vmax.f32 %v1281, %v1282
      %v1292 = vsel %vm393, %v1005, %v998
      %v1293 = vsel %vm395, %v1012, %v1292
      %v1294 = vsel %vm397, %v1019, %v1293
      %v1295 = vsel %vm399, %v1026, %v1294
      %v1296 = vsel %vm401, %v1033, %v1295
      %v1297 = vsel %vm403, %v1040, %v1296
      %v1298 = vsel %vm405, %v1047, %v1297
      %v1300 = vsel %vm1259, %v1298, -3.4028235e+38
      %v1301 = vsel %vm306, %v1300, -inf
      %v1302 = vrot.slane %v1301, 4
      %v1303 = vmax.f32 %v1301, %v1302
      %v1304 = vrot.slane %v1303, 2
      %v1305 = vmax.f32 %v1303, %v1304
      %v1306 = vrot.slane %v1305, 1
      %v1307 = vmax.f32 %v1305, %v1306
      %v1316 = vsel %vm393, %v1059, %v1053
      %v1317 = vsel %vm395, %v1065, %v1316
      %v1318 = vsel %vm397, %v1071, %v1317
      %v1319 = vsel %vm399, %v1077, %v1318
      %v1320 = vsel %vm401, %v1083, %v1319
      %v1321 = vsel %vm403, %v1089, %v1320
      %v1322 = vsel %vm405, %v1095, %v1321
      %v1324 = vsel %vm1259, %v1322, -3.4028235e+38
      %v1325 = vsel %vm306, %v1324, -inf
      %v1326 = vrot.slane %v1325, 4
      %v1327 = vmax.f32 %v1325, %v1326
      %v1328 = vrot.slane %v1327, 2
      %v1329 = vmax.f32 %v1327, %v1328
      %v1330 = vrot.slane %v1329, 1
      %v1331 = vmax.f32 %v1329, %v1330
      %v1340 = vsel %vm393, %v1107, %v1101
      %v1341 = vsel %vm395, %v1113, %v1340
      %v1342 = vsel %vm397, %v1119, %v1341
      %v1343 = vsel %vm399, %v1125, %v1342
      %v1344 = vsel %vm401, %v1131, %v1343
      %v1345 = vsel %vm403, %v1137, %v1344
      %v1346 = vsel %vm405, %v1143, %v1345
      %v1348 = vsel %vm1259, %v1346, -3.4028235e+38
      %v1349 = vsel %vm306, %v1348, -inf
      %v1350 = vrot.slane %v1349, 4
      %v1351 = vmax.f32 %v1349, %v1350
      %v1352 = vrot.slane %v1351, 2
      %v1353 = vmax.f32 %v1351, %v1352
      %v1354 = vrot.slane %v1353, 1
      %v1355 = vmax.f32 %v1353, %v1354
      %v1364 = vsel %vm393, %v1157, %v1150
      %v1365 = vsel %vm395, %v1164, %v1364
      %v1366 = vsel %vm397, %v1171, %v1365
      %v1367 = vsel %vm399, %v1178, %v1366
      %v1368 = vsel %vm401, %v1185, %v1367
      %v1369 = vsel %vm403, %v1192, %v1368
      %v1370 = vsel %vm405, %v1199, %v1369
      %v1372 = vsel %vm1259, %v1370, -3.4028235e+38
      %v1373 = vsel %vm306, %v1372, -inf
      %v1374 = vrot.slane %v1373, 4
      %v1375 = vmax.f32 %v1373, %v1374
      %v1376 = vrot.slane %v1375, 2
      %v1377 = vmax.f32 %v1375, %v1376
      %v1378 = vrot.slane %v1377, 1
      %v1379 = vmax.f32 %v1377, %v1378
      %v1388 = vsel %vm393, %v1213, %v1206
      %v1389 = vsel %vm395, %v1220, %v1388
      %v1390 = vsel %vm397, %v1227, %v1389
      %v1391 = vsel %vm399, %v1234, %v1390
      %v1392 = vsel %vm401, %v1241, %v1391
      %v1393 = vsel %vm403, %v1248, %v1392
      %v1394 = vsel %vm405, %v1255, %v1393
      %v1396 = vsel %vm1259, %v1394, -3.4028235e+38
      %v1397 = vsel %vm306, %v1396, -inf
      %v1398 = vrot.slane %v1397, 4
      %v1399 = vmax.f32 %v1397, %v1398
      %v1400 = vrot.slane %v1399, 2
      %v1401 = vmax.f32 %v1399, %v1400
      %v1402 = vrot.slane %v1401, 1
      %v1403 = vmax.f32 %v1401, %v1402
      %1404 = vset.pattern.permute.xlu0 7
      %1405 = vperm.xlu0 %1404, %v380
      %v1406 = vpop.permute.xlu0 %1405
      %vm1407 = vcmp.eq.s32.totalorder %v1406, 1
      %v1408 = vsel %vm1407, %v1274, -3.4028235e+38
      %v1409 = vsel %vm306, %v1408, -inf
      %v1410 = vrot.slane %v1409, 4
      %v1411 = vmax.f32 %v1409, %v1410
      %v1412 = vrot.slane %v1411, 2
      %v1413 = vmax.f32 %v1411, %v1412
      %v1414 = vrot.slane %v1413, 1
      %v1415 = vmax.f32 %v1413, %v1414
      %v1416 = vsel %vm1407, %v1298, -3.4028235e+38
      %v1417 = vsel %vm306, %v1416, -inf
      %v1418 = vrot.slane %v1417, 4
      %v1419 = vmax.f32 %v1417, %v1418
      %v1420 = vrot.slane %v1419, 2
      %v1421 = vmax.f32 %v1419, %v1420
      %v1422 = vrot.slane %v1421, 1
      %v1423 = vmax.f32 %v1421, %v1422
      %v1424 = vsel %vm1407, %v1322, -3.4028235e+38
      %v1425 = vsel %vm306, %v1424, -inf
      %v1426 = vrot.slane %v1425, 4
      %v1427 = vmax.f32 %v1425, %v1426
      %v1428 = vrot.slane %v1427, 2
      %v1429 = vmax.f32 %v1427, %v1428
      %v1430 = vrot.slane %v1429, 1
      %v1431 = vmax.f32 %v1429, %v1430
      %v1432 = vsel %vm1407, %v1346, -3.4028235e+38
      %v1433 = vsel %vm306, %v1432, -inf
      %v1434 = vrot.slane %v1433, 4
      %v1435 = vmax.f32 %v1433, %v1434
      %v1436 = vrot.slane %v1435, 2
      %v1437 = vmax.f32 %v1435, %v1436
      %v1438 = vrot.slane %v1437, 1
      %v1439 = vmax.f32 %v1437, %v1438
      %v1440 = vsel %vm1407, %v1370, -3.4028235e+38
      %v1441 = vsel %vm306, %v1440, -inf
      %v1442 = vrot.slane %v1441, 4
      %v1443 = vmax.f32 %v1441, %v1442
      %v1444 = vrot.slane %v1443, 2
      %v1445 = vmax.f32 %v1443, %v1444
      %v1446 = vrot.slane %v1445, 1
      %v1447 = vmax.f32 %v1445, %v1446
      %v1448 = vsel %vm1407, %v1394, -3.4028235e+38
      %v1449 = vsel %vm306, %v1448, -inf
      %v1450 = vrot.slane %v1449, 4
      %v1451 = vmax.f32 %v1449, %v1450
      %v1452 = vrot.slane %v1451, 2
      %v1453 = vmax.f32 %v1451, %v1452
      %v1454 = vrot.slane %v1453, 1
      %v1455 = vmax.f32 %v1453, %v1454
      %1456 = vset.pattern.permute.xlu0 8
      %1457 = vperm.xlu0 %1456, %v380
      %v1458 = vpop.permute.xlu0 %1457
      %vm1459 = vcmp.eq.s32.totalorder %v1458, 1
      %v1460 = vsel %vm1459, %v1274, -3.4028235e+38
      %v1461 = vsel %vm306, %v1460, -inf
      %v1462 = vrot.slane %v1461, 4
      %v1463 = vmax.f32 %v1461, %v1462
      %v1464 = vrot.slane %v1463, 2
      %v1465 = vmax.f32 %v1463, %v1464
      %v1466 = vrot.slane %v1465, 1
      %v1467 = vmax.f32 %v1465, %v1466
      %v1468 = vsel %vm1459, %v1298, -3.4028235e+38
      %v1469 = vsel %vm306, %v1468, -inf
      %v1470 = vrot.slane %v1469, 4
      %v1471 = vmax.f32 %v1469, %v1470
      %v1472 = vrot.slane %v1471, 2
      %v1473 = vmax.f32 %v1471, %v1472
      %v1474 = vrot.slane %v1473, 1
      %v1475 = vmax.f32 %v1473, %v1474
      %v1476 = vsel %vm1459, %v1322, -3.4028235e+38
      %v1477 = vsel %vm306, %v1476, -inf
      %v1478 = vrot.slane %v1477, 4
      %v1479 = vmax.f32 %v1477, %v1478
      %v1480 = vrot.slane %v1479, 2
      %v1481 = vmax.f32 %v1479, %v1480
      %v1482 = vrot.slane %v1481, 1
      %v1483 = vmax.f32 %v1481, %v1482
      %v1484 = vsel %vm1459, %v1346, -3.4028235e+38
      %v1485 = vsel %vm306, %v1484, -inf
      %v1486 = vrot.slane %v1485, 4
      %v1487 = vmax.f32 %v1485, %v1486
      %v1488 = vrot.slane %v1487, 2
      %v1489 = vmax.f32 %v1487, %v1488
      %v1490 = vrot.slane %v1489, 1
      %v1491 = vmax.f32 %v1489, %v1490
      %v1492 = vsel %vm1459, %v1370, -3.4028235e+38
      %v1493 = vsel %vm306, %v1492, -inf
      %v1494 = vrot.slane %v1493, 4
      %v1495 = vmax.f32 %v1493, %v1494
      %v1496 = vrot.slane %v1495, 2
      %v1497 = vmax.f32 %v1495, %v1496
      %v1498 = vrot.slane %v1497, 1
      %v1499 = vmax.f32 %v1497, %v1498
      %v1500 = vsel %vm1459, %v1394, -3.4028235e+38
      %v1501 = vsel %vm306, %v1500, -inf
      %v1502 = vrot.slane %v1501, 4
      %v1503 = vmax.f32 %v1501, %v1502
      %v1504 = vrot.slane %v1503, 2
      %v1505 = vmax.f32 %v1503, %v1504
      %v1506 = vrot.slane %v1505, 1
      %v1507 = vmax.f32 %v1505, %v1506
      %1508 = vset.pattern.permute.xlu0 9
      %1509 = vperm.xlu0 %1508, %v380
      %v1510 = vpop.permute.xlu0 %1509
      %vm1511 = vcmp.eq.s32.totalorder %v1510, 1
      %v1512 = vsel %vm1511, %v1274, -3.4028235e+38
      %v1513 = vsel %vm306, %v1512, -inf
      %v1514 = vrot.slane %v1513, 4
      %v1515 = vmax.f32 %v1513, %v1514
      %v1516 = vrot.slane %v1515, 2
      %v1517 = vmax.f32 %v1515, %v1516
      %v1518 = vrot.slane %v1517, 1
      %v1519 = vmax.f32 %v1517, %v1518
      %v1520 = vsel %vm1511, %v1298, -3.4028235e+38
      %v1521 = vsel %vm306, %v1520, -inf
      %v1522 = vrot.slane %v1521, 4
      %v1523 = vmax.f32 %v1521, %v1522
      %v1524 = vrot.slane %v1523, 2
      %v1525 = vmax.f32 %v1523, %v1524
      %v1526 = vrot.slane %v1525, 1
      %v1527 = vmax.f32 %v1525, %v1526
      %v1528 = vsel %vm1511, %v1322, -3.4028235e+38
      %v1529 = vsel %vm306, %v1528, -inf
      %v1530 = vrot.slane %v1529, 4
      %v1531 = vmax.f32 %v1529, %v1530
      %v1532 = vrot.slane %v1531, 2
      %v1533 = vmax.f32 %v1531, %v1532
      %v1534 = vrot.slane %v1533, 1
      %v1535 = vmax.f32 %v1533, %v1534
      %v1536 = vsel %vm1511, %v1346, -3.4028235e+38
      %v1537 = vsel %vm306, %v1536, -inf
      %v1538 = vrot.slane %v1537, 4
      %v1539 = vmax.f32 %v1537, %v1538
      %v1540 = vrot.slane %v1539, 2
      %v1541 = vmax.f32 %v1539, %v1540
      %v1542 = vrot.slane %v1541, 1
      %v1543 = vmax.f32 %v1541, %v1542
      %v1544 = vsel %vm1511, %v1370, -3.4028235e+38
      %v1545 = vsel %vm306, %v1544, -inf
      %v1546 = vrot.slane %v1545, 4
      %v1547 = vmax.f32 %v1545, %v1546
      %v1548 = vrot.slane %v1547, 2
      %v1549 = vmax.f32 %v1547, %v1548
      %v1550 = vrot.slane %v1549, 1
      %v1551 = vmax.f32 %v1549, %v1550
      %v1552 = vsel %vm1511, %v1394, -3.4028235e+38
      %v1553 = vsel %vm306, %v1552, -inf
      %v1554 = vrot.slane %v1553, 4
      %v1555 = vmax.f32 %v1553, %v1554
      %v1556 = vrot.slane %v1555, 2
      %v1557 = vmax.f32 %v1555, %v1556
      %v1558 = vrot.slane %v1557, 1
      %v1559 = vmax.f32 %v1557, %v1558
      %1560 = vset.pattern.permute.xlu0 10
      %1561 = vperm.xlu0 %1560, %v380
      %v1562 = vpop.permute.xlu0 %1561
      %vm1563 = vcmp.eq.s32.totalorder %v1562, 1
      %v1564 = vsel %vm1563, %v1274, -3.4028235e+38
      %v1565 = vsel %vm306, %v1564, -inf
      %v1566 = vrot.slane %v1565, 4
      %v1567 = vmax.f32 %v1565, %v1566
      %v1568 = vrot.slane %v1567, 2
      %v1569 = vmax.f32 %v1567, %v1568
      %v1570 = vrot.slane %v1569, 1
      %v1571 = vmax.f32 %v1569, %v1570
      %v1572 = vsel %vm1563, %v1298, -3.4028235e+38
      %v1573 = vsel %vm306, %v1572, -inf
      %v1574 = vrot.slane %v1573, 4
      %v1575 = vmax.f32 %v1573, %v1574
      %v1576 = vrot.slane %v1575, 2
      %v1577 = vmax.f32 %v1575, %v1576
      %v1578 = vrot.slane %v1577, 1
      %v1579 = vmax.f32 %v1577, %v1578
      %v1580 = vsel %vm1563, %v1322, -3.4028235e+38
      %v1581 = vsel %vm306, %v1580, -inf
      %v1582 = vrot.slane %v1581, 4
      %v1583 = vmax.f32 %v1581, %v1582
      %v1584 = vrot.slane %v1583, 2
      %v1585 = vmax.f32 %v1583, %v1584
      %v1586 = vrot.slane %v1585, 1
      %v1587 = vmax.f32 %v1585, %v1586
      %v1588 = vsel %vm1563, %v1346, -3.4028235e+38
      %v1589 = vsel %vm306, %v1588, -inf
      %v1590 = vrot.slane %v1589, 4
      %v1591 = vmax.f32 %v1589, %v1590
      %v1592 = vrot.slane %v1591, 2
      %v1593 = vmax.f32 %v1591, %v1592
      %v1594 = vrot.slane %v1593, 1
      %v1595 = vmax.f32 %v1593, %v1594
      %v1596 = vsel %vm1563, %v1370, -3.4028235e+38
      %v1597 = vsel %vm306, %v1596, -inf
      %v1598 = vrot.slane %v1597, 4
      %v1599 = vmax.f32 %v1597, %v1598
      %v1600 = vrot.slane %v1599, 2
      %v1601 = vmax.f32 %v1599, %v1600
      %v1602 = vrot.slane %v1601, 1
      %v1603 = vmax.f32 %v1601, %v1602
      %v1604 = vsel %vm1563, %v1394, -3.4028235e+38
      %v1605 = vsel %vm306, %v1604, -inf
      %v1606 = vrot.slane %v1605, 4
      %v1607 = vmax.f32 %v1605, %v1606
      %v1608 = vrot.slane %v1607, 2
      %v1609 = vmax.f32 %v1607, %v1608
      %v1610 = vrot.slane %v1609, 1
      %v1611 = vmax.f32 %v1609, %v1610
      %1612 = vset.pattern.permute.xlu0 11
      %1613 = vperm.xlu0 %1612, %v380
      %v1614 = vpop.permute.xlu0 %1613
      %vm1615 = vcmp.eq.s32.totalorder %v1614, 1
      %v1616 = vsel %vm1615, %v1274, -3.4028235e+38
      %v1617 = vsel %vm306, %v1616, -inf
      %v1618 = vrot.slane %v1617, 4
      %v1619 = vmax.f32 %v1617, %v1618
      %v1620 = vrot.slane %v1619, 2
      %v1621 = vmax.f32 %v1619, %v1620
      %v1622 = vrot.slane %v1621, 1
      %v1623 = vmax.f32 %v1621, %v1622
      %v1624 = vsel %vm1615, %v1298, -3.4028235e+38
      %v1625 = vsel %vm306, %v1624, -inf
      %v1626 = vrot.slane %v1625, 4
      %v1627 = vmax.f32 %v1625, %v1626
      %v1628 = vrot.slane %v1627, 2
      %v1629 = vmax.f32 %v1627, %v1628
      %v1630 = vrot.slane %v1629, 1
      %v1631 = vmax.f32 %v1629, %v1630
      %v1632 = vsel %vm1615, %v1322, -3.4028235e+38
      %v1633 = vsel %vm306, %v1632, -inf
      %v1634 = vrot.slane %v1633, 4
      %v1635 = vmax.f32 %v1633, %v1634
      %v1636 = vrot.slane %v1635, 2
      %v1637 = vmax.f32 %v1635, %v1636
      %v1638 = vrot.slane %v1637, 1
      %v1639 = vmax.f32 %v1637, %v1638
      %v1640 = vsel %vm1615, %v1346, -3.4028235e+38
      %v1641 = vsel %vm306, %v1640, -inf
      %v1642 = vrot.slane %v1641, 4
      %v1643 = vmax.f32 %v1641, %v1642
      %v1644 = vrot.slane %v1643, 2
      %v1645 = vmax.f32 %v1643, %v1644
      %v1646 = vrot.slane %v1645, 1
      %v1647 = vmax.f32 %v1645, %v1646
      %v1648 = vsel %vm1615, %v1370, -3.4028235e+38
      %v1649 = vsel %vm306, %v1648, -inf
      %v1650 = vrot.slane %v1649, 4
      %v1651 = vmax.f32 %v1649, %v1650
      %v1652 = vrot.slane %v1651, 2
      %v1653 = vmax.f32 %v1651, %v1652
      %v1654 = vrot.slane %v1653, 1
      %v1655 = vmax.f32 %v1653, %v1654
      %v1656 = vsel %vm1615, %v1394, -3.4028235e+38
      %v1657 = vsel %vm306, %v1656, -inf
      %v1658 = vrot.slane %v1657, 4
      %v1659 = vmax.f32 %v1657, %v1658
      %v1660 = vrot.slane %v1659, 2
      %v1661 = vmax.f32 %v1659, %v1660
      %v1662 = vrot.slane %v1661, 1
      %v1663 = vmax.f32 %v1661, %v1662
      %v1664 = vsel %vm588, %v1283, %v1307
      %v1665 = vsel %vm590, %v1664, %v1331
      %v1666 = vsel %vm592, %v1665, %v1355
      %v1667 = vsel %vm921, %v1666, %v1379
      %v1668 = vsel %vm923, %v1667, %v1403
      %v1669 = vsel %vm925, %v1668, %v1415
      %v1670 = vsel %vm927, %v1669, %v1423
      %v1671 = vsel %vm588, %v1431, %v1439
      %v1672 = vsel %vm590, %v1671, %v1447
      %v1673 = vsel %vm592, %v1672, %v1455
      %v1674 = vsel %vm921, %v1673, %v1467
      %v1675 = vsel %vm923, %v1674, %v1475
      %v1676 = vsel %vm925, %v1675, %v1483
      %v1677 = vsel %vm927, %v1676, %v1491
      %v1678 = vsel %vm588, %v1499, %v1507
      %v1679 = vsel %vm590, %v1678, %v1519
      %v1680 = vsel %vm592, %v1679, %v1527
      %v1681 = vsel %vm921, %v1680, %v1535
      %v1682 = vsel %vm923, %v1681, %v1543
      %v1683 = vsel %vm925, %v1682, %v1551
      %v1684 = vsel %vm927, %v1683, %v1559
      %v1685 = vsel %vm588, %v1571, %v1579
      %v1686 = vsel %vm590, %v1685, %v1587
      %v1687 = vsel %vm592, %v1686, %v1595
      %v1688 = vsel %vm921, %v1687, %v1603
      %v1689 = vsel %vm923, %v1688, %v1611
      %v1690 = vsel %vm925, %v1689, %v1623
      %v1691 = vsel %vm927, %v1690, %v1631
      %v1692 = vsel %vm588, %v1639, %v1647
      %v1693 = vsel %vm590, %v1692, %v1655
      %v1694 = vsel %vm592, %v1693, %v1663
      %v1695 = vld [vmem:[#allocation5] sm:$0xff]
      %v1696 = vld [vmem:[#allocation5 + $0x8] sm:$0xff]
      %v1697 = vld [vmem:[#allocation5 + $0x10] sm:$0xff]
      %v1698 = vld [vmem:[#allocation5 + $0x18] sm:$0xff]
      %v1699 = vld [vmem:[#allocation5 + $0x20] sm:$0xf]
      %v1700 = vmax.f32 %v1695, %v1670
      %v1701 = vmax.f32 %v1696, %v1677
      %v1702 = vmax.f32 %v1697, %v1684
      %v1703 = vmax.f32 %v1698, %v1691
      %v1704 = vmax.f32 %v1699, %v1694
      %1705 = vst.msk [vmem:[#allocation5] sm:$0xff] %vm306, %v1700
      %1706 = vst.msk [vmem:[#allocation5 + $0x8] sm:$0xff] %vm306, %v1701
      %1707 = vst.msk [vmem:[#allocation5 + $0x10] sm:$0xff] %vm306, %v1702
      %1708 = vst.msk [vmem:[#allocation5 + $0x18] sm:$0xff] %vm306, %v1703
      %1709 = vst.msk [vmem:[#allocation5 + $0x20] sm:$0xf] %vm596, %v1704
      %p1710 = scmp.eq.s32.totalorder %s21, 1
      // Predicated region
      $region45: #{tpu_custom_call.1} parent=39 // pred_check
        %p1711 = pneg %p1710
      $region46: #{tpu_custom_call.1} parent=39 // pred_check_branch
        %1713 = sbr.rel (%p1711) target = $region48
      $region47: #{tpu_custom_call.1} parent=39 // pred_region
        %v1714 = vld [vmem:[%s3] sm:$0xff]
        %v1715 = vld [vmem:[%s4] sm:$0x1]
        %v1716 = vld [vmem:[%s2] sm:$0xff]
        %v1717 = vld [vmem:[%s2 + $0x8] sm:$0xff]
        %v1718 = vld [vmem:[#allocation2] sm:$0x1]
        %v1720 = vsel %vm306, %v1718, 0
        %1722 = vmatprep.subr.mxu0 0.0
        %1723 = vmatpush1.msra.mxu0 %v1714
        %1724 = vmatprep.subr.mxu0 0.0
        %1725 = vmatpush1.msra.mxu0 0.0
        %1726 = vmatprep.subr.mxu0 0.0
        %1727 = vmatpush1.msra.mxu0 0.0
        %1728 = vmatprep.subr.mxu0 0.0
        %1729 = vmatpush1.msra.mxu0 0.0
        %1730 = vmatprep.subr.mxu0 0.0
        %1731 = vmatpush1.msra.mxu0 0.0
        %1732 = vmatprep.subr.mxu0 0.0
        %1733 = vmatpush1.msra.mxu0 0.0
        %1734 = vmatprep.subr.mxu0 0.0
        %1735 = vmatpush1.msra.mxu0 0.0
        %1736 = vmatprep.subr.mxu0 0.0
        %1737 = vmatpush1.msra.mxu0 0.0
        %1738 = vmatprep.subr.mxu0 0.0
        %1739 = vmatpush1.msra.mxu0 0.0
        %1740 = vmatprep.subr.mxu0 0.0
        %1741 = vmatpush1.msra.mxu0 0.0
        %1742 = vmatprep.subr.mxu0 0.0
        %1743 = vmatpush1.msra.mxu0 0.0
        %1744 = vmatprep.subr.mxu0 0.0
        %1745 = vmatpush1.msra.mxu0 0.0
        %1746 = vmatprep.subr.mxu0 0.0
        %1747 = vmatpush1.msra.mxu0 0.0
        %1748 = vmatprep.subr.mxu0 0.0
        %1749 = vmatpush1.msra.mxu0 0.0
        %1750 = vmatprep.subr.mxu0 0.0
        %1751 = vmatpush1.msra.mxu0 0.0
        %1752 = vmatprep.subr.mxu0 0.0
        %1753 = vmatpush1.msra.mxu0 0.0
        %1754 = vmatprep.subr.mxu0 0.0
        %1755 = vmatpush1.msra.mxu0 0.0
        %1756 = vmatprep.subr.mxu0 0.0
        %1757 = vmatpush1.msra.mxu0 0.0
        %1758 = vmatprep.subr.mxu0 0.0
        %1759 = vmatpush1.msra.mxu0 0.0
        %1760 = vmatprep.subr.mxu0 0.0
        %1761 = vmatpush1.msra.mxu0 0.0
        %1762 = vmatprep.subr.mxu0 0.0
        %1763 = vmatpush1.msra.mxu0 0.0
        %1764 = vmatprep.subr.mxu0 0.0
        %1765 = vmatpush1.msra.mxu0 0.0
        %1766 = vmatprep.subr.mxu0 0.0
        %1767 = vmatpush1.msra.mxu0 0.0
        %1768 = vmatprep.subr.mxu0 0.0
        %1769 = vmatpush1.msra.mxu0 0.0
        %1770 = vmatprep.subr.mxu0 0.0
        %1771 = vmatpush1.msra.mxu0 0.0
        %1772 = vmatprep.subr.mxu0 0.0
        %1773 = vmatpush1.msra.mxu0 0.0
        %1774 = vmatprep.subr.mxu0 0.0
        %1775 = vmatpush1.msra.mxu0 0.0
        %1776 = vmatprep.subr.mxu0 0.0
        %1777 = vmatpush1.msra.mxu0 0.0
        %1778 = vmatprep.subr.mxu0 0.0
        %1779 = vmatpush1.msra.mxu0 0.0
        %1780 = vmatprep.subr.mxu0 0.0
        %1781 = vmatpush1.msra.mxu0 0.0
        %1782 = vmatprep.subr.mxu0 0.0
        %1783 = vmatpush1.msra.mxu0 0.0
        %1784 = vmatprep.subr.mxu0 0.0
        %1785 = vmatpush1.msra.mxu0 0.0
        %1786 = vmatprep.mubr.f32.mxu0 0.0
        %1787 = vmatmul.mubr.f32.gmra.mrb[0].mxu0 %v1720
        %v1788 = vpop.f32.mrb[0].mxu0
        %v1789 = vadd.f32 %v1715, %v1788
        %v1790 = vpop.f32.mrb[0].mxu0
        %1791 = vdwg.mxu0
        %v1792 = vmax.f32 %v1789, 0.0
        %1794 = vset.pattern.permute.xlu0 0
        %1795 = vperm.xlu0 %1794, %v1716
        %v1796 = vpop.permute.xlu0 %1795
        %1799 = vset.pattern.permute.xlu0 0
        %1800 = vperm.xlu0 %1799, %v1717
        %v1801 = vpop.permute.xlu0 %1800
        %v1803 = vlaneseq
        %v1804 = vshrl.u32 %v1803, 7
        %v1805 = vsub.s32 0, %v1804
        %v1806 = vrot.slane %v1792, %v1805
        %v1807 = vmul.f32 %v1796, %v1806
        %v1808 = vmul.f32 %v1801, %v1806
        %vm1809 = vcmask 15360
        %1810 = vst.msk [vmem:[%s272] sm:$0xff] %vm1809, %v1807
        %1811 = vst.msk [vmem:[%s272 + $0x8] sm:$0xff] %vm1809, %v1808
        %v1812 = vld [vmem:[#allocation3] sm:$0x3]
        %v1814 = vlaneseq
        %v1815 = vshrl.u32 %v1814, 7
        %v1816 = vsub.s32 0, %v1815
        %v1817 = vrot.slane %v1715, %v1816
        %1819 = vrot.lane.b32.xlu0 %v1714, 126
        %v1820 = vpop.permute.xlu0 %1819
        %1822 = vrot.lane.b32.xlu0 %v1817, 126
        %v1823 = vpop.permute.xlu0 %1822
        %v1826 = vsel %vm306, %v1812, 0
        %1828 = vmatprep.subr.mxu0 0.0
        %1829 = vmatpush1.msra.mxu0 %v1820
        %1830 = vmatprep.subr.mxu0 0.0
        %1831 = vmatpush1.msra.mxu0 0.0
        %1832 = vmatprep.subr.mxu0 0.0
        %1833 = vmatpush1.msra.mxu0 0.0
        %1834 = vmatprep.subr.mxu0 0.0
        %1835 = vmatpush1.msra.mxu0 0.0
        %1836 = vmatprep.subr.mxu0 0.0
        %1837 = vmatpush1.msra.mxu0 0.0
        %1838 = vmatprep.subr.mxu0 0.0
        %1839 = vmatpush1.msra.mxu0 0.0
        %1840 = vmatprep.subr.mxu0 0.0
        %1841 = vmatpush1.msra.mxu0 0.0
        %1842 = vmatprep.subr.mxu0 0.0
        %1843 = vmatpush1.msra.mxu0 0.0
        %1844 = vmatprep.subr.mxu0 0.0
        %1845 = vmatpush1.msra.mxu0 0.0
        %1846 = vmatprep.subr.mxu0 0.0
        %1847 = vmatpush1.msra.mxu0 0.0
        %1848 = vmatprep.subr.mxu0 0.0
        %1849 = vmatpush1.msra.mxu0 0.0
        %1850 = vmatprep.subr.mxu0 0.0
        %1851 = vmatpush1.msra.mxu0 0.0
        %1852 = vmatprep.subr.mxu0 0.0
        %1853 = vmatpush1.msra.mxu0 0.0
        %1854 = vmatprep.subr.mxu0 0.0
        %1855 = vmatpush1.msra.mxu0 0.0
        %1856 = vmatprep.subr.mxu0 0.0
        %1857 = vmatpush1.msra.mxu0 0.0
        %1858 = vmatprep.subr.mxu0 0.0
        %1859 = vmatpush1.msra.mxu0 0.0
        %1860 = vmatprep.subr.mxu0 0.0
        %1861 = vmatpush1.msra.mxu0 0.0
        %1862 = vmatprep.subr.mxu0 0.0
        %1863 = vmatpush1.msra.mxu0 0.0
        %1864 = vmatprep.subr.mxu0 0.0
        %1865 = vmatpush1.msra.mxu0 0.0
        %1866 = vmatprep.subr.mxu0 0.0
        %1867 = vmatpush1.msra.mxu0 0.0
        %1868 = vmatprep.subr.mxu0 0.0
        %1869 = vmatpush1.msra.mxu0 0.0
        %1870 = vmatprep.subr.mxu0 0.0
        %1871 = vmatpush1.msra.mxu0 0.0
        %1872 = vmatprep.subr.mxu0 0.0
        %1873 = vmatpush1.msra.mxu0 0.0
        %1874 = vmatprep.subr.mxu0 0.0
        %1875 = vmatpush1.msra.mxu0 0.0
        %1876 = vmatprep.subr.mxu0 0.0
        %1877 = vmatpush1.msra.mxu0 0.0
        %1878 = vmatprep.subr.mxu0 0.0
        %1879 = vmatpush1.msra.mxu0 0.0
        %1880 = vmatprep.subr.mxu0 0.0
        %1881 = vmatpush1.msra.mxu0 0.0
        %1882 = vmatprep.subr.mxu0 0.0
        %1883 = vmatpush1.msra.mxu0 0.0
        %1884 = vmatprep.subr.mxu0 0.0
        %1885 = vmatpush1.msra.mxu0 0.0
        %1886 = vmatprep.subr.mxu0 0.0
        %1887 = vmatpush1.msra.mxu0 0.0
        %1888 = vmatprep.subr.mxu0 0.0
        %1889 = vmatpush1.msra.mxu0 0.0
        %1890 = vmatprep.subr.mxu0 0.0
        %1891 = vmatpush1.msra.mxu0 0.0
        %1892 = vmatprep.mubr.f32.mxu0 0.0
        %1893 = vmatmul.mubr.f32.gmra.mrb[0].mxu0 %v1826
        %v1894 = vpop.f32.mrb[0].mxu0
        %v1895 = vadd.f32 %v1823, %v1894
        %v1896 = vpop.f32.mrb[0].mxu0
        %1897 = vdwg.mxu0
        %v1898 = vmax.f32 %v1895, 0.0
        %1899 = vset.pattern.permute.xlu0 1
        %1900 = vperm.xlu0 %1899, %v1716
        %v1901 = vpop.permute.xlu0 %1900
        %1903 = vset.pattern.permute.xlu0 1
        %1904 = vperm.xlu0 %1903, %v1717
        %v1905 = vpop.permute.xlu0 %1904
        %v1907 = vlaneseq
        %v1908 = vshrl.u32 %v1907, 7
        %v1909 = vsub.s32 0, %v1908
        %v1910 = vrot.slane %v1898, %v1909
        %v1911 = vmul.f32 %v1901, %v1910
        %v1912 = vmul.f32 %v1905, %v1910
        %1913 = vset.pattern.permute.xlu0 2
        %1914 = vperm.xlu0 %1913, %v1716
        %v1915 = vpop.permute.xlu0 %1914
        %1917 = vset.pattern.permute.xlu0 2
        %1918 = vperm.xlu0 %1917, %v1717
        %v1919 = vpop.permute.xlu0 %1918
        %v1921 = vlaneseq
        %v1922 = vshrl.u32 %v1921, 7
        %v1923 = vsub.s32 1, %v1922
        %v1924 = vrot.slane %v1898, %v1923
        %v1925 = vmul.f32 %v1915, %v1924
        %v1926 = vmul.f32 %v1919, %v1924
        %v1927 = vadd.f32 %v1911, %v1925
        %v1928 = vadd.f32 %v1912, %v1926
        %s1929 = scalar_lea.vmem %s272, 16
        %1930 = vst.msk [vmem:[%s1929] sm:$0xff] %vm1809, %v1927
        %1931 = vst.msk [vmem:[%s1929 + $0x8] sm:$0xff] %vm1809, %v1928
        %v1932 = vld [vmem:[#allocation3 + $0x2] sm:$0x3]
        %v1934 = vsel %vm306, %v1932, 0
        %1936 = vmatprep.subr.mxu0 0.0
        %1937 = vmatpush1.msra.mxu0 %v1820
        %1938 = vmatprep.subr.mxu0 0.0
        %1939 = vmatpush1.msra.mxu0 0.0
        %1940 = vmatprep.subr.mxu0 0.0
        %1941 = vmatpush1.msra.mxu0 0.0
        %1942 = vmatprep.subr.mxu0 0.0
        %1943 = vmatpush1.msra.mxu0 0.0
        %1944 = vmatprep.subr.mxu0 0.0
        %1945 = vmatpush1.msra.mxu0 0.0
        %1946 = vmatprep.subr.mxu0 0.0
        %1947 = vmatpush1.msra.mxu0 0.0
        %1948 = vmatprep.subr.mxu0 0.0
        %1949 = vmatpush1.msra.mxu0 0.0
        %1950 = vmatprep.subr.mxu0 0.0
        %1951 = vmatpush1.msra.mxu0 0.0
        %1952 = vmatprep.subr.mxu0 0.0
        %1953 = vmatpush1.msra.mxu0 0.0
        %1954 = vmatprep.subr.mxu0 0.0
        %1955 = vmatpush1.msra.mxu0 0.0
        %1956 = vmatprep.subr.mxu0 0.0
        %1957 = vmatpush1.msra.mxu0 0.0
        %1958 = vmatprep.subr.mxu0 0.0
        %1959 = vmatpush1.msra.mxu0 0.0
        %1960 = vmatprep.subr.mxu0 0.0
        %1961 = vmatpush1.msra.mxu0 0.0
        %1962 = vmatprep.subr.mxu0 0.0
        %1963 = vmatpush1.msra.mxu0 0.0
        %1964 = vmatprep.subr.mxu0 0.0
        %1965 = vmatpush1.msra.mxu0 0.0
        %1966 = vmatprep.subr.mxu0 0.0
        %1967 = vmatpush1.msra.mxu0 0.0
        %1968 = vmatprep.subr.mxu0 0.0
        %1969 = vmatpush1.msra.mxu0 0.0
        %1970 = vmatprep.subr.mxu0 0.0
        %1971 = vmatpush1.msra.mxu0 0.0
        %1972 = vmatprep.subr.mxu0 0.0
        %1973 = vmatpush1.msra.mxu0 0.0
        %1974 = vmatprep.subr.mxu0 0.0
        %1975 = vmatpush1.msra.mxu0 0.0
        %1976 = vmatprep.subr.mxu0 0.0
        %1977 = vmatpush1.msra.mxu0 0.0
        %1978 = vmatprep.subr.mxu0 0.0
        %1979 = vmatpush1.msra.mxu0 0.0
        %1980 = vmatprep.subr.mxu0 0.0
        %1981 = vmatpush1.msra.mxu0 0.0
        %1982 = vmatprep.subr.mxu0 0.0
        %1983 = vmatpush1.msra.mxu0 0.0
        %1984 = vmatprep.subr.mxu0 0.0
        %1985 = vmatpush1.msra.mxu0 0.0
        %1986 = vmatprep.subr.mxu0 0.0
        %1987 = vmatpush1.msra.mxu0 0.0
        %1988 = vmatprep.subr.mxu0 0.0
        %1989 = vmatpush1.msra.mxu0 0.0
        %1990 = vmatprep.subr.mxu0 0.0
        %1991 = vmatpush1.msra.mxu0 0.0
        %1992 = vmatprep.subr.mxu0 0.0
        %1993 = vmatpush1.msra.mxu0 0.0
        %1994 = vmatprep.subr.mxu0 0.0
        %1995 = vmatpush1.msra.mxu0 0.0
        %1996 = vmatprep.subr.mxu0 0.0
        %1997 = vmatpush1.msra.mxu0 0.0
        %1998 = vmatprep.subr.mxu0 0.0
        %1999 = vmatpush1.msra.mxu0 0.0
        %2000 = vmatprep.mubr.f32.mxu0 0.0
        %2001 = vmatmul.mubr.f32.gmra.mrb[0].mxu0 %v1934
        %v2002 = vpop.f32.mrb[0].mxu0
        %v2003 = vadd.f32 %v1823, %v2002
        %v2004 = vpop.f32.mrb[0].mxu0
        %2005 = vdwg.mxu0
        %v2006 = vmax.f32 %v2003, 0.0
        %v2007 = vlaneseq
        %v2008 = vshrl.u32 %v2007, 7
        %v2009 = vsub.s32 0, %v2008
        %v2010 = vrot.slane %v2006, %v2009
        %v2011 = vmul.f32 %v1901, %v2010
        %v2012 = vmul.f32 %v1905, %v2010
        %v2013 = vlaneseq
        %v2014 = vshrl.u32 %v2013, 7
        %v2015 = vsub.s32 1, %v2014
        %v2016 = vrot.slane %v2006, %v2015
        %v2017 = vmul.f32 %v1915, %v2016
        %v2018 = vmul.f32 %v1919, %v2016
        %v2019 = vadd.f32 %v2011, %v2017
        %v2020 = vadd.f32 %v2012, %v2018
        %s2021 = scalar_lea.vmem %s272, 32
        %2022 = vst.msk [vmem:[%s2021] sm:$0xff] %vm1809, %v2019
        %2023 = vst.msk [vmem:[%s2021 + $0x8] sm:$0xff] %vm1809, %v2020
        %v2024 = vld [vmem:[#allocation4] sm:$0x7]
        %2025 = vrot.lane.b32.xlu0 %v1714, 124
        %v2026 = vpop.permute.xlu0 %2025
        %2028 = vrot.lane.b32.xlu0 %v1817, 124
        %v2029 = vpop.permute.xlu0 %2028
        %v2032 = vsel %vm306, %v2024, 0
        %2034 = vmatprep.subr.mxu0 0.0
        %2035 = vmatpush1.msra.mxu0 %v2026
        %2036 = vmatprep.subr.mxu0 0.0
        %2037 = vmatpush1.msra.mxu0 0.0
        %2038 = vmatprep.subr.mxu0 0.0
        %2039 = vmatpush1.msra.mxu0 0.0
        %2040 = vmatprep.subr.mxu0 0.0
        %2041 = vmatpush1.msra.mxu0 0.0
        %2042 = vmatprep.subr.mxu0 0.0
        %2043 = vmatpush1.msra.mxu0 0.0
        %2044 = vmatprep.subr.mxu0 0.0
        %2045 = vmatpush1.msra.mxu0 0.0
        %2046 = vmatprep.subr.mxu0 0.0
        %2047 = vmatpush1.msra.mxu0 0.0
        %2048 = vmatprep.subr.mxu0 0.0
        %2049 = vmatpush1.msra.mxu0 0.0
        %2050 = vmatprep.subr.mxu0 0.0
        %2051 = vmatpush1.msra.mxu0 0.0
        %2052 = vmatprep.subr.mxu0 0.0
        %2053 = vmatpush1.msra.mxu0 0.0
        %2054 = vmatprep.subr.mxu0 0.0
        %2055 = vmatpush1.msra.mxu0 0.0
        %2056 = vmatprep.subr.mxu0 0.0
        %2057 = vmatpush1.msra.mxu0 0.0
        %2058 = vmatprep.subr.mxu0 0.0
        %2059 = vmatpush1.msra.mxu0 0.0
        %2060 = vmatprep.subr.mxu0 0.0
        %2061 = vmatpush1.msra.mxu0 0.0
        %2062 = vmatprep.subr.mxu0 0.0
        %2063 = vmatpush1.msra.mxu0 0.0
        %2064 = vmatprep.subr.mxu0 0.0
        %2065 = vmatpush1.msra.mxu0 0.0
        %2066 = vmatprep.subr.mxu0 0.0
        %2067 = vmatpush1.msra.mxu0 0.0
        %2068 = vmatprep.subr.mxu0 0.0
        %2069 = vmatpush1.msra.mxu0 0.0
        %2070 = vmatprep.subr.mxu0 0.0
        %2071 = vmatpush1.msra.mxu0 0.0
        %2072 = vmatprep.subr.mxu0 0.0
        %2073 = vmatpush1.msra.mxu0 0.0
        %2074 = vmatprep.subr.mxu0 0.0
        %2075 = vmatpush1.msra.mxu0 0.0
        %2076 = vmatprep.subr.mxu0 0.0
        %2077 = vmatpush1.msra.mxu0 0.0
        %2078 = vmatprep.subr.mxu0 0.0
        %2079 = vmatpush1.msra.mxu0 0.0
        %2080 = vmatprep.subr.mxu0 0.0
        %2081 = vmatpush1.msra.mxu0 0.0
        %2082 = vmatprep.subr.mxu0 0.0
        %2083 = vmatpush1.msra.mxu0 0.0
        %2084 = vmatprep.subr.mxu0 0.0
        %2085 = vmatpush1.msra.mxu0 0.0
        %2086 = vmatprep.subr.mxu0 0.0
        %2087 = vmatpush1.msra.mxu0 0.0
        %2088 = vmatprep.subr.mxu0 0.0
        %2089 = vmatpush1.msra.mxu0 0.0
        %2090 = vmatprep.subr.mxu0 0.0
        %2091 = vmatpush1.msra.mxu0 0.0
        %2092 = vmatprep.subr.mxu0 0.0
        %2093 = vmatpush1.msra.mxu0 0.0
        %2094 = vmatprep.subr.mxu0 0.0
        %2095 = vmatpush1.msra.mxu0 0.0
        %2096 = vmatprep.subr.mxu0 0.0
        %2097 = vmatpush1.msra.mxu0 0.0
        %2098 = vmatprep.mubr.f32.mxu0 0.0
        %2099 = vmatmul.mubr.f32.gmra.mrb[0].mxu0 %v2032
        %v2100 = vpop.f32.mrb[0].mxu0
        %v2101 = vadd.f32 %v2029, %v2100
        %v2102 = vpop.f32.mrb[0].mxu0
        %2103 = vdwg.mxu0
        %v2104 = vmax.f32 %v2101, 0.0
        %2105 = vset.pattern.permute.xlu0 3
        %2106 = vperm.xlu0 %2105, %v1716
        %v2107 = vpop.permute.xlu0 %2106
        %2109 = vset.pattern.permute.xlu0 3
        %2110 = vperm.xlu0 %2109, %v1717
        %v2111 = vpop.permute.xlu0 %2110
        %v2113 = vlaneseq
        %v2114 = vshrl.u32 %v2113, 7
        %v2115 = vsub.s32 0, %v2114
        %v2116 = vrot.slane %v2104, %v2115
        %v2117 = vmul.f32 %v2107, %v2116
        %v2118 = vmul.f32 %v2111, %v2116
        %2119 = vset.pattern.permute.xlu0 4
        %2120 = vperm.xlu0 %2119, %v1716
        %v2121 = vpop.permute.xlu0 %2120
        %2123 = vset.pattern.permute.xlu0 4
        %2124 = vperm.xlu0 %2123, %v1717
        %v2125 = vpop.permute.xlu0 %2124
        %v2127 = vlaneseq
        %v2128 = vshrl.u32 %v2127, 7
        %v2129 = vsub.s32 1, %v2128
        %v2130 = vrot.slane %v2104, %v2129
        %v2131 = vmul.f32 %v2121, %v2130
        %v2132 = vmul.f32 %v2125, %v2130
        %v2133 = vadd.f32 %v2117, %v2131
        %v2134 = vadd.f32 %v2118, %v2132
        %2135 = vset.pattern.permute.xlu0 5
        %2136 = vperm.xlu0 %2135, %v1716
        %v2137 = vpop.permute.xlu0 %2136
        %2139 = vset.pattern.permute.xlu0 5
        %2140 = vperm.xlu0 %2139, %v1717
        %v2141 = vpop.permute.xlu0 %2140
        %v2143 = vlaneseq
        %v2144 = vshrl.u32 %v2143, 7
        %v2145 = vsub.s32 2, %v2144
        %v2146 = vrot.slane %v2104, %v2145
        %v2147 = vmul.f32 %v2137, %v2146
        %v2148 = vmul.f32 %v2141, %v2146
        %v2149 = vadd.f32 %v2133, %v2147
        %v2150 = vadd.f32 %v2134, %v2148
        %s2151 = scalar_lea.vmem %s272, 48
        %2152 = vst.msk [vmem:[%s2151] sm:$0xff] %vm1809, %v2149
        %2153 = vst.msk [vmem:[%s2151 + $0x8] sm:$0xff] %vm1809, %v2150
        %v2154 = vld [vmem:[#allocation4 + $0x3] sm:$0x7]
        %v2156 = vsel %vm306, %v2154, 0
        %2158 = vmatprep.subr.mxu0 0.0
        %2159 = vmatpush1.msra.mxu0 %v2026
        %2160 = vmatprep.subr.mxu0 0.0
        %2161 = vmatpush1.msra.mxu0 0.0
        %2162 = vmatprep.subr.mxu0 0.0
        %2163 = vmatpush1.msra.mxu0 0.0
        %2164 = vmatprep.subr.mxu0 0.0
        %2165 = vmatpush1.msra.mxu0 0.0
        %2166 = vmatprep.subr.mxu0 0.0
        %2167 = vmatpush1.msra.mxu0 0.0
        %2168 = vmatprep.subr.mxu0 0.0
        %2169 = vmatpush1.msra.mxu0 0.0
        %2170 = vmatprep.subr.mxu0 0.0
        %2171 = vmatpush1.msra.mxu0 0.0
        %2172 = vmatprep.subr.mxu0 0.0
        %2173 = vmatpush1.msra.mxu0 0.0
        %2174 = vmatprep.subr.mxu0 0.0
        %2175 = vmatpush1.msra.mxu0 0.0
        %2176 = vmatprep.subr.mxu0 0.0
        %2177 = vmatpush1.msra.mxu0 0.0
        %2178 = vmatprep.subr.mxu0 0.0
        %2179 = vmatpush1.msra.mxu0 0.0
        %2180 = vmatprep.subr.mxu0 0.0
        %2181 = vmatpush1.msra.mxu0 0.0
        %2182 = vmatprep.subr.mxu0 0.0
        %2183 = vmatpush1.msra.mxu0 0.0
        %2184 = vmatprep.subr.mxu0 0.0
        %2185 = vmatpush1.msra.mxu0 0.0
        %2186 = vmatprep.subr.mxu0 0.0
        %2187 = vmatpush1.msra.mxu0 0.0
        %2188 = vmatprep.subr.mxu0 0.0
        %2189 = vmatpush1.msra.mxu0 0.0
        %2190 = vmatprep.subr.mxu0 0.0
        %2191 = vmatpush1.msra.mxu0 0.0
        %2192 = vmatprep.subr.mxu0 0.0
        %2193 = vmatpush1.msra.mxu0 0.0
        %2194 = vmatprep.subr.mxu0 0.0
        %2195 = vmatpush1.msra.mxu0 0.0
        %2196 = vmatprep.subr.mxu0 0.0
        %2197 = vmatpush1.msra.mxu0 0.0
        %2198 = vmatprep.subr.mxu0 0.0
        %2199 = vmatpush1.msra.mxu0 0.0
        %2200 = vmatprep.subr.mxu0 0.0
        %2201 = vmatpush1.msra.mxu0 0.0
        %2202 = vmatprep.subr.mxu0 0.0
        %2203 = vmatpush1.msra.mxu0 0.0
        %2204 = vmatprep.subr.mxu0 0.0
        %2205 = vmatpush1.msra.mxu0 0.0
        %2206 = vmatprep.subr.mxu0 0.0
        %2207 = vmatpush1.msra.mxu0 0.0
        %2208 = vmatprep.subr.mxu0 0.0
        %2209 = vmatpush1.msra.mxu0 0.0
        %2210 = vmatprep.subr.mxu0 0.0
        %2211 = vmatpush1.msra.mxu0 0.0
        %2212 = vmatprep.subr.mxu0 0.0
        %2213 = vmatpush1.msra.mxu0 0.0
        %2214 = vmatprep.subr.mxu0 0.0
        %2215 = vmatpush1.msra.mxu0 0.0
        %2216 = vmatprep.subr.mxu0 0.0
        %2217 = vmatpush1.msra.mxu0 0.0
        %2218 = vmatprep.subr.mxu0 0.0
        %2219 = vmatpush1.msra.mxu0 0.0
        %2220 = vmatprep.subr.mxu0 0.0
        %2221 = vmatpush1.msra.mxu0 0.0
        %2222 = vmatprep.mubr.f32.mxu0 0.0
        %2223 = vmatmul.mubr.f32.gmra.mrb[0].mxu0 %v2156
        %v2224 = vpop.f32.mrb[0].mxu0
        %v2225 = vadd.f32 %v2029, %v2224
        %v2226 = vpop.f32.mrb[0].mxu0
        %2227 = vdwg.mxu0
        %v2228 = vmax.f32 %v2225, 0.0
        %v2229 = vlaneseq
        %v2230 = vshrl.u32 %v2229, 7
        %v2231 = vsub.s32 0, %v2230
        %v2232 = vrot.slane %v2228, %v2231
        %v2233 = vmul.f32 %v2107, %v2232
        %v2234 = vmul.f32 %v2111, %v2232
        %v2235 = vlaneseq
        %v2236 = vshrl.u32 %v2235, 7
        %v2237 = vsub.s32 1, %v2236
        %v2238 = vrot.slane %v2228, %v2237
        %v2239 = vmul.f32 %v2121, %v2238
        %v2240 = vmul.f32 %v2125, %v2238
        %v2241 = vadd.f32 %v2233, %v2239
        %v2242 = vadd.f32 %v2234, %v2240
        %v2243 = vlaneseq
        %v2244 = vshrl.u32 %v2243, 7
        %v2245 = vsub.s32 2, %v2244
        %v2246 = vrot.slane %v2228, %v2245
        %v2247 = vmul.f32 %v2137, %v2246
        %v2248 = vmul.f32 %v2141, %v2246
        %v2249 = vadd.f32 %v2241, %v2247
        %v2250 = vadd.f32 %v2242, %v2248
        %s2251 = scalar_lea.vmem %s272, 64
        %2252 = vst.msk [vmem:[%s2251] sm:$0xff] %vm1809, %v2249
        %2253 = vst.msk [vmem:[%s2251 + $0x8] sm:$0xff] %vm1809, %v2250
        %v2254 = vld [vmem:[#allocation4 + $0x6] sm:$0x7]
        %v2256 = vsel %vm306, %v2254, 0
        %2258 = vmatprep.subr.mxu0 0.0
        %2259 = vmatpush1.msra.mxu0 %v2026
        %2260 = vmatprep.subr.mxu0 0.0
        %2261 = vmatpush1.msra.mxu0 0.0
        %2262 = vmatprep.subr.mxu0 0.0
        %2263 = vmatpush1.msra.mxu0 0.0
        %2264 = vmatprep.subr.mxu0 0.0
        %2265 = vmatpush1.msra.mxu0 0.0
        %2266 = vmatprep.subr.mxu0 0.0
        %2267 = vmatpush1.msra.mxu0 0.0
        %2268 = vmatprep.subr.mxu0 0.0
        %2269 = vmatpush1.msra.mxu0 0.0
        %2270 = vmatprep.subr.mxu0 0.0
        %2271 = vmatpush1.msra.mxu0 0.0
        %2272 = vmatprep.subr.mxu0 0.0
        %2273 = vmatpush1.msra.mxu0 0.0
        %2274 = vmatprep.subr.mxu0 0.0
        %2275 = vmatpush1.msra.mxu0 0.0
        %2276 = vmatprep.subr.mxu0 0.0
        %2277 = vmatpush1.msra.mxu0 0.0
        %2278 = vmatprep.subr.mxu0 0.0
        %2279 = vmatpush1.msra.mxu0 0.0
        %2280 = vmatprep.subr.mxu0 0.0
        %2281 = vmatpush1.msra.mxu0 0.0
        %2282 = vmatprep.subr.mxu0 0.0
        %2283 = vmatpush1.msra.mxu0 0.0
        %2284 = vmatprep.subr.mxu0 0.0
        %2285 = vmatpush1.msra.mxu0 0.0
        %2286 = vmatprep.subr.mxu0 0.0
        %2287 = vmatpush1.msra.mxu0 0.0
        %2288 = vmatprep.subr.mxu0 0.0
        %2289 = vmatpush1.msra.mxu0 0.0
        %2290 = vmatprep.subr.mxu0 0.0
        %2291 = vmatpush1.msra.mxu0 0.0
        %2292 = vmatprep.subr.mxu0 0.0
        %2293 = vmatpush1.msra.mxu0 0.0
        %2294 = vmatprep.subr.mxu0 0.0
        %2295 = vmatpush1.msra.mxu0 0.0
        %2296 = vmatprep.subr.mxu0 0.0
        %2297 = vmatpush1.msra.mxu0 0.0
        %2298 = vmatprep.subr.mxu0 0.0
        %2299 = vmatpush1.msra.mxu0 0.0
        %2300 = vmatprep.subr.mxu0 0.0
        %2301 = vmatpush1.msra.mxu0 0.0
        %2302 = vmatprep.subr.mxu0 0.0
        %2303 = vmatpush1.msra.mxu0 0.0
        %2304 = vmatprep.subr.mxu0 0.0
        %2305 = vmatpush1.msra.mxu0 0.0
        %2306 = vmatprep.subr.mxu0 0.0
        %2307 = vmatpush1.msra.mxu0 0.0
        %2308 = vmatprep.subr.mxu0 0.0
        %2309 = vmatpush1.msra.mxu0 0.0
        %2310 = vmatprep.subr.mxu0 0.0
        %2311 = vmatpush1.msra.mxu0 0.0
        %2312 = vmatprep.subr.mxu0 0.0
        %2313 = vmatpush1.msra.mxu0 0.0
        %2314 = vmatprep.subr.mxu0 0.0
        %2315 = vmatpush1.msra.mxu0 0.0
        %2316 = vmatprep.subr.mxu0 0.0
        %2317 = vmatpush1.msra.mxu0 0.0
        %2318 = vmatprep.subr.mxu0 0.0
        %2319 = vmatpush1.msra.mxu0 0.0
        %2320 = vmatprep.subr.mxu0 0.0
        %2321 = vmatpush1.msra.mxu0 0.0
        %2322 = vmatprep.mubr.f32.mxu0 0.0
        %2323 = vmatmul.mubr.f32.gmra.mrb[0].mxu0 %v2256
        %v2324 = vpop.f32.mrb[0].mxu0
        %v2325 = vadd.f32 %v2029, %v2324
        %v2326 = vpop.f32.mrb[0].mxu0
        %2327 = vdwg.mxu0
        %v2328 = vmax.f32 %v2325, 0.0
        %v2329 = vlaneseq
        %v2330 = vshrl.u32 %v2329, 7
        %v2331 = vsub.s32 0, %v2330
        %v2332 = vrot.slane %v2328, %v2331
        %v2333 = vmul.f32 %v2107, %v2332
        %v2334 = vmul.f32 %v2111, %v2332
        %v2335 = vlaneseq
        %v2336 = vshrl.u32 %v2335, 7
        %v2337 = vsub.s32 1, %v2336
        %v2338 = vrot.slane %v2328, %v2337
        %v2339 = vmul.f32 %v2121, %v2338
        %v2340 = vmul.f32 %v2125, %v2338
        %v2341 = vadd.f32 %v2333, %v2339
        %v2342 = vadd.f32 %v2334, %v2340
        %v2343 = vlaneseq
        %v2344 = vshrl.u32 %v2343, 7
        %v2345 = vsub.s32 2, %v2344
        %v2346 = vrot.slane %v2328, %v2345
        %v2347 = vmul.f32 %v2137, %v2346
        %v2348 = vmul.f32 %v2141, %v2346
        %v2349 = vadd.f32 %v2341, %v2347
        %v2350 = vadd.f32 %v2342, %v2348
        %s2351 = scalar_lea.vmem %s272, 80
        %2352 = vst.msk [vmem:[%s2351] sm:$0xff] %vm1809, %v2349
        %2353 = vst.msk [vmem:[%s2351 + $0x8] sm:$0xff] %vm1809, %v2350
        %v2354 = vld [vmem:[#allocation5] sm:$0x3f]
        %2355 = vrot.lane.b32.xlu0 %v1714, 122
        %v2356 = vpop.permute.xlu0 %2355
        %2358 = vrot.lane.b32.xlu0 %v1817, 122
        %v2359 = vpop.permute.xlu0 %2358
        %v2362 = vsel %vm306, %v2354, 0
        %2364 = vmatprep.subr.mxu0 0.0
        %2365 = vmatpush1.msra.mxu0 %v2356
        %2366 = vmatprep.subr.mxu0 0.0
        %2367 = vmatpush1.msra.mxu0 0.0
        %2368 = vmatprep.subr.mxu0 0.0
        %2369 = vmatpush1.msra.mxu0 0.0
        %2370 = vmatprep.subr.mxu0 0.0
        %2371 = vmatpush1.msra.mxu0 0.0
        %2372 = vmatprep.subr.mxu0 0.0
        %2373 = vmatpush1.msra.mxu0 0.0
        %2374 = vmatprep.subr.mxu0 0.0
        %2375 = vmatpush1.msra.mxu0 0.0
        %2376 = vmatprep.subr.mxu0 0.0
        %2377 = vmatpush1.msra.mxu0 0.0
        %2378 = vmatprep.subr.mxu0 0.0
        %2379 = vmatpush1.msra.mxu0 0.0
        %2380 = vmatprep.subr.mxu0 0.0
        %2381 = vmatpush1.msra.mxu0 0.0
        %2382 = vmatprep.subr.mxu0 0.0
        %2383 = vmatpush1.msra.mxu0 0.0
        %2384 = vmatprep.subr.mxu0 0.0
        %2385 = vmatpush1.msra.mxu0 0.0
        %2386 = vmatprep.subr.mxu0 0.0
        %2387 = vmatpush1.msra.mxu0 0.0
        %2388 = vmatprep.subr.mxu0 0.0
        %2389 = vmatpush1.msra.mxu0 0.0
        %2390 = vmatprep.subr.mxu0 0.0
        %2391 = vmatpush1.msra.mxu0 0.0
        %2392 = vmatprep.subr.mxu0 0.0
        %2393 = vmatpush1.msra.mxu0 0.0
        %2394 = vmatprep.subr.mxu0 0.0
        %2395 = vmatpush1.msra.mxu0 0.0
        %2396 = vmatprep.subr.mxu0 0.0
        %2397 = vmatpush1.msra.mxu0 0.0
        %2398 = vmatprep.subr.mxu0 0.0
        %2399 = vmatpush1.msra.mxu0 0.0
        %2400 = vmatprep.subr.mxu0 0.0
        %2401 = vmatpush1.msra.mxu0 0.0
        %2402 = vmatprep.subr.mxu0 0.0
        %2403 = vmatpush1.msra.mxu0 0.0
        %2404 = vmatprep.subr.mxu0 0.0
        %2405 = vmatpush1.msra.mxu0 0.0
        %2406 = vmatprep.subr.mxu0 0.0
        %2407 = vmatpush1.msra.mxu0 0.0
        %2408 = vmatprep.subr.mxu0 0.0
        %2409 = vmatpush1.msra.mxu0 0.0
        %2410 = vmatprep.subr.mxu0 0.0
        %2411 = vmatpush1.msra.mxu0 0.0
        %2412 = vmatprep.subr.mxu0 0.0
        %2413 = vmatpush1.msra.mxu0 0.0
        %2414 = vmatprep.subr.mxu0 0.0
        %2415 = vmatpush1.msra.mxu0 0.0
        %2416 = vmatprep.subr.mxu0 0.0
        %2417 = vmatpush1.msra.mxu0 0.0
        %2418 = vmatprep.subr.mxu0 0.0
        %2419 = vmatpush1.msra.mxu0 0.0
        %2420 = vmatprep.subr.mxu0 0.0
        %2421 = vmatpush1.msra.mxu0 0.0
        %2422 = vmatprep.subr.mxu0 0.0
        %2423 = vmatpush1.msra.mxu0 0.0
        %2424 = vmatprep.subr.mxu0 0.0
        %2425 = vmatpush1.msra.mxu0 0.0
        %2426 = vmatprep.subr.mxu0 0.0
        %2427 = vmatpush1.msra.mxu0 0.0
        %2428 = vmatprep.mubr.f32.mxu0 0.0
        %2429 = vmatmul.mubr.f32.gmra.mrb[0].mxu0 %v2362
        %v2430 = vpop.f32.mrb[0].mxu0
        %v2431 = vadd.f32 %v2359, %v2430
        %v2432 = vpop.f32.mrb[0].mxu0
        %2433 = vdwg.mxu0
        %v2434 = vmax.f32 %v2431, 0.0
        %2435 = vset.pattern.permute.xlu0 6
        %2436 = vperm.xlu0 %2435, %v1716
        %v2437 = vpop.permute.xlu0 %2436
        %2439 = vset.pattern.permute.xlu0 6
        %2440 = vperm.xlu0 %2439, %v1717
        %v2441 = vpop.permute.xlu0 %2440
        %v2443 = vlaneseq
        %v2444 = vshrl.u32 %v2443, 7
        %v2445 = vsub.s32 0, %v2444
        %v2446 = vrot.slane %v2434, %v2445
        %v2447 = vmul.f32 %v2437, %v2446
        %v2448 = vmul.f32 %v2441, %v2446
        %2449 = vset.pattern.permute.xlu0 7
        %2450 = vperm.xlu0 %2449, %v1716
        %v2451 = vpop.permute.xlu0 %2450
        %2453 = vset.pattern.permute.xlu0 7
        %2454 = vperm.xlu0 %2453, %v1717
        %v2455 = vpop.permute.xlu0 %2454
        %v2457 = vlaneseq
        %v2458 = vshrl.u32 %v2457, 7
        %v2459 = vsub.s32 1, %v2458
        %v2460 = vrot.slane %v2434, %v2459
        %v2461 = vmul.f32 %v2451, %v2460
        %v2462 = vmul.f32 %v2455, %v2460
        %v2463 = vadd.f32 %v2447, %v2461
        %v2464 = vadd.f32 %v2448, %v2462
        %2465 = vset.pattern.permute.xlu0 8
        %2466 = vperm.xlu0 %2465, %v1716
        %v2467 = vpop.permute.xlu0 %2466
        %2469 = vset.pattern.permute.xlu0 8
        %2470 = vperm.xlu0 %2469, %v1717
        %v2471 = vpop.permute.xlu0 %2470
        %v2473 = vlaneseq
        %v2474 = vshrl.u32 %v2473, 7
        %v2475 = vsub.s32 2, %v2474
        %v2476 = vrot.slane %v2434, %v2475
        %v2477 = vmul.f32 %v2467, %v2476
        %v2478 = vmul.f32 %v2471, %v2476
        %v2479 = vadd.f32 %v2463, %v2477
        %v2480 = vadd.f32 %v2464, %v2478
        %2481 = vset.pattern.permute.xlu0 9
        %2482 = vperm.xlu0 %2481, %v1716
        %v2483 = vpop.permute.xlu0 %2482
        %2485 = vset.pattern.permute.xlu0 9
        %2486 = vperm.xlu0 %2485, %v1717
        %v2487 = vpop.permute.xlu0 %2486
        %v2489 = vlaneseq
        %v2490 = vshrl.u32 %v2489, 7
        %v2491 = vsub.s32 3, %v2490
        %v2492 = vrot.slane %v2434, %v2491
        %v2493 = vmul.f32 %v2483, %v2492
        %v2494 = vmul.f32 %v2487, %v2492
        %v2495 = vadd.f32 %v2479, %v2493
        %v2496 = vadd.f32 %v2480, %v2494
        %2497 = vset.pattern.permute.xlu0 10
        %2498 = vperm.xlu0 %2497, %v1716
        %v2499 = vpop.permute.xlu0 %2498
        %2501 = vset.pattern.permute.xlu0 10
        %2502 = vperm.xlu0 %2501, %v1717
        %v2503 = vpop.permute.xlu0 %2502
        %v2505 = vlaneseq
        %v2506 = vshrl.u32 %v2505, 7
        %v2507 = vsub.s32 4, %v2506
        %v2508 = vrot.slane %v2434, %v2507
        %v2509 = vmul.f32 %v2499, %v2508
        %v2510 = vmul.f32 %v2503, %v2508
        %v2511 = vadd.f32 %v2495, %v2509
        %v2512 = vadd.f32 %v2496, %v2510
        %2513 = vset.pattern.permute.xlu0 11
        %2514 = vperm.xlu0 %2513, %v1716
        %v2515 = vpop.permute.xlu0 %2514
        %2517 = vset.pattern.permute.xlu0 11
        %2518 = vperm.xlu0 %2517, %v1717
        %v2519 = vpop.permute.xlu0 %2518
        %v2521 = vlaneseq
        %v2522 = vshrl.u32 %v2521, 7
        %v2523 = vsub.s32 5, %v2522
        %v2524 = vrot.slane %v2434, %v2523
        %v2525 = vmul.f32 %v2515, %v2524
        %v2526 = vmul.f32 %v2519, %v2524
        %v2527 = vadd.f32 %v2511, %v2525
        %v2528 = vadd.f32 %v2512, %v2526
        %s2529 = scalar_lea.vmem %s272, 96
        %2530 = vst.msk [vmem:[%s2529] sm:$0xff] %vm1809, %v2527
        %2531 = vst.msk [vmem:[%s2529 + $0x8] sm:$0xff] %vm1809, %v2528
        %v2532 = vld [vmem:[#allocation5 + $0x6] sm:$0x3f]
        %v2534 = vsel %vm306, %v2532, 0
        %2536 = vmatprep.subr.mxu0 0.0
        %2537 = vmatpush1.msra.mxu0 %v2356
        %2538 = vmatprep.subr.mxu0 0.0
        %2539 = vmatpush1.msra.mxu0 0.0
        %2540 = vmatprep.subr.mxu0 0.0
        %2541 = vmatpush1.msra.mxu0 0.0
        %2542 = vmatprep.subr.mxu0 0.0
        %2543 = vmatpush1.msra.mxu0 0.0
        %2544 = vmatprep.subr.mxu0 0.0
        %2545 = vmatpush1.msra.mxu0 0.0
        %2546 = vmatprep.subr.mxu0 0.0
        %2547 = vmatpush1.msra.mxu0 0.0
        %2548 = vmatprep.subr.mxu0 0.0
        %2549 = vmatpush1.msra.mxu0 0.0
        %2550 = vmatprep.subr.mxu0 0.0
        %2551 = vmatpush1.msra.mxu0 0.0
        %2552 = vmatprep.subr.mxu0 0.0
        %2553 = vmatpush1.msra.mxu0 0.0
        %2554 = vmatprep.subr.mxu0 0.0
        %2555 = vmatpush1.msra.mxu0 0.0
        %2556 = vmatprep.subr.mxu0 0.0
        %2557 = vmatpush1.msra.mxu0 0.0
        %2558 = vmatprep.subr.mxu0 0.0
        %2559 = vmatpush1.msra.mxu0 0.0
        %2560 = vmatprep.subr.mxu0 0.0
        %2561 = vmatpush1.msra.mxu0 0.0
        %2562 = vmatprep.subr.mxu0 0.0
        %2563 = vmatpush1.msra.mxu0 0.0
        %2564 = vmatprep.subr.mxu0 0.0
        %2565 = vmatpush1.msra.mxu0 0.0
        %2566 = vmatprep.subr.mxu0 0.0
        %2567 = vmatpush1.msra.mxu0 0.0
        %2568 = vmatprep.subr.mxu0 0.0
        %2569 = vmatpush1.msra.mxu0 0.0
        %2570 = vmatprep.subr.mxu0 0.0
        %2571 = vmatpush1.msra.mxu0 0.0
        %2572 = vmatprep.subr.mxu0 0.0
        %2573 = vmatpush1.msra.mxu0 0.0
        %2574 = vmatprep.subr.mxu0 0.0
        %2575 = vmatpush1.msra.mxu0 0.0
        %2576 = vmatprep.subr.mxu0 0.0
        %2577 = vmatpush1.msra.mxu0 0.0
        %2578 = vmatprep.subr.mxu0 0.0
        %2579 = vmatpush1.msra.mxu0 0.0
        %2580 = vmatprep.subr.mxu0 0.0
        %2581 = vmatpush1.msra.mxu0 0.0
        %2582 = vmatprep.subr.mxu0 0.0
        %2583 = vmatpush1.msra.mxu0 0.0
        %2584 = vmatprep.subr.mxu0 0.0
        %2585 = vmatpush1.msra.mxu0 0.0
        %2586 = vmatprep.subr.mxu0 0.0
        %2587 = vmatpush1.msra.mxu0 0.0
        %2588 = vmatprep.subr.mxu0 0.0
        %2589 = vmatpush1.msra.mxu0 0.0
        %2590 = vmatprep.subr.mxu0 0.0
        %2591 = vmatpush1.msra.mxu0 0.0
        %2592 = vmatprep.subr.mxu0 0.0
        %2593 = vmatpush1.msra.mxu0 0.0
        %2594 = vmatprep.subr.mxu0 0.0
        %2595 = vmatpush1.msra.mxu0 0.0
        %2596 = vmatprep.subr.mxu0 0.0
        %2597 = vmatpush1.msra.mxu0 0.0
        %2598 = vmatprep.subr.mxu0 0.0
        %2599 = vmatpush1.msra.mxu0 0.0
        %2600 = vmatprep.mubr.f32.mxu0 0.0
        %2601 = vmatmul.mubr.f32.gmra.mrb[0].mxu0 %v2534
        %v2602 = vpop.f32.mrb[0].mxu0
        %v2603 = vadd.f32 %v2359, %v2602
        %v2604 = vpop.f32.mrb[0].mxu0
        %2605 = vdwg.mxu0
        %v2606 = vmax.f32 %v2603, 0.0
        %v2607 = vlaneseq
        %v2608 = vshrl.u32 %v2607, 7
        %v2609 = vsub.s32 0, %v2608
        %v2610 = vrot.slane %v2606, %v2609
        %v2611 = vmul.f32 %v2437, %v2610
        %v2612 = vmul.f32 %v2441, %v2610
        %v2613 = vlaneseq
        %v2614 = vshrl.u32 %v2613, 7
        %v2615 = vsub.s32 1, %v2614
        %v2616 = vrot.slane %v2606, %v2615
        %v2617 = vmul.f32 %v2451, %v2616
        %v2618 = vmul.f32 %v2455, %v2616
        %v2619 = vadd.f32 %v2611, %v2617
        %v2620 = vadd.f32 %v2612, %v2618
        %v2621 = vlaneseq
        %v2622 = vshrl.u32 %v2621, 7
        %v2623 = vsub.s32 2, %v2622
        %v2624 = vrot.slane %v2606, %v2623
        %v2625 = vmul.f32 %v2467, %v2624
        %v2626 = vmul.f32 %v2471, %v2624
        %v2627 = vadd.f32 %v2619, %v2625
        %v2628 = vadd.f32 %v2620, %v2626
        %v2629 = vlaneseq
        %v2630 = vshrl.u32 %v2629, 7
        %v2631 = vsub.s32 3, %v2630
        %v2632 = vrot.slane %v2606, %v2631
        %v2633 = vmul.f32 %v2483, %v2632
        %v2634 = vmul.f32 %v2487, %v2632
        %v2635 = vadd.f32 %v2627, %v2633
        %v2636 = vadd.f32 %v2628, %v2634
        %v2637 = vlaneseq
        %v2638 = vshrl.u32 %v2637, 7
        %v2639 = vsub.s32 4, %v2638
        %v2640 = vrot.slane %v2606, %v2639
        %v2641 = vmul.f32 %v2499, %v2640
        %v2642 = vmul.f32 %v2503, %v2640
        %v2643 = vadd.f32 %v2635, %v2641
        %v2644 = vadd.f32 %v2636, %v2642
        %v2645 = vlaneseq
        %v2646 = vshrl.u32 %v2645, 7
        %v2647 = vsub.s32 5, %v2646
        %v2648 = vrot.slane %v2606, %v2647
        %v2649 = vmul.f32 %v2515, %v2648
        %v2650 = vmul.f32 %v2519, %v2648
        %v2651 = vadd.f32 %v2643, %v2649
        %v2652 = vadd.f32 %v2644, %v2650
        %s2653 = scalar_lea.vmem %s272, 112
        %2654 = vst.msk [vmem:[%s2653] sm:$0xff] %vm1809, %v2651
        %2655 = vst.msk [vmem:[%s2653 + $0x8] sm:$0xff] %vm1809, %v2652
        %v2656 = vld [vmem:[#allocation5 + $0xc] sm:$0x3f]
        %v2658 = vsel %vm306, %v2656, 0
        %2660 = vmatprep.subr.mxu0 0.0
        %2661 = vmatpush1.msra.mxu0 %v2356
        %2662 = vmatprep.subr.mxu0 0.0
        %2663 = vmatpush1.msra.mxu0 0.0
        %2664 = vmatprep.subr.mxu0 0.0
        %2665 = vmatpush1.msra.mxu0 0.0
        %2666 = vmatprep.subr.mxu0 0.0
        %2667 = vmatpush1.msra.mxu0 0.0
        %2668 = vmatprep.subr.mxu0 0.0
        %2669 = vmatpush1.msra.mxu0 0.0
        %2670 = vmatprep.subr.mxu0 0.0
        %2671 = vmatpush1.msra.mxu0 0.0
        %2672 = vmatprep.subr.mxu0 0.0
        %2673 = vmatpush1.msra.mxu0 0.0
        %2674 = vmatprep.subr.mxu0 0.0
        %2675 = vmatpush1.msra.mxu0 0.0
        %2676 = vmatprep.subr.mxu0 0.0
        %2677 = vmatpush1.msra.mxu0 0.0
        %2678 = vmatprep.subr.mxu0 0.0
        %2679 = vmatpush1.msra.mxu0 0.0
        %2680 = vmatprep.subr.mxu0 0.0
        %2681 = vmatpush1.msra.mxu0 0.0
        %2682 = vmatprep.subr.mxu0 0.0
        %2683 = vmatpush1.msra.mxu0 0.0
        %2684 = vmatprep.subr.mxu0 0.0
        %2685 = vmatpush1.msra.mxu0 0.0
        %2686 = vmatprep.subr.mxu0 0.0
        %2687 = vmatpush1.msra.mxu0 0.0
        %2688 = vmatprep.subr.mxu0 0.0
        %2689 = vmatpush1.msra.mxu0 0.0
        %2690 = vmatprep.subr.mxu0 0.0
        %2691 = vmatpush1.msra.mxu0 0.0
        %2692 = vmatprep.subr.mxu0 0.0
        %2693 = vmatpush1.msra.mxu0 0.0
        %2694 = vmatprep.subr.mxu0 0.0
        %2695 = vmatpush1.msra.mxu0 0.0
        %2696 = vmatprep.subr.mxu0 0.0
        %2697 = vmatpush1.msra.mxu0 0.0
        %2698 = vmatprep.subr.mxu0 0.0
        %2699 = vmatpush1.msra.mxu0 0.0
        %2700 = vmatprep.subr.mxu0 0.0
        %2701 = vmatpush1.msra.mxu0 0.0
        %2702 = vmatprep.subr.mxu0 0.0
        %2703 = vmatpush1.msra.mxu0 0.0
        %2704 = vmatprep.subr.mxu0 0.0
        %2705 = vmatpush1.msra.mxu0 0.0
        %2706 = vmatprep.subr.mxu0 0.0
        %2707 = vmatpush1.msra.mxu0 0.0
        %2708 = vmatprep.subr.mxu0 0.0
        %2709 = vmatpush1.msra.mxu0 0.0
        %2710 = vmatprep.subr.mxu0 0.0
        %2711 = vmatpush1.msra.mxu0 0.0
        %2712 = vmatprep.subr.mxu0 0.0
        %2713 = vmatpush1.msra.mxu0 0.0
        %2714 = vmatprep.subr.mxu0 0.0
        %2715 = vmatpush1.msra.mxu0 0.0
        %2716 = vmatprep.subr.mxu0 0.0
        %2717 = vmatpush1.msra.mxu0 0.0
        %2718 = vmatprep.subr.mxu0 0.0
        %2719 = vmatpush1.msra.mxu0 0.0
        %2720 = vmatprep.subr.mxu0 0.0
        %2721 = vmatpush1.msra.mxu0 0.0
        %2722 = vmatprep.subr.mxu0 0.0
        %2723 = vmatpush1.msra.mxu0 0.0
        %2724 = vmatprep.mubr.f32.mxu0 0.0
        %2725 = vmatmul.mubr.f32.gmra.mrb[0].mxu0 %v2658
        %v2726 = vpop.f32.mrb[0].mxu0
        %v2727 = vadd.f32 %v2359, %v2726
        %v2728 = vpop.f32.mrb[0].mxu0
        %2729 = vdwg.mxu0
        %v2730 = vmax.f32 %v2727, 0.0
        %v2731 = vlaneseq
        %v2732 = vshrl.u32 %v2731, 7
        %v2733 = vsub.s32 0, %v2732
        %v2734 = vrot.slane %v2730, %v2733
        %v2735 = vmul.f32 %v2437, %v2734
        %v2736 = vmul.f32 %v2441, %v2734
        %v2737 = vlaneseq
        %v2738 = vshrl.u32 %v2737, 7
        %v2739 = vsub.s32 1, %v2738
        %v2740 = vrot.slane %v2730, %v2739
        %v2741 = vmul.f32 %v2451, %v2740
        %v2742 = vmul.f32 %v2455, %v2740
        %v2743 = vadd.f32 %v2735, %v2741
        %v2744 = vadd.f32 %v2736, %v2742
        %v2745 = vlaneseq
        %v2746 = vshrl.u32 %v2745, 7
        %v2747 = vsub.s32 2, %v2746
        %v2748 = vrot.slane %v2730, %v2747
        %v2749 = vmul.f32 %v2467, %v2748
        %v2750 = vmul.f32 %v2471, %v2748
        %v2751 = vadd.f32 %v2743, %v2749
        %v2752 = vadd.f32 %v2744, %v2750
        %v2753 = vlaneseq
        %v2754 = vshrl.u32 %v2753, 7
        %v2755 = vsub.s32 3, %v2754
        %v2756 = vrot.slane %v2730, %v2755
        %v2757 = vmul.f32 %v2483, %v2756
        %v2758 = vmul.f32 %v2487, %v2756
        %v2759 = vadd.f32 %v2751, %v2757
        %v2760 = vadd.f32 %v2752, %v2758
        %v2761 = vlaneseq
        %v2762 = vshrl.u32 %v2761, 7
        %v2763 = vsub.s32 4, %v2762
        %v2764 = vrot.slane %v2730, %v2763
        %v2765 = vmul.f32 %v2499, %v2764
        %v2766 = vmul.f32 %v2503, %v2764
        %v2767 = vadd.f32 %v2759, %v2765
        %v2768 = vadd.f32 %v2760, %v2766
        %v2769 = vlaneseq
        %v2770 = vshrl.u32 %v2769, 7
        %v2771 = vsub.s32 5, %v2770
        %v2772 = vrot.slane %v2730, %v2771
        %v2773 = vmul.f32 %v2515, %v2772
        %v2774 = vmul.f32 %v2519, %v2772
        %v2775 = vadd.f32 %v2767, %v2773
        %v2776 = vadd.f32 %v2768, %v2774
        %s2777 = scalar_lea.vmem %s272, 128
        %2778 = vst.msk [vmem:[%s2777] sm:$0xff] %vm1809, %v2775
        %2779 = vst.msk [vmem:[%s2777 + $0x8] sm:$0xff] %vm1809, %v2776
        %v2780 = vld [vmem:[#allocation5 + $0x12] sm:$0x3f]
        %v2782 = vsel %vm306, %v2780, 0
        %2784 = vmatprep.subr.mxu0 0.0
        %2785 = vmatpush1.msra.mxu0 %v2356
        %2786 = vmatprep.subr.mxu0 0.0
        %2787 = vmatpush1.msra.mxu0 0.0
        %2788 = vmatprep.subr.mxu0 0.0
        %2789 = vmatpush1.msra.mxu0 0.0
        %2790 = vmatprep.subr.mxu0 0.0
        %2791 = vmatpush1.msra.mxu0 0.0
        %2792 = vmatprep.subr.mxu0 0.0
        %2793 = vmatpush1.msra.mxu0 0.0
        %2794 = vmatprep.subr.mxu0 0.0
        %2795 = vmatpush1.msra.mxu0 0.0
        %2796 = vmatprep.subr.mxu0 0.0
        %2797 = vmatpush1.msra.mxu0 0.0
        %2798 = vmatprep.subr.mxu0 0.0
        %2799 = vmatpush1.msra.mxu0 0.0
        %2800 = vmatprep.subr.mxu0 0.0
        %2801 = vmatpush1.msra.mxu0 0.0
        %2802 = vmatprep.subr.mxu0 0.0
        %2803 = vmatpush1.msra.mxu0 0.0
        %2804 = vmatprep.subr.mxu0 0.0
        %2805 = vmatpush1.msra.mxu0 0.0
        %2806 = vmatprep.subr.mxu0 0.0
        %2807 = vmatpush1.msra.mxu0 0.0
        %2808 = vmatprep.subr.mxu0 0.0
        %2809 = vmatpush1.msra.mxu0 0.0
        %2810 = vmatprep.subr.mxu0 0.0
        %2811 = vmatpush1.msra.mxu0 0.0
        %2812 = vmatprep.subr.mxu0 0.0
        %2813 = vmatpush1.msra.mxu0 0.0
        %2814 = vmatprep.subr.mxu0 0.0
        %2815 = vmatpush1.msra.mxu0 0.0
        %2816 = vmatprep.subr.mxu0 0.0
        %2817 = vmatpush1.msra.mxu0 0.0
        %2818 = vmatprep.subr.mxu0 0.0
        %2819 = vmatpush1.msra.mxu0 0.0
        %2820 = vmatprep.subr.mxu0 0.0
        %2821 = vmatpush1.msra.mxu0 0.0
        %2822 = vmatprep.subr.mxu0 0.0
        %2823 = vmatpush1.msra.mxu0 0.0
        %2824 = vmatprep.subr.mxu0 0.0
        %2825 = vmatpush1.msra.mxu0 0.0
        %2826 = vmatprep.subr.mxu0 0.0
        %2827 = vmatpush1.msra.mxu0 0.0
        %2828 = vmatprep.subr.mxu0 0.0
        %2829 = vmatpush1.msra.mxu0 0.0
        %2830 = vmatprep.subr.mxu0 0.0
        %2831 = vmatpush1.msra.mxu0 0.0
        %2832 = vmatprep.subr.mxu0 0.0
        %2833 = vmatpush1.msra.mxu0 0.0
        %2834 = vmatprep.subr.mxu0 0.0
        %2835 = vmatpush1.msra.mxu0 0.0
        %2836 = vmatprep.subr.mxu0 0.0
        %2837 = vmatpush1.msra.mxu0 0.0
        %2838 = vmatprep.subr.mxu0 0.0
        %2839 = vmatpush1.msra.mxu0 0.0
        %2840 = vmatprep.subr.mxu0 0.0
        %2841 = vmatpush1.msra.mxu0 0.0
        %2842 = vmatprep.subr.mxu0 0.0
        %2843 = vmatpush1.msra.mxu0 0.0
        %2844 = vmatprep.subr.mxu0 0.0
        %2845 = vmatpush1.msra.mxu0 0.0
        %2846 = vmatprep.subr.mxu0 0.0
        %2847 = vmatpush1.msra.mxu0 0.0
        %2848 = vmatprep.mubr.f32.mxu0 0.0
        %2849 = vmatmul.mubr.f32.gmra.mrb[0].mxu0 %v2782
        %v2850 = vpop.f32.mrb[0].mxu0
        %v2851 = vadd.f32 %v2359, %v2850
        %v2852 = vpop.f32.mrb[0].mxu0
        %2853 = vdwg.mxu0
        %v2854 = vmax.f32 %v2851, 0.0
        %v2855 = vlaneseq
        %v2856 = vshrl.u32 %v2855, 7
        %v2857 = vsub.s32 0, %v2856
        %v2858 = vrot.slane %v2854, %v2857
        %v2859 = vmul.f32 %v2437, %v2858
        %v2860 = vmul.f32 %v2441, %v2858
        %v2861 = vlaneseq
        %v2862 = vshrl.u32 %v2861, 7
        %v2863 = vsub.s32 1, %v2862
        %v2864 = vrot.slane %v2854, %v2863
        %v2865 = vmul.f32 %v2451, %v2864
        %v2866 = vmul.f32 %v2455, %v2864
        %v2867 = vadd.f32 %v2859, %v2865
        %v2868 = vadd.f32 %v2860, %v2866
        %v2869 = vlaneseq
        %v2870 = vshrl.u32 %v2869, 7
        %v2871 = vsub.s32 2, %v2870
        %v2872 = vrot.slane %v2854, %v2871
        %v2873 = vmul.f32 %v2467, %v2872
        %v2874 = vmul.f32 %v2471, %v2872
        %v2875 = vadd.f32 %v2867, %v2873
        %v2876 = vadd.f32 %v2868, %v2874
        %v2877 = vlaneseq
        %v2878 = vshrl.u32 %v2877, 7
        %v2879 = vsub.s32 3, %v2878
        %v2880 = vrot.slane %v2854, %v2879
        %v2881 = vmul.f32 %v2483, %v2880
        %v2882 = vmul.f32 %v2487, %v2880
        %v2883 = vadd.f32 %v2875, %v2881
        %v2884 = vadd.f32 %v2876, %v2882
        %v2885 = vlaneseq
        %v2886 = vshrl.u32 %v2885, 7
        %v2887 = vsub.s32 4, %v2886
        %v2888 = vrot.slane %v2854, %v2887
        %v2889 = vmul.f32 %v2499, %v2888
        %v2890 = vmul.f32 %v2503, %v2888
        %v2891 = vadd.f32 %v2883, %v2889
        %v2892 = vadd.f32 %v2884, %v2890
        %v2893 = vlaneseq
        %v2894 = vshrl.u32 %v2893, 7
        %v2895 = vsub.s32 5, %v2894
        %v2896 = vrot.slane %v2854, %v2895
        %v2897 = vmul.f32 %v2515, %v2896
        %v2898 = vmul.f32 %v2519, %v2896
        %v2899 = vadd.f32 %v2891, %v2897
        %v2900 = vadd.f32 %v2892, %v2898
        %s2901 = scalar_lea.vmem %s272, 144
        %2902 = vst.msk [vmem:[%s2901] sm:$0xff] %vm1809, %v2899
        %2903 = vst.msk [vmem:[%s2901 + $0x8] sm:$0xff] %vm1809, %v2900
        %v2904 = vld [vmem:[#allocation5 + $0x18] sm:$0x3f]
        %v2906 = vsel %vm306, %v2904, 0
        %2908 = vmatprep.subr.mxu0 0.0
        %2909 = vmatpush1.msra.mxu0 %v2356
        %2910 = vmatprep.subr.mxu0 0.0
        %2911 = vmatpush1.msra.mxu0 0.0
        %2912 = vmatprep.subr.mxu0 0.0
        %2913 = vmatpush1.msra.mxu0 0.0
        %2914 = vmatprep.subr.mxu0 0.0
        %2915 = vmatpush1.msra.mxu0 0.0
        %2916 = vmatprep.subr.mxu0 0.0
        %2917 = vmatpush1.msra.mxu0 0.0
        %2918 = vmatprep.subr.mxu0 0.0
        %2919 = vmatpush1.msra.mxu0 0.0
        %2920 = vmatprep.subr.mxu0 0.0
        %2921 = vmatpush1.msra.mxu0 0.0
        %2922 = vmatprep.subr.mxu0 0.0
        %2923 = vmatpush1.msra.mxu0 0.0
        %2924 = vmatprep.subr.mxu0 0.0
        %2925 = vmatpush1.msra.mxu0 0.0
        %2926 = vmatprep.subr.mxu0 0.0
        %2927 = vmatpush1.msra.mxu0 0.0
        %2928 = vmatprep.subr.mxu0 0.0
        %2929 = vmatpush1.msra.mxu0 0.0
        %2930 = vmatprep.subr.mxu0 0.0
        %2931 = vmatpush1.msra.mxu0 0.0
        %2932 = vmatprep.subr.mxu0 0.0
        %2933 = vmatpush1.msra.mxu0 0.0
        %2934 = vmatprep.subr.mxu0 0.0
        %2935 = vmatpush1.msra.mxu0 0.0
        %2936 = vmatprep.subr.mxu0 0.0
        %2937 = vmatpush1.msra.mxu0 0.0
        %2938 = vmatprep.subr.mxu0 0.0
        %2939 = vmatpush1.msra.mxu0 0.0
        %2940 = vmatprep.subr.mxu0 0.0
        %2941 = vmatpush1.msra.mxu0 0.0
        %2942 = vmatprep.subr.mxu0 0.0
        %2943 = vmatpush1.msra.mxu0 0.0
        %2944 = vmatprep.subr.mxu0 0.0
        %2945 = vmatpush1.msra.mxu0 0.0
        %2946 = vmatprep.subr.mxu0 0.0
        %2947 = vmatpush1.msra.mxu0 0.0
        %2948 = vmatprep.subr.mxu0 0.0
        %2949 = vmatpush1.msra.mxu0 0.0
        %2950 = vmatprep.subr.mxu0 0.0
        %2951 = vmatpush1.msra.mxu0 0.0
        %2952 = vmatprep.subr.mxu0 0.0
        %2953 = vmatpush1.msra.mxu0 0.0
        %2954 = vmatprep.subr.mxu0 0.0
        %2955 = vmatpush1.msra.mxu0 0.0
        %2956 = vmatprep.subr.mxu0 0.0
        %2957 = vmatpush1.msra.mxu0 0.0
        %2958 = vmatprep.subr.mxu0 0.0
        %2959 = vmatpush1.msra.mxu0 0.0
        %2960 = vmatprep.subr.mxu0 0.0
        %2961 = vmatpush1.msra.mxu0 0.0
        %2962 = vmatprep.subr.mxu0 0.0
        %2963 = vmatpush1.msra.mxu0 0.0
        %2964 = vmatprep.subr.mxu0 0.0
        %2965 = vmatpush1.msra.mxu0 0.0
        %2966 = vmatprep.subr.mxu0 0.0
        %2967 = vmatpush1.msra.mxu0 0.0
        %2968 = vmatprep.subr.mxu0 0.0
        %2969 = vmatpush1.msra.mxu0 0.0
        %2970 = vmatprep.subr.mxu0 0.0
        %2971 = vmatpush1.msra.mxu0 0.0
        %2972 = vmatprep.mubr.f32.mxu0 0.0
        %2973 = vmatmul.mubr.f32.gmra.mrb[0].mxu0 %v2906
        %v2974 = vpop.f32.mrb[0].mxu0
        %v2975 = vadd.f32 %v2359, %v2974
        %v2976 = vpop.f32.mrb[0].mxu0
        %2977 = vdwg.mxu0
        %v2978 = vmax.f32 %v2975, 0.0
        %v2979 = vlaneseq
        %v2980 = vshrl.u32 %v2979, 7
        %v2981 = vsub.s32 0, %v2980
        %v2982 = vrot.slane %v2978, %v2981
        %v2983 = vmul.f32 %v2437, %v2982
        %v2984 = vmul.f32 %v2441, %v2982
        %v2985 = vlaneseq
        %v2986 = vshrl.u32 %v2985, 7
        %v2987 = vsub.s32 1, %v2986
        %v2988 = vrot.slane %v2978, %v2987
        %v2989 = vmul.f32 %v2451, %v2988
        %v2990 = vmul.f32 %v2455, %v2988
        %v2991 = vadd.f32 %v2983, %v2989
        %v2992 = vadd.f32 %v2984, %v2990
        %v2993 = vlaneseq
        %v2994 = vshrl.u32 %v2993, 7
        %v2995 = vsub.s32 2, %v2994
        %v2996 = vrot.slane %v2978, %v2995
        %v2997 = vmul.f32 %v2467, %v2996
        %v2998 = vmul.f32 %v2471, %v2996
        %v2999 = vadd.f32 %v2991, %v2997
        %v3000 = vadd.f32 %v2992, %v2998
        %v3001 = vlaneseq
        %v3002 = vshrl.u32 %v3001, 7
        %v3003 = vsub.s32 3, %v3002
        %v3004 = vrot.slane %v2978, %v3003
        %v3005 = vmul.f32 %v2483, %v3004
        %v3006 = vmul.f32 %v2487, %v3004
        %v3007 = vadd.f32 %v2999, %v3005
        %v3008 = vadd.f32 %v3000, %v3006
        %v3009 = vlaneseq
        %v3010 = vshrl.u32 %v3009, 7
        %v3011 = vsub.s32 4, %v3010
        %v3012 = vrot.slane %v2978, %v3011
        %v3013 = vmul.f32 %v2499, %v3012
        %v3014 = vmul.f32 %v2503, %v3012
        %v3015 = vadd.f32 %v3007, %v3013
        %v3016 = vadd.f32 %v3008, %v3014
        %v3017 = vlaneseq
        %v3018 = vshrl.u32 %v3017, 7
        %v3019 = vsub.s32 5, %v3018
        %v3020 = vrot.slane %v2978, %v3019
        %v3021 = vmul.f32 %v2515, %v3020
        %v3022 = vmul.f32 %v2519, %v3020
        %v3023 = vadd.f32 %v3015, %v3021
        %v3024 = vadd.f32 %v3016, %v3022
        %s3025 = scalar_lea.vmem %s272, 160
        %3026 = vst.msk [vmem:[%s3025] sm:$0xff] %vm1809, %v3023
        %3027 = vst.msk [vmem:[%s3025 + $0x8] sm:$0xff] %vm1809, %v3024
        %v3028 = vld [vmem:[#allocation5 + $0x1e] sm:$0x3f]
        %v3030 = vsel %vm306, %v3028, 0
        %3032 = vmatprep.subr.mxu0 0.0
        %3033 = vmatpush1.msra.mxu0 %v2356
        %3034 = vmatprep.subr.mxu0 0.0
        %3035 = vmatpush1.msra.mxu0 0.0
        %3036 = vmatprep.subr.mxu0 0.0
        %3037 = vmatpush1.msra.mxu0 0.0
        %3038 = vmatprep.subr.mxu0 0.0
        %3039 = vmatpush1.msra.mxu0 0.0
        %3040 = vmatprep.subr.mxu0 0.0
        %3041 = vmatpush1.msra.mxu0 0.0
        %3042 = vmatprep.subr.mxu0 0.0
        %3043 = vmatpush1.msra.mxu0 0.0
        %3044 = vmatprep.subr.mxu0 0.0
        %3045 = vmatpush1.msra.mxu0 0.0
        %3046 = vmatprep.subr.mxu0 0.0
        %3047 = vmatpush1.msra.mxu0 0.0
        %3048 = vmatprep.subr.mxu0 0.0
        %3049 = vmatpush1.msra.mxu0 0.0
        %3050 = vmatprep.subr.mxu0 0.0
        %3051 = vmatpush1.msra.mxu0 0.0
        %3052 = vmatprep.subr.mxu0 0.0
        %3053 = vmatpush1.msra.mxu0 0.0
        %3054 = vmatprep.subr.mxu0 0.0
        %3055 = vmatpush1.msra.mxu0 0.0
        %3056 = vmatprep.subr.mxu0 0.0
        %3057 = vmatpush1.msra.mxu0 0.0
        %3058 = vmatprep.subr.mxu0 0.0
        %3059 = vmatpush1.msra.mxu0 0.0
        %3060 = vmatprep.subr.mxu0 0.0
        %3061 = vmatpush1.msra.mxu0 0.0
        %3062 = vmatprep.subr.mxu0 0.0
        %3063 = vmatpush1.msra.mxu0 0.0
        %3064 = vmatprep.subr.mxu0 0.0
        %3065 = vmatpush1.msra.mxu0 0.0
        %3066 = vmatprep.subr.mxu0 0.0
        %3067 = vmatpush1.msra.mxu0 0.0
        %3068 = vmatprep.subr.mxu0 0.0
        %3069 = vmatpush1.msra.mxu0 0.0
        %3070 = vmatprep.subr.mxu0 0.0
        %3071 = vmatpush1.msra.mxu0 0.0
        %3072 = vmatprep.subr.mxu0 0.0
        %3073 = vmatpush1.msra.mxu0 0.0
        %3074 = vmatprep.subr.mxu0 0.0
        %3075 = vmatpush1.msra.mxu0 0.0
        %3076 = vmatprep.subr.mxu0 0.0
        %3077 = vmatpush1.msra.mxu0 0.0
        %3078 = vmatprep.subr.mxu0 0.0
        %3079 = vmatpush1.msra.mxu0 0.0
        %3080 = vmatprep.subr.mxu0 0.0
        %3081 = vmatpush1.msra.mxu0 0.0
        %3082 = vmatprep.subr.mxu0 0.0
        %3083 = vmatpush1.msra.mxu0 0.0
        %3084 = vmatprep.subr.mxu0 0.0
        %3085 = vmatpush1.msra.mxu0 0.0
        %3086 = vmatprep.subr.mxu0 0.0
        %3087 = vmatpush1.msra.mxu0 0.0
        %3088 = vmatprep.subr.mxu0 0.0
        %3089 = vmatpush1.msra.mxu0 0.0
        %3090 = vmatprep.subr.mxu0 0.0
        %3091 = vmatpush1.msra.mxu0 0.0
        %3092 = vmatprep.subr.mxu0 0.0
        %3093 = vmatpush1.msra.mxu0 0.0
        %3094 = vmatprep.subr.mxu0 0.0
        %3095 = vmatpush1.msra.mxu0 0.0
        %3096 = vmatprep.mubr.f32.mxu0 0.0
        %3097 = vmatmul.mubr.f32.gmra.mrb[0].mxu0 %v3030
        %v3098 = vpop.f32.mrb[0].mxu0
        %v3099 = vadd.f32 %v2359, %v3098
        %v3100 = vpop.f32.mrb[0].mxu0
        %3101 = vdwg.mxu0
        %v3102 = vmax.f32 %v3099, 0.0
        %v3103 = vlaneseq
        %v3104 = vshrl.u32 %v3103, 7
        %v3105 = vsub.s32 0, %v3104
        %v3106 = vrot.slane %v3102, %v3105
        %v3107 = vmul.f32 %v2437, %v3106
        %v3108 = vmul.f32 %v2441, %v3106
        %v3109 = vlaneseq
        %v3110 = vshrl.u32 %v3109, 7
        %v3111 = vsub.s32 1, %v3110
        %v3112 = vrot.slane %v3102, %v3111
        %v3113 = vmul.f32 %v2451, %v3112
        %v3114 = vmul.f32 %v2455, %v3112
        %v3115 = vadd.f32 %v3107, %v3113
        %v3116 = vadd.f32 %v3108, %v3114
        %v3117 = vlaneseq
        %v3118 = vshrl.u32 %v3117, 7
        %v3119 = vsub.s32 2, %v3118
        %v3120 = vrot.slane %v3102, %v3119
        %v3121 = vmul.f32 %v2467, %v3120
        %v3122 = vmul.f32 %v2471, %v3120
        %v3123 = vadd.f32 %v3115, %v3121
        %v3124 = vadd.f32 %v3116, %v3122
        %v3125 = vlaneseq
        %v3126 = vshrl.u32 %v3125, 7
        %v3127 = vsub.s32 3, %v3126
        %v3128 = vrot.slane %v3102, %v3127
        %v3129 = vmul.f32 %v2483, %v3128
        %v3130 = vmul.f32 %v2487, %v3128
        %v3131 = vadd.f32 %v3123, %v3129
        %v3132 = vadd.f32 %v3124, %v3130
        %v3133 = vlaneseq
        %v3134 = vshrl.u32 %v3133, 7
        %v3135 = vsub.s32 4, %v3134
        %v3136 = vrot.slane %v3102, %v3135
        %v3137 = vmul.f32 %v2499, %v3136
        %v3138 = vmul.f32 %v2503, %v3136
        %v3139 = vadd.f32 %v3131, %v3137
        %v3140 = vadd.f32 %v3132, %v3138
        %v3141 = vlaneseq
        %v3142 = vshrl.u32 %v3141, 7
        %v3143 = vsub.s32 5, %v3142
        %v3144 = vrot.slane %v3102, %v3143
        %v3145 = vmul.f32 %v2515, %v3144
        %v3146 = vmul.f32 %v2519, %v3144
        %v3147 = vadd.f32 %v3139, %v3145
        %v3148 = vadd.f32 %v3140, %v3146
        %s3149 = scalar_lea.vmem %s272, 176
        %3150 = vst.msk [vmem:[%s3149] sm:$0xff] %vm1809, %v3147
        %3151 = vst.msk [vmem:[%s3149 + $0x8] sm:$0xff] %vm1809, %v3148
      $region48: #{tpu_custom_call.1} parent=39 // pred_fallthru
        _
      %p3152 = scmp.lt.s32.totalorder %s20, 1
      %s3153 = scalar_select %p3152, %s20, 1
      %s3154 = smul.addr %s3153, 24
      %s3155 = smul.addr %s3154, 8
      %s3156 = scalar_lea.vmem %s5, %s3155
      // Predicated region
      $region49: #{tpu_custom_call.1} parent=39 // pred_check
        %p3157 = pneg %p163
      $region50: #{tpu_custom_call.1} parent=39 // pred_check_branch
        %3159 = sbr.rel (%p3157) target = $region52
      $region51: #{tpu_custom_call.1} parent=39 // pred_region
        _
      $region52: #{tpu_custom_call.1} parent=39 // pred_fallthru
        _
    $region40: #{tpu_custom_call.1} parent=5 // pred_fallthru
      _
    %p3160 = scmp.le.s32.totalorder 2, %s11
    // Predicated region
    $region53: #{tpu_custom_call.1} parent=5 // pred_check
      %p3161 = pneg %p3160
    $region54: #{tpu_custom_call.1} parent=5 // pred_check_branch
      %3163 = sbr.rel (%p3161) target = $region56
    $region55: #{tpu_custom_call.1} parent=5 // pred_region
      %s3164 = ssub.s32 %s11, 2
      // Predicated region
      $region57: #{tpu_custom_call.1} parent=55 // pred_check
        %p3165 = pneg %p169
      $region58: #{tpu_custom_call.1} parent=55 // pred_check_branch
        %3167 = sbr.rel (%p3165) target = $region60
      $region59: #{tpu_custom_call.1} parent=55 // pred_region
        %p3168 = scmp.lt.s32.totalorder %s22, 1
        %s3169 = scalar_select %p3168, %s22, 1
        %s3170 = smul.addr %s3169, 24
        %s3171 = smul.addr %s3170, 8
        %s3172 = scalar_lea.vmem %s5, %s3171
      $region60: #{tpu_custom_call.1} parent=55 // pred_fallthru
        _
    $region56: #{tpu_custom_call.1} parent=5 // pred_fallthru
      _
  $region6: #{tpu_custom_call.1} parent=0 // loop_footer
    %s15 = sadd.s32 1, %s11
  $region7: #{tpu_custom_call.1} parent=0 // loop_footer_branch
    %10 = sbr.rel target = $region3
  $region8: #{tpu_custom_call.1} parent=0 // loop_exit
    _

</llo_original>
